<compile_context>
chip_gen: v6e
topology: v6e:2x2x1
jax: 0.10.0
libtpu: 0.0.40
codegen_flags: <defaults>
</compile_context>

<pallas_src>
import functools

import jax
import jax.numpy as jnp
from jax.experimental import pallas as pl
from jax.experimental.pallas import tpu as pltpu

_LANE = 128


def _round_up(n, m):
    return (n + m - 1) // m * m


def _decoder_kernel(n_hidden, compute_dtype, x_ref, *refs):
    """Fused MLP: n_hidden Linear+ReLU layers followed by Linear+sigmoid.

    refs = (w0, b0, w1, b1, ..., w_out, b_out, o_ref).  Weights/biases are
    small, resident in VMEM (single-buffered); the batch tile of x streams
    with the grid.  x_ref is already bf16; bias/ReLU/sigmoid run in f32.
    """
    o_ref = refs[-1]
    params = refs[:-1]

    h = x_ref[...]                                  # bf16 operand for the MXU

    for i in range(n_hidden):
        w = params[2 * i][...]                      # (d_in_p, d_out_p) bf16
        b = params[2 * i + 1][...]                  # (1, d_out_p)      f32
        acc = jnp.dot(h, w, preferred_element_type=jnp.float32)
        acc = jnp.maximum(acc + b, 0.0)             # bias + ReLU in f32 (VPU)
        h = acc.astype(compute_dtype)

    w = params[2 * n_hidden][...]                   # (d_in_p, out_dim) bf16
    b = params[2 * n_hidden + 1][...]               # (1, out_dim)      f32
    acc = jnp.dot(h, w, preferred_element_type=jnp.float32) + b
    # sigmoid(x) = 1 / (1 + exp(-x)); stable for both signs, exp -> EUP,
    # approximate reciprocal instead of a full-precision divide.
    sig = pl.reciprocal(1.0 + jnp.exp(-acc), approx=True)
    o_ref[...] = sig.astype(o_ref.dtype)


def prepare_decoder_params(weights, biases, compute_dtype=jnp.bfloat16):
    """One-time parameter preprocessing (pad hidden dims to 128, cast).

    weights: list of (in_dim, out_dim) arrays (already the transpose of the
             PyTorch (out, in) layout), hidden layers first, output last.
    biases:  list of (out_dim,) arrays matching `weights`.
    """
    in_dim = weights[0].shape[0]
    out_dim = weights[-1].shape[1]

    # Input dim stays unpadded (it is the streamed K dim of the first matmul)
    # and the output dim stays unpadded (stored directly); only the hidden
    # feature dims are lane-padded to multiples of 128.
    dims = [in_dim] + [w.shape[1] for w in weights]
    pdims = [dims[0]] + [_round_up(d, _LANE) for d in dims[1:-1]] + [dims[-1]]

    w_p, b_p = [], []
    for li, (w, b) in enumerate(zip(weights, biases)):
        d_in, d_out = w.shape
        wp = jnp.pad(w, ((0, pdims[li] - d_in), (0, pdims[li + 1] - d_out)))
        bp = jnp.pad(b, ((0, pdims[li + 1] - d_out),)).reshape(1, -1)
        w_p.append(jnp.asarray(wp, compute_dtype))   # resident bf16 weights
        b_p.append(jnp.asarray(bp, jnp.float32))     # biases stay f32

    return dict(weights=w_p, biases=b_p, pdims=pdims,
                in_dim=in_dim, out_dim=out_dim, compute_dtype=compute_dtype)


def decoder_forward(x, params, *, block_b=None, out_dtype=None):
    """Run the fused decoder kernel on x: [B, in_dim] -> [B, out_dim]."""
    B, in_dim = x.shape
    w_p, b_p = params["weights"], params["biases"]
    pdims = params["pdims"]
    out_dim = params["out_dim"]
    compute_dtype = params["compute_dtype"]
    n_hidden = len(w_p) - 1
    assert in_dim == params["in_dim"]
    out_dtype = x.dtype if out_dtype is None else out_dtype

    # ---- batch tiling --------------------------------------------------------
    # Largest-tile default (best on single-TC v5e/v6e where the kernel is
    # DMA-bound); pass block_b=128 on v7x if you want >=2 steps per megacore.
    if block_b is None:
        block_b = B if B <= 256 else 256
    block_b = min(block_b, B)
    if block_b != B:
        block_b = max(8, (block_b // 8) * 8)        # respect the (8,128) rule
    grid = (pl.cdiv(B, block_b),)

    # Single cheap cast; halves the streamed x bytes and removes the in-kernel
    # astype.  No padding of x at all (last block dim == full array dim).
    x_c = x.astype(compute_dtype)

    def launch(single_buffer_params):
        wkw = {}
        if single_buffer_params:
            # constant index_map -> parameters don't need double-buffering
            wkw = dict(pipeline_mode=pl.Buffered(1))

        in_specs = [pl.BlockSpec((block_b, in_dim), lambda i: (i, 0))]
        args = [x_c]
        for w, b in zip(w_p, b_p):
            in_specs.append(pl.BlockSpec(w.shape, lambda i: (0, 0), **wkw))
            in_specs.append(pl.BlockSpec(b.shape, lambda i: (0, 0), **wkw))
            args.extend((w, b))
        out_spec = pl.BlockSpec((block_b, out_dim), lambda i: (i, 0))

        # VMEM budget: resident params (+x2 if double-buffered) + pipelined
        # x/out tiles + live f32 intermediates + headroom; capped at 44 MiB
        # (v7x has only 64 MiB physical VMEM).
        param_bytes = sum(a.size * a.dtype.itemsize for a in (w_p + b_p))
        x_tile = block_b * in_dim * x_c.dtype.itemsize
        o_tile = block_b * out_dim * jnp.dtype(out_dtype).itemsize
        interm = block_b * max(pdims[1:]) * 4
        vmem = ((1 if single_buffer_params else 2) * param_bytes
                + 2 * x_tile + 2 * o_tile + 4 * interm + (8 << 20))
        vmem = int(min(max(vmem, 4 << 20), 44 << 20))

        flops = 2 * B * sum(pi * po for pi, po in zip(pdims[:-1], pdims[1:]))
        bytes_acc = (x_c.size * x_c.dtype.itemsize + param_bytes
                     + B * out_dim * jnp.dtype(out_dtype).itemsize)
        cost = pl.CostEstimate(flops=flops, transcendentals=B * out_dim,
                               bytes_accessed=bytes_acc)

        kernel = functools.partial(_decoder_kernel, n_hidden, compute_dtype)
        return pl.pallas_call(
            kernel,
            out_shape=jax.ShapeDtypeStruct((B, out_dim), out_dtype),
            grid_spec=pltpu.PrefetchScalarGridSpec(
                num_scalar_prefetch=0,
                grid=grid,
                in_specs=in_specs,
                out_specs=out_spec,
            ),
            compiler_params=pltpu.CompilerParams(
                dimension_semantics=("parallel",),
                vmem_limit_bytes=vmem),
            cost_estimate=cost,
        )(*args)

    if hasattr(pl, "Buffered"):
        try:
            return launch(True)
        except (TypeError, ValueError, NotImplementedError,
                pltpu.LoweringException):
            pass  # pipeline_mode / Buffered(1) rejected -> default buffering
    return launch(False)


def init_decoder_params(key, input_dim, hidden_dims, out_dim):
    """Deterministic synthetic parameters with nn.Linear-like fan-in scaling."""
    dims = [input_dim] + list(hidden_dims) + [out_dim]
    weights, biases = [], []
    for d_in, d_out in zip(dims[:-1], dims[1:]):
        key, kw, kb = jax.random.split(key, 3)
        bound = 1.0 / jnp.sqrt(d_in)
        # Stored directly in (in, out) layout (== PyTorch weight.T).
        w = jax.random.uniform(kw, (d_in, d_out), jnp.float32, -bound, bound)
        b = jax.random.uniform(kb, (d_out,), jnp.float32, -bound, bound)
        weights.append(w)
        biases.append(b)
    return weights, biases


def decoder_reference(x, weights, biases):
    """Plain-JAX f32 reference matching the PyTorch forward."""
    h = x
    for w, b in zip(weights[:-1], biases[:-1]):
        h = jnp.maximum(h @ w + b, 0.0)
    return jax.nn.sigmoid(h @ weights[-1] + biases[-1])


if __name__ == "__main__":
    key = jax.random.PRNGKey(0)

    # Decoder(input_dim, hidden_dims, out_dim); batch > block tile so the grid
    # has 2 steps (pipelining / megacore sharding exercised).
    batch = 512
    input_dim = 32            # latent dim
    hidden_dims = [64, 128]
    out_dim = 784             # 28x28 flattened image (non-128-multiple)

    key, kx = jax.random.split(key)
    x = jax.random.normal(kx, (batch, input_dim), jnp.float32)
    weights, biases = init_decoder_params(key, input_dim, hidden_dims, out_dim)

    # One-time parameter preprocessing (pad + cast), outside the forward path.
    prepared = prepare_decoder_params(weights, biases)

    y = jax.block_until_ready(decoder_forward(x, prepared))
    y_ref = decoder_reference(x, weights, biases)

    assert y.shape == (batch, out_dim)
    # bf16 MXU inputs with f32 accumulation + approx reciprocal: ~1e-2 level.
    assert jnp.allclose(y, y_ref, atol=5e-2, rtol=5e-2), "mismatch vs reference"

    print("KERNEL_OK")
</pallas_src>

<mosaic_0001>
module attributes {stable_mosaic.version = 11 : i64} {
  func.func @_decoder_kernel(%arg0: i32, %arg1: memref<256x32xbf16, #tpu.memory_space<vmem>>, %arg2: memref<32x128xbf16, #tpu.memory_space<vmem>>, %arg3: memref<1x128xf32, #tpu.memory_space<vmem>>, %arg4: memref<128x128xbf16, #tpu.memory_space<vmem>>, %arg5: memref<1x128xf32, #tpu.memory_space<vmem>>, %arg6: memref<128x784xbf16, #tpu.memory_space<vmem>>, %arg7: memref<1x784xf32, #tpu.memory_space<vmem>>, %arg8: memref<256x784xf32, #tpu.memory_space<vmem>>) attributes {dimension_semantics = [#tpu.dimension_semantics<parallel>], iteration_bounds = array<i64: 2>, scalar_prefetch = 0 : i64, scratch_operands = 0 : i64, tpu.core_type = #tpu.core_type<tc>, window_params = [{transform_indices = @transform_0, window_bounds = array<i64: 256, 32>}, {pipeline_mode = #tpu.pipeline_mode<synchronous>, transform_indices = @transform_1, window_bounds = array<i64: 32, 128>}, {pipeline_mode = #tpu.pipeline_mode<synchronous>, transform_indices = @transform_2, window_bounds = array<i64: 1, 128>}, {pipeline_mode = #tpu.pipeline_mode<synchronous>, transform_indices = @transform_3, window_bounds = array<i64: 128, 128>}, {pipeline_mode = #tpu.pipeline_mode<synchronous>, transform_indices = @transform_4, window_bounds = array<i64: 1, 128>}, {pipeline_mode = #tpu.pipeline_mode<synchronous>, transform_indices = @transform_5, window_bounds = array<i64: 128, 784>}, {pipeline_mode = #tpu.pipeline_mode<synchronous>, transform_indices = @transform_6, window_bounds = array<i64: 1, 784>}, {transform_indices = @transform_7, window_bounds = array<i64: 256, 784>}]} {
    %c0 = arith.constant 0 : index
    %c0_0 = arith.constant 0 : index
    %0 = vector.load %arg1[%c0, %c0_0] : memref<256x32xbf16, #tpu.memory_space<vmem>>, vector<256x32xbf16>
    %c0_1 = arith.constant 0 : index
    %c0_2 = arith.constant 0 : index
    %1 = vector.load %arg2[%c0_1, %c0_2] : memref<32x128xbf16, #tpu.memory_space<vmem>>, vector<32x128xbf16>
    %c0_3 = arith.constant 0 : index
    %c0_4 = arith.constant 0 : index
    %2 = vector.load %arg3[%c0_3, %c0_4] : memref<1x128xf32, #tpu.memory_space<vmem>>, vector<1x128xf32>
    %cst = arith.constant dense<0.000000e+00> : vector<256x128xf32>
    %3 = tpu.matmul %0, %1, %cst {dimension_numbers = #tpu.dot_dimension_numbers<[1], [0], [0], [1], [0, 0, 1, 1], [], []>} : vector<256x32xbf16>, vector<32x128xbf16>, vector<256x128xf32> -> vector<256x128xf32>
    %4 = vector.broadcast %2 : vector<1x128xf32> to vector<256x128xf32>
    %5 = arith.addf %3, %4 : vector<256x128xf32>
    %cst_5 = arith.constant 0.000000e+00 : f32
    %6 = vector.broadcast %cst_5 : f32 to vector<256x128xf32>
    %7 = arith.maximumf %5, %6 : vector<256x128xf32>
    %8 = arith.truncf %7 : vector<256x128xf32> to vector<256x128xbf16>
    %c0_6 = arith.constant 0 : index
    %c0_7 = arith.constant 0 : index
    %9 = vector.load %arg4[%c0_6, %c0_7] : memref<128x128xbf16, #tpu.memory_space<vmem>>, vector<128x128xbf16>
    %c0_8 = arith.constant 0 : index
    %c0_9 = arith.constant 0 : index
    %10 = vector.load %arg5[%c0_8, %c0_9] : memref<1x128xf32, #tpu.memory_space<vmem>>, vector<1x128xf32>
    %cst_10 = arith.constant dense<0.000000e+00> : vector<256x128xf32>
    %11 = tpu.matmul %8, %9, %cst_10 {dimension_numbers = #tpu.dot_dimension_numbers<[1], [0], [0], [1], [0, 0, 1, 1], [], []>} : vector<256x128xbf16>, vector<128x128xbf16>, vector<256x128xf32> -> vector<256x128xf32>
    %12 = vector.broadcast %10 : vector<1x128xf32> to vector<256x128xf32>
    %13 = arith.addf %11, %12 : vector<256x128xf32>
    %cst_11 = arith.constant 0.000000e+00 : f32
    %14 = vector.broadcast %cst_11 : f32 to vector<256x128xf32>
    %15 = arith.maximumf %13, %14 : vector<256x128xf32>
    %16 = arith.truncf %15 : vector<256x128xf32> to vector<256x128xbf16>
    %c0_12 = arith.constant 0 : index
    %c0_13 = arith.constant 0 : index
    %17 = vector.load %arg6[%c0_12, %c0_13] : memref<128x784xbf16, #tpu.memory_space<vmem>>, vector<128x784xbf16>
    %c0_14 = arith.constant 0 : index
    %c0_15 = arith.constant 0 : index
    %18 = vector.load %arg7[%c0_14, %c0_15] : memref<1x784xf32, #tpu.memory_space<vmem>>, vector<1x784xf32>
    %cst_16 = arith.constant dense<0.000000e+00> : vector<256x784xf32>
    %19 = tpu.matmul %16, %17, %cst_16 {dimension_numbers = #tpu.dot_dimension_numbers<[1], [0], [0], [1], [0, 0, 1, 1], [], []>} : vector<256x128xbf16>, vector<128x784xbf16>, vector<256x784xf32> -> vector<256x784xf32>
    %20 = vector.broadcast %18 : vector<1x784xf32> to vector<256x784xf32>
    %21 = arith.addf %19, %20 : vector<256x784xf32>
    %cst_17 = arith.constant 0.000000e+00 : f32
    %22 = vector.broadcast %cst_17 : f32 to vector<256x784xf32>
    %23 = arith.subf %22, %21 : vector<256x784xf32>
    %24 = math.exp %23 : vector<256x784xf32>
    %cst_18 = arith.constant 1.000000e+00 : f32
    %25 = vector.broadcast %cst_18 : f32 to vector<256x784xf32>
    %26 = arith.addf %25, %24 : vector<256x784xf32>
    %27 = tpu.reciprocal %26 {approx = true} : vector<256x784xf32> -> vector<256x784xf32>
    %c0_19 = arith.constant 0 : index
    %c0_20 = arith.constant 0 : index
    %28 = vector.load %arg8[%c0_19, %c0_20] : memref<256x784xf32, #tpu.memory_space<vmem>>, vector<256x784xf32>
    tpu.vector_store %arg8[%c0_19, %c0_20], %27 {strides = array<i32>} : memref<256x784xf32, #tpu.memory_space<vmem>>, vector<256x784xf32>,
    return
  }
  func.func @transform_0(%arg0: i32) -> (i32, i32) {
    %c0_i32 = arith.constant 0 : i32
    %c0_i32_0 = arith.constant 0 : i32
    return %arg0, %c0_i32 : i32, i32
  }
  func.func @transform_1(%arg0: i32) -> (i32, i32) {
    %c0_i32 = arith.constant 0 : i32
    %c0_i32_0 = arith.constant 0 : i32
    %c0_i32_1 = arith.constant 0 : i32
    return %c0_i32, %c0_i32_0 : i32, i32
  }
  func.func @transform_2(%arg0: i32) -> (i32, i32) {
    %c0_i32 = arith.constant 0 : i32
    %c0_i32_0 = arith.constant 0 : i32
    %c0_i32_1 = arith.constant 0 : i32
    return %c0_i32, %c0_i32_0 : i32, i32
  }
  func.func @transform_3(%arg0: i32) -> (i32, i32) {
    %c0_i32 = arith.constant 0 : i32
    %c0_i32_0 = arith.constant 0 : i32
    %c0_i32_1 = arith.constant 0 : i32
    return %c0_i32, %c0_i32_0 : i32, i32
  }
  func.func @transform_4(%arg0: i32) -> (i32, i32) {
    %c0_i32 = arith.constant 0 : i32
    %c0_i32_0 = arith.constant 0 : i32
    %c0_i32_1 = arith.constant 0 : i32
    return %c0_i32, %c0_i32_0 : i32, i32
  }
  func.func @transform_5(%arg0: i32) -> (i32, i32) {
    %c0_i32 = arith.constant 0 : i32
    %c0_i32_0 = arith.constant 0 : i32
    %c0_i32_1 = arith.constant 0 : i32
    return %c0_i32, %c0_i32_0 : i32, i32
  }
  func.func @transform_6(%arg0: i32) -> (i32, i32) {
    %c0_i32 = arith.constant 0 : i32
    %c0_i32_0 = arith.constant 0 : i32
    %c0_i32_1 = arith.constant 0 : i32
    return %c0_i32, %c0_i32_0 : i32, i32
  }
  func.func @transform_7(%arg0: i32) -> (i32, i32) {
    %c0_i32 = arith.constant 0 : i32
    %c0_i32_0 = arith.constant 0 : i32
    return %arg0, %c0_i32 : i32, i32
  }
}

</mosaic_0001>

<llo_original>
// kernel: tpu_custom_call.1
$region0: #{tpu_custom_call.1}
  #allocation0 [shape = 'u32[]', space=smem, size = 0x4, offset = 0x4, fixed_abs, tag = 'smem constant byte address 0x4 - core index']
  #allocation1 [shape = 'u32[144,128]{1,0:T(1,128)}', space=vmem, size = 0x12000, scoped, tag = 'internal scratch']
  %s0 = inlined_call_operand.vmem [shape: bf16[512,32], index: 0, kind: input, shape index: {}]
  %s1 = inlined_call_operand.hbm [shape: bf16[32,128], index: 1, kind: input, shape index: {}]
  %s2 = inlined_call_operand.hbm [shape: f32[1,128], index: 2, kind: input, shape index: {}]
  %s3 = inlined_call_operand.hbm [shape: bf16[128,128], index: 3, kind: input, shape index: {}]
  %s4 = inlined_call_operand.hbm [shape: f32[1,128], index: 4, kind: input, shape index: {}]
  %s5 = inlined_call_operand.vmem [shape: bf16[128,784], index: 5, kind: input, shape index: {}]
  %s6 = inlined_call_operand.hbm [shape: f32[1,784], index: 6, kind: input, shape index: {}]
  %s7 = inlined_call_operand.vmem [shape: f32[512,784], index: 7, kind: output, shape index: {}]
  %s8 = sld [smem:[#allocation0]]
  $region81: #{tpu_custom_call.1} parent=0
    _
  %s10 = ssub.s32 1, %s8
  %s11 = scalar_select 0, %s10, %s8
  $region1: #{tpu_custom_call.1} parent=0
    #allocation2 [shape = 'u8[8192]{0}', space=vmem, size = 0x2000, scoped, tag = 'input window, operand 1, single buffered']
    #allocation3 [shape = 's32[2]{0}', space=sflag, size = 0x8, scoped, tag = 'scoped memory for tpu_custom_call.1']
    #allocation4 [shape = 'u8[512]{0}', space=vmem, size = 0x400, scoped, tag = 'input window, operand 2, single buffered']
    #allocation5 [shape = 's32[1]{0}', space=sflag, size = 0x4, scoped, tag = 'scoped memory for tpu_custom_call.1']
    #allocation6 [shape = 'u8[32768]{0}', space=vmem, size = 0x8000, scoped, tag = 'input window, operand 3, single buffered']
    #allocation7 [shape = 'u8[512]{0}', space=vmem, size = 0x400, scoped, tag = 'input window, operand 4, single buffered']
    #allocation8 [shape = 's32[1]{0}', space=sflag, size = 0x4, scoped, tag = 'scoped memory for tpu_custom_call.1']
    #allocation9 [shape = 'u8[3584]{0}', space=vmem, size = 0x1000, scoped, tag = 'input window, operand 6, single buffered']
    %12 = vsyncpa [#allocation3], 0
    %13 = vsyncpa [#allocation5], 0
    %14 = vsyncpa [#allocation8], 0
    loop: start=0, step=1, limit=4
    $region2: #{tpu_custom_call.1} parent=1 // loop_pre_header
      _
    $region3: #{tpu_custom_call.1} parent=1 // loop_header
      %s16 = sphi 0, %s20
      %p17 = scmp.ge.s32.totalorder %s16, 4
      %s26 = sphi 0, %s28
      %s29 = sphi 0, %s26
      %s30 = sphi 0, %s29
      %s46 = sphi 0, %s30
      %s50 = sphi 0, %s50
      %s52 = sphi 0, %s50
      %s53 = sphi 0, %s52
      %s67 = sphi 0, %s53
      %s71 = sphi 0, %s71
      %s73 = sphi 0, %s71
      %s74 = sphi 0, %s73
      %s88 = sphi 0, %s74
      %s92 = sphi 0, %s92
      %s94 = sphi 0, %s92
      %s95 = sphi 0, %s94
      %s109 = sphi 0, %s95
      %s113 = sphi 0, %s113
      %s115 = sphi 0, %s113
      %s116 = sphi 0, %s115
      %s130 = sphi 0, %s116
      %s134 = sphi 0, %s134
      %s136 = sphi 0, %s134
      %s137 = sphi 0, %s136
      %s151 = sphi 0, %s137
      %s155 = sphi 0, %s155
      %s157 = sphi 0, %s155
      %s158 = sphi 0, %s157
      %s172 = sphi 0, %s158
      %s178 = sphi 0, %s180
      %s181 = sphi 0, %s178
      %s182 = sphi 0, %s181
      %s198 = sphi 0, %s182
    $region4: #{tpu_custom_call.1} parent=1 // loop_header_branch
      %19 = sbr.rel (%p17) target = $region8
    $region5: #{tpu_custom_call.1} parent=1 // loop_body
      %s21 = ssub.s32 %s16, 1
      %s22 = ssub.s32 %s16, 2
      %s23 = sadd.s32 %s16, 1
      %s24 = ssub.s32 %s16, %s23
      %p25 = scmp.eq.s32.totalorder %s24, 0
      %s27 = sadd.s32 %s26, 1
      %s28 = scalar_select %p25, %s26, %s27
      %p31 = pneg %p25
      %p32 = scmp.eq.s32.totalorder %s16, 1
      %p33 = por %p31, %p32
      %p34 = scmp.ne.s32.totalorder %s26, %s29
      %p35 = scmp.eq.s32.totalorder %s16, 0
      %p36 = por %p34, %p35
      %p37 = scmp.ne.s32.totalorder %s26, %s29
      %p38 = scmp.eq.s32.totalorder %s21, 1
      %p39 = por %p37, %p38
      %p40 = scmp.ne.s32.totalorder %s29, %s30
      %p41 = scmp.eq.s32.totalorder %s21, 0
      %p42 = por %p40, %p41
      %p43 = scmp.ne.s32.totalorder %s29, %s30
      %p44 = scmp.eq.s32.totalorder %s22, 1
      %p45 = por %p43, %p44
      %p47 = scmp.ne.s32.totalorder %s30, %s46
      %p48 = scmp.eq.s32.totalorder %s22, 0
      %p49 = por %p47, %p48
      %s51 = sadd.s32 %s50, 1
      %p54 = scmp.eq.s32.totalorder %s16, 1
      %p55 = scmp.ne.s32.totalorder %s50, %s52
      %p56 = scmp.eq.s32.totalorder %s16, 0
      %p57 = por %p55, %p56
      %p58 = scmp.ne.s32.totalorder %s50, %s52
      %p59 = scmp.eq.s32.totalorder %s21, 1
      %p60 = por %p58, %p59
      %p61 = scmp.ne.s32.totalorder %s52, %s53
      %p62 = scmp.eq.s32.totalorder %s21, 0
      %p63 = por %p61, %p62
      %p64 = scmp.ne.s32.totalorder %s52, %s53
      %p65 = scmp.eq.s32.totalorder %s22, 1
      %p66 = por %p64, %p65
      %p68 = scmp.ne.s32.totalorder %s53, %s67
      %p69 = scmp.eq.s32.totalorder %s22, 0
      %p70 = por %p68, %p69
      %s72 = sadd.s32 %s71, 1
      %p75 = scmp.eq.s32.totalorder %s16, 1
      %p76 = scmp.ne.s32.totalorder %s71, %s73
      %p77 = scmp.eq.s32.totalorder %s16, 0
      %p78 = por %p76, %p77
      %p79 = scmp.ne.s32.totalorder %s71, %s73
      %p80 = scmp.eq.s32.totalorder %s21, 1
      %p81 = por %p79, %p80
      %p82 = scmp.ne.s32.totalorder %s73, %s74
      %p83 = scmp.eq.s32.totalorder %s21, 0
      %p84 = por %p82, %p83
      %p85 = scmp.ne.s32.totalorder %s73, %s74
      %p86 = scmp.eq.s32.totalorder %s22, 1
      %p87 = por %p85, %p86
      %p89 = scmp.ne.s32.totalorder %s74, %s88
      %p90 = scmp.eq.s32.totalorder %s22, 0
      %p91 = por %p89, %p90
      %s93 = sadd.s32 %s92, 1
      %p96 = scmp.eq.s32.totalorder %s16, 1
      %p97 = scmp.ne.s32.totalorder %s92, %s94
      %p98 = scmp.eq.s32.totalorder %s16, 0
      %p99 = por %p97, %p98
      %p100 = scmp.ne.s32.totalorder %s92, %s94
      %p101 = scmp.eq.s32.totalorder %s21, 1
      %p102 = por %p100, %p101
      %p103 = scmp.ne.s32.totalorder %s94, %s95
      %p104 = scmp.eq.s32.totalorder %s21, 0
      %p105 = por %p103, %p104
      %p106 = scmp.ne.s32.totalorder %s94, %s95
      %p107 = scmp.eq.s32.totalorder %s22, 1
      %p108 = por %p106, %p107
      %p110 = scmp.ne.s32.totalorder %s95, %s109
      %p111 = scmp.eq.s32.totalorder %s22, 0
      %p112 = por %p110, %p111
      %s114 = sadd.s32 %s113, 1
      %p117 = scmp.eq.s32.totalorder %s16, 1
      %p118 = scmp.ne.s32.totalorder %s113, %s115
      %p119 = scmp.eq.s32.totalorder %s16, 0
      %p120 = por %p118, %p119
      %p121 = scmp.ne.s32.totalorder %s113, %s115
      %p122 = scmp.eq.s32.totalorder %s21, 1
      %p123 = por %p121, %p122
      %p124 = scmp.ne.s32.totalorder %s115, %s116
      %p125 = scmp.eq.s32.totalorder %s21, 0
      %p126 = por %p124, %p125
      %p127 = scmp.ne.s32.totalorder %s115, %s116
      %p128 = scmp.eq.s32.totalorder %s22, 1
      %p129 = por %p127, %p128
      %p131 = scmp.ne.s32.totalorder %s116, %s130
      %p132 = scmp.eq.s32.totalorder %s22, 0
      %p133 = por %p131, %p132
      %s135 = sadd.s32 %s134, 1
      %p138 = scmp.eq.s32.totalorder %s16, 1
      %p139 = scmp.ne.s32.totalorder %s134, %s136
      %p140 = scmp.eq.s32.totalorder %s16, 0
      %p141 = por %p139, %p140
      %p142 = scmp.ne.s32.totalorder %s134, %s136
      %p143 = scmp.eq.s32.totalorder %s21, 1
      %p144 = por %p142, %p143
      %p145 = scmp.ne.s32.totalorder %s136, %s137
      %p146 = scmp.eq.s32.totalorder %s21, 0
      %p147 = por %p145, %p146
      %p148 = scmp.ne.s32.totalorder %s136, %s137
      %p149 = scmp.eq.s32.totalorder %s22, 1
      %p150 = por %p148, %p149
      %p152 = scmp.ne.s32.totalorder %s137, %s151
      %p153 = scmp.eq.s32.totalorder %s22, 0
      %p154 = por %p152, %p153
      %s156 = sadd.s32 %s155, 1
      %p159 = scmp.eq.s32.totalorder %s16, 1
      %p160 = scmp.ne.s32.totalorder %s155, %s157
      %p161 = scmp.eq.s32.totalorder %s16, 0
      %p162 = por %p160, %p161
      %p163 = scmp.ne.s32.totalorder %s155, %s157
      %p164 = scmp.eq.s32.totalorder %s21, 1
      %p165 = por %p163, %p164
      %p166 = scmp.ne.s32.totalorder %s157, %s158
      %p167 = scmp.eq.s32.totalorder %s21, 0
      %p168 = por %p166, %p167
      %p169 = scmp.ne.s32.totalorder %s157, %s158
      %p170 = scmp.eq.s32.totalorder %s22, 1
      %p171 = por %p169, %p170
      %p173 = scmp.ne.s32.totalorder %s158, %s172
      %p174 = scmp.eq.s32.totalorder %s22, 0
      %p175 = por %p173, %p174
      %s176 = ssub.s32 %s16, %s23
      %p177 = scmp.eq.s32.totalorder %s176, 0
      %s179 = sadd.s32 %s178, 1
      %s180 = scalar_select %p177, %s178, %s179
      %p183 = pneg %p177
      %p184 = scmp.eq.s32.totalorder %s16, 1
      %p185 = por %p183, %p184
      %p186 = scmp.ne.s32.totalorder %s178, %s181
      %p187 = scmp.eq.s32.totalorder %s16, 0
      %p188 = por %p186, %p187
      %p189 = scmp.ne.s32.totalorder %s178, %s181
      %p190 = scmp.eq.s32.totalorder %s21, 1
      %p191 = por %p189, %p190
      %p192 = scmp.ne.s32.totalorder %s181, %s182
      %p193 = scmp.eq.s32.totalorder %s21, 0
      %p194 = por %p192, %p193
      %p195 = scmp.ne.s32.totalorder %s181, %s182
      %p196 = scmp.eq.s32.totalorder %s22, 1
      %p197 = por %p195, %p196
      %p199 = scmp.ne.s32.totalorder %s182, %s198
      %p200 = scmp.eq.s32.totalorder %s22, 0
      %p201 = por %p199, %p200
      %p202 = scmp.le.s32.totalorder 1, %s16
      %p203 = scmp.lt.s32.totalorder %s16, 3
      %p204 = pnand %p202, %p203
      %p205 = pneg %p204
      // Predicated region
      $region9: #{tpu_custom_call.1} parent=5 // pred_check
        _
      $region10: #{tpu_custom_call.1} parent=5 // pred_check_branch
        %207 = sbr.rel (%p204) target = $region12
      $region11: #{tpu_custom_call.1} parent=5 // pred_region
        %s208 = ssub.s32 %s16, 1
        // Predicated region
        $region13: #{tpu_custom_call.1} parent=11 // pred_check
          %p209 = pneg %p63
        $region14: #{tpu_custom_call.1} parent=11 // pred_check_branch
          %211 = sbr.rel (%p209) target = $region16
        $region15: #{tpu_custom_call.1} parent=11 // pred_region
          %s213 = ssub.s32 256, 256
          %214 = vsyncadd [#allocation3], %s213
          %s215 = sshll.u32 [#allocation2], 4
          %s216 = int_to_ptr.vmem [resolvable:$true] %s215
          %221 = dma.hbm_to_vmem [thread:$0]  %s1, 256, %s216, [#allocation3], 64, 64, 4
        $region16: #{tpu_custom_call.1} parent=11 // pred_fallthru
          _
        // Predicated region
        $region17: #{tpu_custom_call.1} parent=11 // pred_check
          %p222 = pneg %p84
        $region18: #{tpu_custom_call.1} parent=11 // pred_check_branch
          %224 = sbr.rel (%p222) target = $region20
        $region19: #{tpu_custom_call.1} parent=11 // pred_region
          %s226 = ssub.s32 16, 16
          %227 = vsyncadd [#allocation5], %s226
          %s229 = sshll.u32 [#allocation4], 4
          %s230 = int_to_ptr.vmem [resolvable:$true] %s229
          %232 = dma.hbm_to_vmem [thread:$0]  %s2, 16, %s230, [#allocation5]
        $region20: #{tpu_custom_call.1} parent=11 // pred_fallthru
          _
        // Predicated region
        $region21: #{tpu_custom_call.1} parent=11 // pred_check
          %p233 = pneg %p105
        $region22: #{tpu_custom_call.1} parent=11 // pred_check_branch
          %235 = sbr.rel (%p233) target = $region24
        $region23: #{tpu_custom_call.1} parent=11 // pred_region
          %s237 = ssub.s32 1024, 1024
          %238 = vsyncadd [#allocation5], %s237
          %s239 = sshll.u32 [#allocation6], 4
          %s240 = int_to_ptr.vmem [resolvable:$true] %s239
          %245 = dma.hbm_to_vmem [thread:$0]  %s3, 1024, %s240, [#allocation5], 64, 64, 4
        $region24: #{tpu_custom_call.1} parent=11 // pred_fallthru
          _
        // Predicated region
        $region25: #{tpu_custom_call.1} parent=11 // pred_check
          %p246 = pneg %p126
        $region26: #{tpu_custom_call.1} parent=11 // pred_check_branch
          %248 = sbr.rel (%p246) target = $region28
        $region27: #{tpu_custom_call.1} parent=11 // pred_region
          %s250 = ssub.s32 16, 16
          %251 = vsyncadd [#allocation8], %s250
          %s253 = sshll.u32 [#allocation7], 4
          %s254 = int_to_ptr.vmem [resolvable:$true] %s253
          %256 = dma.hbm_to_vmem [thread:$0]  %s4, 16, %s254, [#allocation8]
        $region28: #{tpu_custom_call.1} parent=11 // pred_fallthru
          _
        // Predicated region
        $region29: #{tpu_custom_call.1} parent=11 // pred_check
          %p257 = pneg %p147
        $region30: #{tpu_custom_call.1} parent=11 // pred_check_branch
          %259 = sbr.rel (%p257) target = $region32
        $region31: #{tpu_custom_call.1} parent=11 // pred_region
          _
        $region32: #{tpu_custom_call.1} parent=11 // pred_fallthru
          _
        // Predicated region
        $region33: #{tpu_custom_call.1} parent=11 // pred_check
          %p260 = pneg %p168
        $region34: #{tpu_custom_call.1} parent=11 // pred_check_branch
          %262 = sbr.rel (%p260) target = $region36
        $region35: #{tpu_custom_call.1} parent=11 // pred_region
          %s264 = ssub.s32 112, 112
          %265 = vsyncadd [#allocation8], %s264
          %s267 = sshll.u32 [#allocation9], 4
          %s268 = int_to_ptr.vmem [resolvable:$true] %s267
          %270 = dma.hbm_to_vmem [thread:$0]  %s6, 112, %s268, [#allocation8]
        $region36: #{tpu_custom_call.1} parent=11 // pred_fallthru
          _
      $region12: #{tpu_custom_call.1} parent=5 // pred_fallthru
        _
      %p271 = scmp.lt.s32.totalorder %s16, 2
      // Predicated region
      $region37: #{tpu_custom_call.1} parent=5 // pred_check
        %p272 = pneg %p271
      $region38: #{tpu_custom_call.1} parent=5 // pred_check_branch
        %274 = sbr.rel (%p272) target = $region40
      $region39: #{tpu_custom_call.1} parent=5 // pred_region
        // Predicated region
        $region41: #{tpu_custom_call.1} parent=39 // pred_check
          %p275 = pneg %p36
        $region42: #{tpu_custom_call.1} parent=39 // pred_check_branch
          %277 = sbr.rel (%p275) target = $region44
        $region43: #{tpu_custom_call.1} parent=39 // pred_region
          %s278 = smul.u32 32, %s16
          %p279 = scmp.lt.s32.totalorder %s278, 63
          %s280 = scalar_select %p279, %s278, 63
          %s281 = smul.addr %s280, 4
          %s282 = scalar_lea.vmem %s0, %s281
          %s283 = smul.u32 32, %s16
        $region44: #{tpu_custom_call.1} parent=39 // pred_fallthru
          _
      $region40: #{tpu_custom_call.1} parent=5 // pred_fallthru
        _
      %p284 = scmp.le.s32.totalorder 1, %s16
      %p285 = scmp.lt.s32.totalorder %s16, 3
      %p286 = pnand %p284, %p285
      %p287 = pneg %p286
      // Predicated region
      $region45: #{tpu_custom_call.1} parent=5 // pred_check
        _
      $region46: #{tpu_custom_call.1} parent=5 // pred_check_branch
        %289 = sbr.rel (%p286) target = $region48
      $region47: #{tpu_custom_call.1} parent=5 // pred_region
        %s290 = ssub.s32 %s16, 1
        // Predicated region
        $region49: #{tpu_custom_call.1} parent=47 // pred_check
          %p291 = pneg %p63
        $region50: #{tpu_custom_call.1} parent=47 // pred_check_branch
          %293 = sbr.rel (%p291) target = $region52
        $region51: #{tpu_custom_call.1} parent=47 // pred_region
          %294 = dma.done [#allocation3], 256
        $region52: #{tpu_custom_call.1} parent=47 // pred_fallthru
          _
        // Predicated region
        $region53: #{tpu_custom_call.1} parent=47 // pred_check
          %p295 = pneg %p84
        $region54: #{tpu_custom_call.1} parent=47 // pred_check_branch
          %297 = sbr.rel (%p295) target = $region56
        $region55: #{tpu_custom_call.1} parent=47 // pred_region
          %298 = dma.done [#allocation5], 16
        $region56: #{tpu_custom_call.1} parent=47 // pred_fallthru
          _
        // Predicated region
        $region57: #{tpu_custom_call.1} parent=47 // pred_check
          %p299 = pneg %p105
        $region58: #{tpu_custom_call.1} parent=47 // pred_check_branch
          %301 = sbr.rel (%p299) target = $region60
        $region59: #{tpu_custom_call.1} parent=47 // pred_region
          %302 = dma.done [#allocation5], 1024
        $region60: #{tpu_custom_call.1} parent=47 // pred_fallthru
          _
        // Predicated region
        $region61: #{tpu_custom_call.1} parent=47 // pred_check
          %p303 = pneg %p126
        $region62: #{tpu_custom_call.1} parent=47 // pred_check_branch
          %305 = sbr.rel (%p303) target = $region64
        $region63: #{tpu_custom_call.1} parent=47 // pred_region
          %306 = dma.done [#allocation8], 16
        $region64: #{tpu_custom_call.1} parent=47 // pred_fallthru
          _
        // Predicated region
        $region65: #{tpu_custom_call.1} parent=47 // pred_check
          %p307 = pneg %p168
        $region66: #{tpu_custom_call.1} parent=47 // pred_check_branch
          %309 = sbr.rel (%p307) target = $region68
        $region67: #{tpu_custom_call.1} parent=47 // pred_region
          %310 = dma.done [#allocation8], 112
        $region68: #{tpu_custom_call.1} parent=47 // pred_fallthru
          _
        %s311 = smul.u32 32, %s21
        %p312 = scmp.lt.s32.totalorder %s311, 63
        %s313 = scalar_select %p312, %s311, 63
        %s314 = smul.addr %s313, 4
        %s315 = scalar_lea.vmem %s0, %s314
        %p316 = pneg %p42
        %p317 = pneg %p39
        %p318 = pneg %p63
        %p319 = pneg %p60
        %p320 = pneg %p84
        %p321 = pneg %p81
        %p322 = pneg %p105
        %p323 = pneg %p102
        %p324 = pneg %p126
        %p325 = pneg %p123
        %p326 = pneg %p147
        %p327 = pneg %p144
        %p328 = pneg %p168
        %p329 = pneg %p165
        %p330 = pneg %p194
        %p331 = pneg %p191
        %s332 = smul.u32 32, %s21
        %p333 = scmp.lt.s32.totalorder %s332, 63
        %s334 = scalar_select %p333, %s332, 63
        %s335 = smul.addr %s334, 7
        %s336 = smul.addr %s335, 8
        %s337 = scalar_lea.vmem %s7, %s336
        %s338 = smul.u32 32, %s21
        %p339 = scmp.lt.s32.totalorder %s338, 63
        %s340 = scalar_select %p339, %s338, 63
        %s341 = smul.addr %s340, 4
        %s342 = scalar_lea.vmem %s0, %s341
        %s343 = smul.u32 32, %s21
        %s344 = smul.u32 32, %s21
        %p345 = scmp.lt.s32.totalorder %s344, 63
        %s346 = scalar_select %p345, %s344, 63
        %s347 = smul.addr %s346, 7
        %s348 = smul.addr %s347, 8
        %s349 = scalar_lea.vmem %s7, %s348
        %s350 = smul.u32 32, %s21
        %v352 = vld [vmem:[%s342] sm:$0xf]
        %v353 = vld [vmem:[%s342 + $0x4] sm:$0xf]
        %v354 = vld [vmem:[%s342 + $0x8] sm:$0xf]
        %v355 = vld [vmem:[%s342 + $0xc] sm:$0xf]
        %v356 = vld [vmem:[%s342 + $0x10] sm:$0xf]
        %v357 = vld [vmem:[%s342 + $0x14] sm:$0xf]
        %v358 = vld [vmem:[%s342 + $0x18] sm:$0xf]
        %v359 = vld [vmem:[%s342 + $0x1c] sm:$0xf]
        %v360 = vld [vmem:[%s342 + $0x20] sm:$0xf]
        %v361 = vld [vmem:[%s342 + $0x24] sm:$0xf]
        %v362 = vld [vmem:[%s342 + $0x28] sm:$0xf]
        %v363 = vld [vmem:[%s342 + $0x2c] sm:$0xf]
        %v364 = vld [vmem:[%s342 + $0x30] sm:$0xf]
        %v365 = vld [vmem:[%s342 + $0x34] sm:$0xf]
        %v366 = vld [vmem:[%s342 + $0x38] sm:$0xf]
        %v367 = vld [vmem:[%s342 + $0x3c] sm:$0xf]
        %v368 = vld [vmem:[%s342 + $0x40] sm:$0xf]
        %v369 = vld [vmem:[%s342 + $0x44] sm:$0xf]
        %v370 = vld [vmem:[%s342 + $0x48] sm:$0xf]
        %v371 = vld [vmem:[%s342 + $0x4c] sm:$0xf]
        %v372 = vld [vmem:[%s342 + $0x50] sm:$0xf]
        %v373 = vld [vmem:[%s342 + $0x54] sm:$0xf]
        %v374 = vld [vmem:[%s342 + $0x58] sm:$0xf]
        %v375 = vld [vmem:[%s342 + $0x5c] sm:$0xf]
        %v376 = vld [vmem:[%s342 + $0x60] sm:$0xf]
        %v377 = vld [vmem:[%s342 + $0x64] sm:$0xf]
        %v378 = vld [vmem:[%s342 + $0x68] sm:$0xf]
        %v379 = vld [vmem:[%s342 + $0x6c] sm:$0xf]
        %v380 = vld [vmem:[%s342 + $0x70] sm:$0xf]
        %v381 = vld [vmem:[%s342 + $0x74] sm:$0xf]
        %v382 = vld [vmem:[%s342 + $0x78] sm:$0xf]
        %v383 = vld [vmem:[%s342 + $0x7c] sm:$0xf]
        %v384 = vld [vmem:[#allocation2] sm:$0xf]
        %v385 = vld [vmem:[#allocation2 + $0x4] sm:$0xf]
        %v386 = vld [vmem:[#allocation2 + $0x8] sm:$0xf]
        %v387 = vld [vmem:[#allocation2 + $0xc] sm:$0xf]
        %v388 = vld [vmem:[#allocation4] sm:$0x1]
        %v390 = vlaneseq
        %v391 = vshrl.u32 %v390, 7
        %v392 = vsub.s32 0, %v391
        %v393 = vrot.slane %v388, %v392
        %v427 = vunpack.c.l.b16 %v352
        %v428 = vunpack.c.l.b16 %v353
        %v429 = vunpack.c.l.b16 %v354
        %v430 = vunpack.c.l.b16 %v355
        %v431 = vunpack.c.l.b16 %v356
        %v432 = vunpack.c.l.b16 %v357
        %v433 = vunpack.c.l.b16 %v358
        %v434 = vunpack.c.l.b16 %v359
        %v435 = vunpack.c.l.b16 %v360
        %v436 = vunpack.c.l.b16 %v361
        %v437 = vunpack.c.l.b16 %v362
        %v438 = vunpack.c.l.b16 %v363
        %v439 = vunpack.c.l.b16 %v364
        %v440 = vunpack.c.l.b16 %v365
        %v441 = vunpack.c.l.b16 %v366
        %v442 = vunpack.c.l.b16 %v367
        %v443 = vunpack.c.l.b16 %v368
        %v444 = vunpack.c.l.b16 %v369
        %v445 = vunpack.c.l.b16 %v370
        %v446 = vunpack.c.l.b16 %v371
        %v447 = vunpack.c.l.b16 %v372
        %v448 = vunpack.c.l.b16 %v373
        %v449 = vunpack.c.l.b16 %v374
        %v450 = vunpack.c.l.b16 %v375
        %v451 = vunpack.c.l.b16 %v376
        %v452 = vunpack.c.l.b16 %v377
        %v453 = vunpack.c.l.b16 %v378
        %v454 = vunpack.c.l.b16 %v379
        %v455 = vunpack.c.l.b16 %v380
        %v456 = vunpack.c.l.b16 %v381
        %v457 = vunpack.c.l.b16 %v382
        %v458 = vunpack.c.l.b16 %v383
        %v459 = vpack.c.b16 %v428, %v427
        %v460 = vpack.c.b16 %v430, %v429
        %v461 = vpack.c.b16 %v432, %v431
        %v462 = vpack.c.b16 %v434, %v433
        %v463 = vpack.c.b16 %v436, %v435
        %v464 = vpack.c.b16 %v438, %v437
        %v465 = vpack.c.b16 %v440, %v439
        %v466 = vpack.c.b16 %v442, %v441
        %v467 = vpack.c.b16 %v444, %v443
        %v468 = vpack.c.b16 %v446, %v445
        %v469 = vpack.c.b16 %v448, %v447
        %v470 = vpack.c.b16 %v450, %v449
        %v471 = vpack.c.b16 %v452, %v451
        %v472 = vpack.c.b16 %v454, %v453
        %v473 = vpack.c.b16 %v456, %v455
        %v474 = vpack.c.b16 %v458, %v457
        %v479 = vunpack.c.l.b16 %v384
        %v480 = vunpack.c.l.b16 %v385
        %v481 = vunpack.c.l.b16 %v386
        %v482 = vunpack.c.l.b16 %v387
        %v483 = vpack.c.b16 %v480, %v479
        %v484 = vpack.c.b16 %v482, %v481
        %vm487 = vcmask 261120
        %v489 = vsel %vm487, %v459, 0
        %v492 = vsel %vm487, %v460, 0
        %v495 = vsel %vm487, %v461, 0
        %v498 = vsel %vm487, %v462, 0
        %v501 = vsel %vm487, %v463, 0
        %v504 = vsel %vm487, %v464, 0
        %v507 = vsel %vm487, %v465, 0
        %v510 = vsel %vm487, %v466, 0
        %v513 = vsel %vm487, %v467, 0
        %v516 = vsel %vm487, %v468, 0
        %v519 = vsel %vm487, %v469, 0
        %v522 = vsel %vm487, %v470, 0
        %v525 = vsel %vm487, %v471, 0
        %v528 = vsel %vm487, %v472, 0
        %v531 = vsel %vm487, %v473, 0
        %v534 = vsel %vm487, %v474, 0
        %536 = vmatprep.subr.bf16.mxu0 0
        %537 = vmatpush1.bf16.msra.mxu0 0
        %538 = vmatprep.subr.bf16.mxu0 0
        %539 = vmatpush1.bf16.msra.mxu0 0
        %540 = vmatprep.subr.bf16.mxu0 0
        %541 = vmatpush1.bf16.msra.mxu0 0
        %542 = vmatprep.subr.bf16.mxu0 0
        %543 = vmatpush1.bf16.msra.mxu0 0
        %544 = vmatprep.subr.bf16.mxu0 0
        %545 = vmatpush1.bf16.msra.mxu0 0
        %546 = vmatprep.subr.bf16.mxu0 0
        %547 = vmatpush1.bf16.msra.mxu0 0
        %548 = vmatprep.subr.bf16.mxu0 0
        %549 = vmatpush1.bf16.msra.mxu0 %v484
        %550 = vmatprep.subr.bf16.mxu0 0
        %551 = vmatpush1.bf16.msra.mxu0 %v483
        %552 = vmatprep.subr.bf16.mxu0 0
        %553 = vmatpush2.bf16.msra.mxu0 0
        %554 = vmatprep.subr.bf16.mxu0 0
        %555 = vmatpush2.bf16.msra.mxu0 0
        %556 = vmatprep.subr.bf16.mxu0 0
        %557 = vmatpush2.bf16.msra.mxu0 0
        %558 = vmatprep.subr.bf16.mxu0 0
        %559 = vmatpush2.bf16.msra.mxu0 0
        %560 = vmatprep.subr.bf16.mxu0 0
        %561 = vmatpush2.bf16.msra.mxu0 0
        %562 = vmatprep.subr.bf16.mxu0 0
        %563 = vmatpush2.bf16.msra.mxu0 0
        %564 = vmatprep.subr.bf16.mxu0 0
        %565 = vmatpush2.bf16.msra.mxu0 0
        %566 = vmatprep.subr.bf16.mxu0 0
        %567 = vmatpush2.bf16.msra.mxu0 0
        %568 = vmatprep.mubr.bf16.mxu0 0
        %569 = vmatmul.mubr.bf16.gmra.mxu0 %v489
        %v570 = vpop.f32.mrf.mxu0
        %v571 = vadd.f32 %v393, %v570
        %v572 = vpop.f32.mrf.mxu0
        %v573 = vpop.f32.mrf.mxu0
        %v574 = vadd.f32 %v393, %v573
        %v575 = vpop.f32.mrf.mxu0
        %576 = vmatprep.mubr.bf16.mxu0 0
        %577 = vmatmul.mubr.bf16.gmra.mxu0 %v492
        %v578 = vpop.f32.mrf.mxu0
        %v579 = vadd.f32 %v393, %v578
        %v580 = vpop.f32.mrf.mxu0
        %v581 = vpop.f32.mrf.mxu0
        %v582 = vadd.f32 %v393, %v581
        %v583 = vpop.f32.mrf.mxu0
        %584 = vmatprep.mubr.bf16.mxu0 0
        %585 = vmatmul.mubr.bf16.gmra.mxu0 %v495
        %v586 = vpop.f32.mrf.mxu0
        %v587 = vadd.f32 %v393, %v586
        %v588 = vpop.f32.mrf.mxu0
        %v589 = vpop.f32.mrf.mxu0
        %v590 = vadd.f32 %v393, %v589
        %v591 = vpop.f32.mrf.mxu0
        %592 = vmatprep.mubr.bf16.mxu0 0
        %593 = vmatmul.mubr.bf16.gmra.mxu0 %v498
        %v594 = vpop.f32.mrf.mxu0
        %v595 = vadd.f32 %v393, %v594
        %v596 = vpop.f32.mrf.mxu0
        %v597 = vpop.f32.mrf.mxu0
        %v598 = vadd.f32 %v393, %v597
        %v599 = vpop.f32.mrf.mxu0
        %600 = vmatprep.mubr.bf16.mxu0 0
        %601 = vmatmul.mubr.bf16.gmra.mxu0 %v501
        %v602 = vpop.f32.mrf.mxu0
        %v603 = vadd.f32 %v393, %v602
        %v604 = vpop.f32.mrf.mxu0
        %v605 = vpop.f32.mrf.mxu0
        %v606 = vadd.f32 %v393, %v605
        %v607 = vpop.f32.mrf.mxu0
        %608 = vmatprep.mubr.bf16.mxu0 0
        %609 = vmatmul.mubr.bf16.gmra.mxu0 %v504
        %v610 = vpop.f32.mrf.mxu0
        %v611 = vadd.f32 %v393, %v610
        %v612 = vpop.f32.mrf.mxu0
        %v613 = vpop.f32.mrf.mxu0
        %v614 = vadd.f32 %v393, %v613
        %v615 = vpop.f32.mrf.mxu0
        %616 = vmatprep.mubr.bf16.mxu0 0
        %617 = vmatmul.mubr.bf16.gmra.mxu0 %v507
        %v618 = vpop.f32.mrf.mxu0
        %v619 = vadd.f32 %v393, %v618
        %v620 = vpop.f32.mrf.mxu0
        %v621 = vpop.f32.mrf.mxu0
        %v622 = vadd.f32 %v393, %v621
        %v623 = vpop.f32.mrf.mxu0
        %624 = vmatprep.mubr.bf16.mxu0 0
        %625 = vmatmul.mubr.bf16.gmra.mxu0 %v510
        %v626 = vpop.f32.mrf.mxu0
        %v627 = vadd.f32 %v393, %v626
        %v628 = vpop.f32.mrf.mxu0
        %v629 = vpop.f32.mrf.mxu0
        %v630 = vadd.f32 %v393, %v629
        %v631 = vpop.f32.mrf.mxu0
        %632 = vmatprep.mubr.bf16.mxu0 0
        %633 = vmatmul.mubr.bf16.gmra.mxu0 %v513
        %v634 = vpop.f32.mrf.mxu0
        %v635 = vadd.f32 %v393, %v634
        %v636 = vpop.f32.mrf.mxu0
        %v637 = vpop.f32.mrf.mxu0
        %v638 = vadd.f32 %v393, %v637
        %v639 = vpop.f32.mrf.mxu0
        %640 = vmatprep.mubr.bf16.mxu0 0
        %641 = vmatmul.mubr.bf16.gmra.mxu0 %v516
        %v642 = vpop.f32.mrf.mxu0
        %v643 = vadd.f32 %v393, %v642
        %v644 = vpop.f32.mrf.mxu0
        %v645 = vpop.f32.mrf.mxu0
        %v646 = vadd.f32 %v393, %v645
        %v647 = vpop.f32.mrf.mxu0
        %648 = vmatprep.mubr.bf16.mxu0 0
        %649 = vmatmul.mubr.bf16.gmra.mxu0 %v519
        %v650 = vpop.f32.mrf.mxu0
        %v651 = vadd.f32 %v393, %v650
        %v652 = vpop.f32.mrf.mxu0
        %v653 = vpop.f32.mrf.mxu0
        %v654 = vadd.f32 %v393, %v653
        %v655 = vpop.f32.mrf.mxu0
        %656 = vmatprep.mubr.bf16.mxu0 0
        %657 = vmatmul.mubr.bf16.gmra.mxu0 %v522
        %v658 = vpop.f32.mrf.mxu0
        %v659 = vadd.f32 %v393, %v658
        %v660 = vpop.f32.mrf.mxu0
        %v661 = vpop.f32.mrf.mxu0
        %v662 = vadd.f32 %v393, %v661
        %v663 = vpop.f32.mrf.mxu0
        %664 = vmatprep.mubr.bf16.mxu0 0
        %665 = vmatmul.mubr.bf16.gmra.mxu0 %v525
        %v666 = vpop.f32.mrf.mxu0
        %v667 = vadd.f32 %v393, %v666
        %v668 = vpop.f32.mrf.mxu0
        %v669 = vpop.f32.mrf.mxu0
        %v670 = vadd.f32 %v393, %v669
        %v671 = vpop.f32.mrf.mxu0
        %672 = vmatprep.mubr.bf16.mxu0 0
        %673 = vmatmul.mubr.bf16.gmra.mxu0 %v528
        %v674 = vpop.f32.mrf.mxu0
        %v675 = vadd.f32 %v393, %v674
        %v676 = vpop.f32.mrf.mxu0
        %v677 = vpop.f32.mrf.mxu0
        %v678 = vadd.f32 %v393, %v677
        %v679 = vpop.f32.mrf.mxu0
        %680 = vmatprep.mubr.bf16.mxu0 0
        %681 = vmatmul.mubr.bf16.gmra.mxu0 %v531
        %v682 = vpop.f32.mrf.mxu0
        %v683 = vadd.f32 %v393, %v682
        %v684 = vpop.f32.mrf.mxu0
        %v685 = vpop.f32.mrf.mxu0
        %v686 = vadd.f32 %v393, %v685
        %v687 = vpop.f32.mrf.mxu0
        %688 = vmatprep.mubr.bf16.mxu0 0
        %689 = vmatmul.mubr.bf16.gmra.mxu0 %v534
        %v690 = vpop.f32.mrf.mxu0
        %v691 = vadd.f32 %v393, %v690
        %v692 = vpop.f32.mrf.mxu0
        %v693 = vpop.f32.mrf.mxu0
        %v694 = vadd.f32 %v393, %v693
        %v695 = vpop.f32.mrf.mxu0
        %696 = vdwg.mxu0
        %v697 = vmax.f32 %v571, 0.0
        %v698 = vmax.f32 %v574, 0.0
        %v699 = vmax.f32 %v579, 0.0
        %v700 = vmax.f32 %v582, 0.0
        %v701 = vmax.f32 %v587, 0.0
        %v702 = vmax.f32 %v590, 0.0
        %v703 = vmax.f32 %v595, 0.0
        %v704 = vmax.f32 %v598, 0.0
        %v705 = vmax.f32 %v603, 0.0
        %v706 = vmax.f32 %v606, 0.0
        %v707 = vmax.f32 %v611, 0.0
        %v708 = vmax.f32 %v614, 0.0
        %v709 = vmax.f32 %v619, 0.0
        %v710 = vmax.f32 %v622, 0.0
        %v711 = vmax.f32 %v627, 0.0
        %v712 = vmax.f32 %v630, 0.0
        %v713 = vmax.f32 %v635, 0.0
        %v714 = vmax.f32 %v638, 0.0
        %v715 = vmax.f32 %v643, 0.0
        %v716 = vmax.f32 %v646, 0.0
        %v717 = vmax.f32 %v651, 0.0
        %v718 = vmax.f32 %v654, 0.0
        %v719 = vmax.f32 %v659, 0.0
        %v720 = vmax.f32 %v662, 0.0
        %v721 = vmax.f32 %v667, 0.0
        %v722 = vmax.f32 %v670, 0.0
        %v723 = vmax.f32 %v675, 0.0
        %v724 = vmax.f32 %v678, 0.0
        %v725 = vmax.f32 %v683, 0.0
        %v726 = vmax.f32 %v686, 0.0
        %v727 = vmax.f32 %v691, 0.0
        %v728 = vmax.f32 %v694, 0.0
        %v729 = vpack.c.bf16 %v698, %v697
        %v730 = vpack.c.bf16 %v700, %v699
        %v731 = vpack.c.bf16 %v702, %v701
        %v732 = vpack.c.bf16 %v704, %v703
        %v733 = vpack.c.bf16 %v706, %v705
        %v734 = vpack.c.bf16 %v708, %v707
        %v735 = vpack.c.bf16 %v710, %v709
        %v736 = vpack.c.bf16 %v712, %v711
        %v737 = vpack.c.bf16 %v714, %v713
        %v738 = vpack.c.bf16 %v716, %v715
        %v739 = vpack.c.bf16 %v718, %v717
        %v740 = vpack.c.bf16 %v720, %v719
        %v741 = vpack.c.bf16 %v722, %v721
        %v742 = vpack.c.bf16 %v724, %v723
        %v743 = vpack.c.bf16 %v726, %v725
        %v744 = vpack.c.bf16 %v728, %v727
        %v745 = vld [vmem:[#allocation6] sm:$0xf]
        %v746 = vld [vmem:[#allocation6 + $0x4] sm:$0xf]
        %v747 = vld [vmem:[#allocation6 + $0x8] sm:$0xf]
        %v748 = vld [vmem:[#allocation6 + $0xc] sm:$0xf]
        %v749 = vld [vmem:[#allocation6 + $0x10] sm:$0xf]
        %v750 = vld [vmem:[#allocation6 + $0x14] sm:$0xf]
        %v751 = vld [vmem:[#allocation6 + $0x18] sm:$0xf]
        %v752 = vld [vmem:[#allocation6 + $0x1c] sm:$0xf]
        %v753 = vld [vmem:[#allocation6 + $0x20] sm:$0xf]
        %v754 = vld [vmem:[#allocation6 + $0x24] sm:$0xf]
        %v755 = vld [vmem:[#allocation6 + $0x28] sm:$0xf]
        %v756 = vld [vmem:[#allocation6 + $0x2c] sm:$0xf]
        %v757 = vld [vmem:[#allocation6 + $0x30] sm:$0xf]
        %v758 = vld [vmem:[#allocation6 + $0x34] sm:$0xf]
        %v759 = vld [vmem:[#allocation6 + $0x38] sm:$0xf]
        %v760 = vld [vmem:[#allocation6 + $0x3c] sm:$0xf]
        %v761 = vld [vmem:[#allocation7] sm:$0x1]
        %v763 = vlaneseq
        %v764 = vshrl.u32 %v763, 7
        %v765 = vsub.s32 0, %v764
        %v766 = vrot.slane %v761, %v765
        %v784 = vunpack.c.l.b16 %v745
        %v785 = vunpack.c.l.b16 %v746
        %v786 = vunpack.c.l.b16 %v747
        %v787 = vunpack.c.l.b16 %v748
        %v788 = vunpack.c.l.b16 %v749
        %v789 = vunpack.c.l.b16 %v750
        %v790 = vunpack.c.l.b16 %v751
        %v791 = vunpack.c.l.b16 %v752
        %v792 = vunpack.c.l.b16 %v753
        %v793 = vunpack.c.l.b16 %v754
        %v794 = vunpack.c.l.b16 %v755
        %v795 = vunpack.c.l.b16 %v756
        %v796 = vunpack.c.l.b16 %v757
        %v797 = vunpack.c.l.b16 %v758
        %v798 = vunpack.c.l.b16 %v759
        %v799 = vunpack.c.l.b16 %v760
        %v800 = vpack.c.b16 %v785, %v784
        %v801 = vpack.c.b16 %v787, %v786
        %v802 = vpack.c.b16 %v789, %v788
        %v803 = vpack.c.b16 %v791, %v790
        %v804 = vpack.c.b16 %v793, %v792
        %v805 = vpack.c.b16 %v795, %v794
        %v806 = vpack.c.b16 %v797, %v796
        %v807 = vpack.c.b16 %v799, %v798
        %816 = vmatprep.subr.bf16.mxu0 0
        %817 = vmatpush1.bf16.msra.mxu0 %v807
        %818 = vmatprep.subr.bf16.mxu0 0
        %819 = vmatpush1.bf16.msra.mxu0 %v806
        %820 = vmatprep.subr.bf16.mxu0 0
        %821 = vmatpush1.bf16.msra.mxu0 %v805
        %822 = vmatprep.subr.bf16.mxu0 0
        %823 = vmatpush1.bf16.msra.mxu0 %v804
        %824 = vmatprep.subr.bf16.mxu0 0
        %825 = vmatpush1.bf16.msra.mxu0 %v803
        %826 = vmatprep.subr.bf16.mxu0 0
        %827 = vmatpush1.bf16.msra.mxu0 %v802
        %828 = vmatprep.subr.bf16.mxu0 0
        %829 = vmatpush1.bf16.msra.mxu0 %v801
        %830 = vmatprep.subr.bf16.mxu0 0
        %831 = vmatpush1.bf16.msra.mxu0 %v800
        %832 = vmatprep.subr.bf16.mxu0 0
        %833 = vmatpush2.bf16.msra.mxu0 0
        %834 = vmatprep.subr.bf16.mxu0 0
        %835 = vmatpush2.bf16.msra.mxu0 0
        %836 = vmatprep.subr.bf16.mxu0 0
        %837 = vmatpush2.bf16.msra.mxu0 0
        %838 = vmatprep.subr.bf16.mxu0 0
        %839 = vmatpush2.bf16.msra.mxu0 0
        %840 = vmatprep.subr.bf16.mxu0 0
        %841 = vmatpush2.bf16.msra.mxu0 0
        %842 = vmatprep.subr.bf16.mxu0 0
        %843 = vmatpush2.bf16.msra.mxu0 0
        %844 = vmatprep.subr.bf16.mxu0 0
        %845 = vmatpush2.bf16.msra.mxu0 0
        %846 = vmatprep.subr.bf16.mxu0 0
        %847 = vmatpush2.bf16.msra.mxu0 0
        %848 = vmatprep.mubr.bf16.mxu0 0
        %849 = vmatmul.mubr.bf16.gmra.mxu0 %v729
        %v850 = vpop.f32.mrf.mxu0
        %v851 = vadd.f32 %v766, %v850
        %v852 = vpop.f32.mrf.mxu0
        %v853 = vpop.f32.mrf.mxu0
        %v854 = vadd.f32 %v766, %v853
        %v855 = vpop.f32.mrf.mxu0
        %856 = vmatprep.mubr.bf16.mxu0 0
        %857 = vmatmul.mubr.bf16.gmra.mxu0 %v730
        %v858 = vpop.f32.mrf.mxu0
        %v859 = vadd.f32 %v766, %v858
        %v860 = vpop.f32.mrf.mxu0
        %v861 = vpop.f32.mrf.mxu0
        %v862 = vadd.f32 %v766, %v861
        %v863 = vpop.f32.mrf.mxu0
        %864 = vmatprep.mubr.bf16.mxu0 0
        %865 = vmatmul.mubr.bf16.gmra.mxu0 %v731
        %v866 = vpop.f32.mrf.mxu0
        %v867 = vadd.f32 %v766, %v866
        %v868 = vpop.f32.mrf.mxu0
        %v869 = vpop.f32.mrf.mxu0
        %v870 = vadd.f32 %v766, %v869
        %v871 = vpop.f32.mrf.mxu0
        %872 = vmatprep.mubr.bf16.mxu0 0
        %873 = vmatmul.mubr.bf16.gmra.mxu0 %v732
        %v874 = vpop.f32.mrf.mxu0
        %v875 = vadd.f32 %v766, %v874
        %v876 = vpop.f32.mrf.mxu0
        %v877 = vpop.f32.mrf.mxu0
        %v878 = vadd.f32 %v766, %v877
        %v879 = vpop.f32.mrf.mxu0
        %880 = vmatprep.mubr.bf16.mxu0 0
        %881 = vmatmul.mubr.bf16.gmra.mxu0 %v733
        %v882 = vpop.f32.mrf.mxu0
        %v883 = vadd.f32 %v766, %v882
        %v884 = vpop.f32.mrf.mxu0
        %v885 = vpop.f32.mrf.mxu0
        %v886 = vadd.f32 %v766, %v885
        %v887 = vpop.f32.mrf.mxu0
        %888 = vmatprep.mubr.bf16.mxu0 0
        %889 = vmatmul.mubr.bf16.gmra.mxu0 %v734
        %v890 = vpop.f32.mrf.mxu0
        %v891 = vadd.f32 %v766, %v890
        %v892 = vpop.f32.mrf.mxu0
        %v893 = vpop.f32.mrf.mxu0
        %v894 = vadd.f32 %v766, %v893
        %v895 = vpop.f32.mrf.mxu0
        %896 = vmatprep.mubr.bf16.mxu0 0
        %897 = vmatmul.mubr.bf16.gmra.mxu0 %v735
        %v898 = vpop.f32.mrf.mxu0
        %v899 = vadd.f32 %v766, %v898
        %v900 = vpop.f32.mrf.mxu0
        %v901 = vpop.f32.mrf.mxu0
        %v902 = vadd.f32 %v766, %v901
        %v903 = vpop.f32.mrf.mxu0
        %904 = vmatprep.mubr.bf16.mxu0 0
        %905 = vmatmul.mubr.bf16.gmra.mxu0 %v736
        %v906 = vpop.f32.mrf.mxu0
        %v907 = vadd.f32 %v766, %v906
        %v908 = vpop.f32.mrf.mxu0
        %v909 = vpop.f32.mrf.mxu0
        %v910 = vadd.f32 %v766, %v909
        %v911 = vpop.f32.mrf.mxu0
        %912 = vmatprep.mubr.bf16.mxu0 0
        %913 = vmatmul.mubr.bf16.gmra.mxu0 %v737
        %v914 = vpop.f32.mrf.mxu0
        %v915 = vadd.f32 %v766, %v914
        %v916 = vpop.f32.mrf.mxu0
        %v917 = vpop.f32.mrf.mxu0
        %v918 = vadd.f32 %v766, %v917
        %v919 = vpop.f32.mrf.mxu0
        %920 = vmatprep.mubr.bf16.mxu0 0
        %921 = vmatmul.mubr.bf16.gmra.mxu0 %v738
        %v922 = vpop.f32.mrf.mxu0
        %v923 = vadd.f32 %v766, %v922
        %v924 = vpop.f32.mrf.mxu0
        %v925 = vpop.f32.mrf.mxu0
        %v926 = vadd.f32 %v766, %v925
        %v927 = vpop.f32.mrf.mxu0
        %928 = vmatprep.mubr.bf16.mxu0 0
        %929 = vmatmul.mubr.bf16.gmra.mxu0 %v739
        %v930 = vpop.f32.mrf.mxu0
        %v931 = vadd.f32 %v766, %v930
        %v932 = vpop.f32.mrf.mxu0
        %v933 = vpop.f32.mrf.mxu0
        %v934 = vadd.f32 %v766, %v933
        %v935 = vpop.f32.mrf.mxu0
        %936 = vmatprep.mubr.bf16.mxu0 0
        %937 = vmatmul.mubr.bf16.gmra.mxu0 %v740
        %v938 = vpop.f32.mrf.mxu0
        %v939 = vadd.f32 %v766, %v938
        %v940 = vpop.f32.mrf.mxu0
        %v941 = vpop.f32.mrf.mxu0
        %v942 = vadd.f32 %v766, %v941
        %v943 = vpop.f32.mrf.mxu0
        %944 = vmatprep.mubr.bf16.mxu0 0
        %945 = vmatmul.mubr.bf16.gmra.mxu0 %v741
        %v946 = vpop.f32.mrf.mxu0
        %v947 = vadd.f32 %v766, %v946
        %v948 = vpop.f32.mrf.mxu0
        %v949 = vpop.f32.mrf.mxu0
        %v950 = vadd.f32 %v766, %v949
        %v951 = vpop.f32.mrf.mxu0
        %952 = vmatprep.mubr.bf16.mxu0 0
        %953 = vmatmul.mubr.bf16.gmra.mxu0 %v742
        %v954 = vpop.f32.mrf.mxu0
        %v955 = vadd.f32 %v766, %v954
        %v956 = vpop.f32.mrf.mxu0
        %v957 = vpop.f32.mrf.mxu0
        %v958 = vadd.f32 %v766, %v957
        %v959 = vpop.f32.mrf.mxu0
        %960 = vmatprep.mubr.bf16.mxu0 0
        %961 = vmatmul.mubr.bf16.gmra.mxu0 %v743
        %v962 = vpop.f32.mrf.mxu0
        %v963 = vadd.f32 %v766, %v962
        %v964 = vpop.f32.mrf.mxu0
        %v965 = vpop.f32.mrf.mxu0
        %v966 = vadd.f32 %v766, %v965
        %v967 = vpop.f32.mrf.mxu0
        %968 = vmatprep.mubr.bf16.mxu0 0
        %969 = vmatmul.mubr.bf16.gmra.mxu0 %v744
        %v970 = vpop.f32.mrf.mxu0
        %v971 = vadd.f32 %v766, %v970
        %v972 = vpop.f32.mrf.mxu0
        %v973 = vpop.f32.mrf.mxu0
        %v974 = vadd.f32 %v766, %v973
        %v975 = vpop.f32.mrf.mxu0
        %976 = vdwg.mxu0
        %v977 = vmax.f32 %v851, 0.0
        %v978 = vmax.f32 %v854, 0.0
        %v979 = vmax.f32 %v859, 0.0
        %v980 = vmax.f32 %v862, 0.0
        %v981 = vmax.f32 %v867, 0.0
        %v982 = vmax.f32 %v870, 0.0
        %v983 = vmax.f32 %v875, 0.0
        %v984 = vmax.f32 %v878, 0.0
        %v985 = vmax.f32 %v883, 0.0
        %v986 = vmax.f32 %v886, 0.0
        %v987 = vmax.f32 %v891, 0.0
        %v988 = vmax.f32 %v894, 0.0
        %v989 = vmax.f32 %v899, 0.0
        %v990 = vmax.f32 %v902, 0.0
        %v991 = vmax.f32 %v907, 0.0
        %v992 = vmax.f32 %v910, 0.0
        %v993 = vmax.f32 %v915, 0.0
        %v994 = vmax.f32 %v918, 0.0
        %v995 = vmax.f32 %v923, 0.0
        %v996 = vmax.f32 %v926, 0.0
        %v997 = vmax.f32 %v931, 0.0
        %v998 = vmax.f32 %v934, 0.0
        %v999 = vmax.f32 %v939, 0.0
        %v1000 = vmax.f32 %v942, 0.0
        %v1001 = vmax.f32 %v947, 0.0
        %v1002 = vmax.f32 %v950, 0.0
        %v1003 = vmax.f32 %v955, 0.0
        %v1004 = vmax.f32 %v958, 0.0
        %v1005 = vmax.f32 %v963, 0.0
        %v1006 = vmax.f32 %v966, 0.0
        %v1007 = vmax.f32 %v971, 0.0
        %v1008 = vmax.f32 %v974, 0.0
        %v1009 = vpack.c.bf16 %v978, %v977
        %v1010 = vpack.c.bf16 %v980, %v979
        %v1011 = vpack.c.bf16 %v982, %v981
        %v1012 = vpack.c.bf16 %v984, %v983
        %v1013 = vpack.c.bf16 %v986, %v985
        %v1014 = vpack.c.bf16 %v988, %v987
        %v1015 = vpack.c.bf16 %v990, %v989
        %v1016 = vpack.c.bf16 %v992, %v991
        %v1017 = vpack.c.bf16 %v994, %v993
        %v1018 = vpack.c.bf16 %v996, %v995
        %v1019 = vpack.c.bf16 %v998, %v997
        %v1020 = vpack.c.bf16 %v1000, %v999
        %v1021 = vpack.c.bf16 %v1002, %v1001
        %v1022 = vpack.c.bf16 %v1004, %v1003
        %v1023 = vpack.c.bf16 %v1006, %v1005
        %v1024 = vpack.c.bf16 %v1008, %v1007
        %v1025 = vld [vmem:[%s5] sm:$0xff]
        %v1026 = vld [vmem:[%s5 + $0x8] sm:$0xff]
        %v1027 = vld [vmem:[%s5 + $0x10] sm:$0xff]
        %v1028 = vld [vmem:[%s5 + $0x18] sm:$0xf]
        %v1029 = vld [vmem:[%s5 + $0x1c] sm:$0xff]
        %v1030 = vld [vmem:[%s5 + $0x24] sm:$0xff]
        %v1031 = vld [vmem:[%s5 + $0x2c] sm:$0xff]
        %v1032 = vld [vmem:[%s5 + $0x34] sm:$0xf]
        %v1033 = vld [vmem:[%s5 + $0x38] sm:$0xff]
        %v1034 = vld [vmem:[%s5 + $0x40] sm:$0xff]
        %v1035 = vld [vmem:[%s5 + $0x48] sm:$0xff]
        %v1036 = vld [vmem:[%s5 + $0x50] sm:$0xf]
        %v1037 = vld [vmem:[%s5 + $0x54] sm:$0xff]
        %v1038 = vld [vmem:[%s5 + $0x5c] sm:$0xff]
        %v1039 = vld [vmem:[%s5 + $0x64] sm:$0xff]
        %v1040 = vld [vmem:[%s5 + $0x6c] sm:$0xf]
        %v1041 = vld [vmem:[%s5 + $0x70] sm:$0xff]
        %v1042 = vld [vmem:[%s5 + $0x78] sm:$0xff]
        %v1043 = vld [vmem:[%s5 + $0x80] sm:$0xff]
        %v1044 = vld [vmem:[%s5 + $0x88] sm:$0xf]
        %v1045 = vld [vmem:[%s5 + $0x8c] sm:$0xff]
        %v1046 = vld [vmem:[%s5 + $0x94] sm:$0xff]
        %v1047 = vld [vmem:[%s5 + $0x9c] sm:$0xff]
        %v1048 = vld [vmem:[%s5 + $0xa4] sm:$0xf]
        %v1049 = vld [vmem:[%s5 + $0xa8] sm:$0xff]
        %v1050 = vld [vmem:[%s5 + $0xb0] sm:$0xff]
        %v1051 = vld [vmem:[%s5 + $0xb8] sm:$0xff]
        %v1052 = vld [vmem:[%s5 + $0xc0] sm:$0xf]
        %v1053 = vld [vmem:[%s5 + $0xc4] sm:$0xff]
        %v1054 = vld [vmem:[%s5 + $0xcc] sm:$0xff]
        %v1055 = vld [vmem:[%s5 + $0xd4] sm:$0xff]
        %v1056 = vld [vmem:[%s5 + $0xdc] sm:$0xf]
        %v1057 = vld [vmem:[%s5 + $0xe0] sm:$0xff]
        %v1058 = vld [vmem:[%s5 + $0xe8] sm:$0xff]
        %v1059 = vld [vmem:[%s5 + $0xf0] sm:$0xff]
        %v1060 = vld [vmem:[%s5 + $0xf8] sm:$0xf]
        %v1061 = vld [vmem:[%s5 + $0xfc] sm:$0xff]
        %v1062 = vld [vmem:[%s5 + $0x104] sm:$0xff]
        %v1063 = vld [vmem:[%s5 + $0x10c] sm:$0xff]
        %v1064 = vld [vmem:[%s5 + $0x114] sm:$0xf]
        %v1065 = vld [vmem:[%s5 + $0x118] sm:$0xff]
        %v1066 = vld [vmem:[%s5 + $0x120] sm:$0xff]
        %v1067 = vld [vmem:[%s5 + $0x128] sm:$0xff]
        %v1068 = vld [vmem:[%s5 + $0x130] sm:$0xf]
        %v1069 = vld [vmem:[%s5 + $0x134] sm:$0xff]
        %v1070 = vld [vmem:[%s5 + $0x13c] sm:$0xff]
        %v1071 = vld [vmem:[%s5 + $0x144] sm:$0xff]
        %v1072 = vld [vmem:[%s5 + $0x14c] sm:$0xf]
        %v1073 = vld [vmem:[%s5 + $0x150] sm:$0xff]
        %v1074 = vld [vmem:[%s5 + $0x158] sm:$0xff]
        %v1075 = vld [vmem:[%s5 + $0x160] sm:$0xff]
        %v1076 = vld [vmem:[%s5 + $0x168] sm:$0xf]
        %v1077 = vld [vmem:[%s5 + $0x16c] sm:$0xff]
        %v1078 = vld [vmem:[%s5 + $0x174] sm:$0xff]
        %v1079 = vld [vmem:[%s5 + $0x17c] sm:$0xff]
        %v1080 = vld [vmem:[%s5 + $0x184] sm:$0xf]
        %v1081 = vld [vmem:[%s5 + $0x188] sm:$0xff]
        %v1082 = vld [vmem:[%s5 + $0x190] sm:$0xff]
        %v1083 = vld [vmem:[%s5 + $0x198] sm:$0xff]
        %v1084 = vld [vmem:[%s5 + $0x1a0] sm:$0xf]
        %v1085 = vld [vmem:[%s5 + $0x1a4] sm:$0xff]
        %v1086 = vld [vmem:[%s5 + $0x1ac] sm:$0xff]
        %v1087 = vld [vmem:[%s5 + $0x1b4] sm:$0xff]
        %v1088 = vld [vmem:[%s5 + $0x1bc] sm:$0xf]
        %v1089 = vld [vmem:[#allocation9] sm:$0x7f]
        %v1091 = vlaneseq
        %v1092 = vshrl.u32 %v1091, 7
        %v1093 = vsub.s32 0, %v1092
        %v1094 = vrot.slane %v1089, %v1093
        %v1095 = vlaneseq
        %v1096 = vshrl.u32 %v1095, 7
        %v1097 = vsub.s32 1, %v1096
        %v1098 = vrot.slane %v1089, %v1097
        %v1099 = vlaneseq
        %v1100 = vshrl.u32 %v1099, 7
        %v1101 = vsub.s32 2, %v1100
        %v1102 = vrot.slane %v1089, %v1101
        %v1103 = vlaneseq
        %v1104 = vshrl.u32 %v1103, 7
        %v1105 = vsub.s32 3, %v1104
        %v1106 = vrot.slane %v1089, %v1105
        %v1107 = vlaneseq
        %v1108 = vshrl.u32 %v1107, 7
        %v1109 = vsub.s32 4, %v1108
        %v1110 = vrot.slane %v1089, %v1109
        %v1111 = vlaneseq
        %v1112 = vshrl.u32 %v1111, 7
        %v1113 = vsub.s32 5, %v1112
        %v1114 = vrot.slane %v1089, %v1113
        %v1115 = vlaneseq
        %v1116 = vshrl.u32 %v1115, 7
        %v1117 = vsub.s32 6, %v1116
        %v1118 = vrot.slane %v1089, %v1117
        %v1190 = vunpack.c.l.b16 %v1025
        %v1191 = vunpack.c.h.b16 %v1025
        %v1192 = vunpack.c.l.b16 %v1026
        %v1193 = vunpack.c.h.b16 %v1026
        %v1194 = vunpack.c.l.b16 %v1027
        %v1195 = vunpack.c.h.b16 %v1027
        %v1196 = vunpack.c.l.b16 %v1028
        %v1197 = vunpack.c.l.b16 %v1029
        %v1198 = vunpack.c.h.b16 %v1029
        %v1199 = vunpack.c.l.b16 %v1030
        %v1200 = vunpack.c.h.b16 %v1030
        %v1201 = vunpack.c.l.b16 %v1031
        %v1202 = vunpack.c.h.b16 %v1031
        %v1203 = vunpack.c.l.b16 %v1032
        %v1204 = vunpack.c.l.b16 %v1033
        %v1205 = vunpack.c.h.b16 %v1033
        %v1206 = vunpack.c.l.b16 %v1034
        %v1207 = vunpack.c.h.b16 %v1034
        %v1208 = vunpack.c.l.b16 %v1035
        %v1209 = vunpack.c.h.b16 %v1035
        %v1210 = vunpack.c.l.b16 %v1036
        %v1211 = vunpack.c.l.b16 %v1037
        %v1212 = vunpack.c.h.b16 %v1037
        %v1213 = vunpack.c.l.b16 %v1038
        %v1214 = vunpack.c.h.b16 %v1038
        %v1215 = vunpack.c.l.b16 %v1039
        %v1216 = vunpack.c.h.b16 %v1039
        %v1217 = vunpack.c.l.b16 %v1040
        %v1218 = vunpack.c.l.b16 %v1041
        %v1219 = vunpack.c.h.b16 %v1041
        %v1220 = vunpack.c.l.b16 %v1042
        %v1221 = vunpack.c.h.b16 %v1042
        %v1222 = vunpack.c.l.b16 %v1043
        %v1223 = vunpack.c.h.b16 %v1043
        %v1224 = vunpack.c.l.b16 %v1044
        %v1225 = vunpack.c.l.b16 %v1045
        %v1226 = vunpack.c.h.b16 %v1045
        %v1227 = vunpack.c.l.b16 %v1046
        %v1228 = vunpack.c.h.b16 %v1046
        %v1229 = vunpack.c.l.b16 %v1047
        %v1230 = vunpack.c.h.b16 %v1047
        %v1231 = vunpack.c.l.b16 %v1048
        %v1232 = vunpack.c.l.b16 %v1049
        %v1233 = vunpack.c.h.b16 %v1049
        %v1234 = vunpack.c.l.b16 %v1050
        %v1235 = vunpack.c.h.b16 %v1050
        %v1236 = vunpack.c.l.b16 %v1051
        %v1237 = vunpack.c.h.b16 %v1051
        %v1238 = vunpack.c.l.b16 %v1052
        %v1239 = vunpack.c.l.b16 %v1053
        %v1240 = vunpack.c.h.b16 %v1053
        %v1241 = vunpack.c.l.b16 %v1054
        %v1242 = vunpack.c.h.b16 %v1054
        %v1243 = vunpack.c.l.b16 %v1055
        %v1244 = vunpack.c.h.b16 %v1055
        %v1245 = vunpack.c.l.b16 %v1056
        %v1246 = vunpack.c.l.b16 %v1057
        %v1247 = vunpack.c.h.b16 %v1057
        %v1248 = vunpack.c.l.b16 %v1058
        %v1249 = vunpack.c.h.b16 %v1058
        %v1250 = vunpack.c.l.b16 %v1059
        %v1251 = vunpack.c.h.b16 %v1059
        %v1252 = vunpack.c.l.b16 %v1060
        %v1253 = vunpack.c.l.b16 %v1061
        %v1254 = vunpack.c.h.b16 %v1061
        %v1255 = vunpack.c.l.b16 %v1062
        %v1256 = vunpack.c.h.b16 %v1062
        %v1257 = vunpack.c.l.b16 %v1063
        %v1258 = vunpack.c.h.b16 %v1063
        %v1259 = vunpack.c.l.b16 %v1064
        %v1260 = vunpack.c.l.b16 %v1065
        %v1261 = vunpack.c.h.b16 %v1065
        %v1262 = vunpack.c.l.b16 %v1066
        %v1263 = vunpack.c.h.b16 %v1066
        %v1264 = vunpack.c.l.b16 %v1067
        %v1265 = vunpack.c.h.b16 %v1067
        %v1266 = vunpack.c.l.b16 %v1068
        %v1267 = vunpack.c.l.b16 %v1069
        %v1268 = vunpack.c.h.b16 %v1069
        %v1269 = vunpack.c.l.b16 %v1070
        %v1270 = vunpack.c.h.b16 %v1070
        %v1271 = vunpack.c.l.b16 %v1071
        %v1272 = vunpack.c.h.b16 %v1071
        %v1273 = vunpack.c.l.b16 %v1072
        %v1274 = vunpack.c.l.b16 %v1073
        %v1275 = vunpack.c.h.b16 %v1073
        %v1276 = vunpack.c.l.b16 %v1074
        %v1277 = vunpack.c.h.b16 %v1074
        %v1278 = vunpack.c.l.b16 %v1075
        %v1279 = vunpack.c.h.b16 %v1075
        %v1280 = vunpack.c.l.b16 %v1076
        %v1281 = vunpack.c.l.b16 %v1077
        %v1282 = vunpack.c.h.b16 %v1077
        %v1283 = vunpack.c.l.b16 %v1078
        %v1284 = vunpack.c.h.b16 %v1078
        %v1285 = vunpack.c.l.b16 %v1079
        %v1286 = vunpack.c.h.b16 %v1079
        %v1287 = vunpack.c.l.b16 %v1080
        %v1288 = vunpack.c.l.b16 %v1081
        %v1289 = vunpack.c.h.b16 %v1081
        %v1290 = vunpack.c.l.b16 %v1082
        %v1291 = vunpack.c.h.b16 %v1082
        %v1292 = vunpack.c.l.b16 %v1083
        %v1293 = vunpack.c.h.b16 %v1083
        %v1294 = vunpack.c.l.b16 %v1084
        %v1295 = vunpack.c.l.b16 %v1085
        %v1296 = vunpack.c.h.b16 %v1085
        %v1297 = vunpack.c.l.b16 %v1086
        %v1298 = vunpack.c.h.b16 %v1086
        %v1299 = vunpack.c.l.b16 %v1087
        %v1300 = vunpack.c.h.b16 %v1087
        %v1301 = vunpack.c.l.b16 %v1088
        %v1302 = vpack.c.b16 %v1197, %v1190
        %v1303 = vpack.c.b16 %v1198, %v1191
        %v1304 = vpack.c.b16 %v1199, %v1192
        %v1305 = vpack.c.b16 %v1200, %v1193
        %v1306 = vpack.c.b16 %v1201, %v1194
        %v1307 = vpack.c.b16 %v1202, %v1195
        %v1308 = vpack.c.b16 %v1203, %v1196
        %v1309 = vpack.c.b16 %v1211, %v1204
        %v1310 = vpack.c.b16 %v1212, %v1205
        %v1311 = vpack.c.b16 %v1213, %v1206
        %v1312 = vpack.c.b16 %v1214, %v1207
        %v1313 = vpack.c.b16 %v1215, %v1208
        %v1314 = vpack.c.b16 %v1216, %v1209
        %v1315 = vpack.c.b16 %v1217, %v1210
        %v1316 = vpack.c.b16 %v1225, %v1218
        %v1317 = vpack.c.b16 %v1226, %v1219
        %v1318 = vpack.c.b16 %v1227, %v1220
        %v1319 = vpack.c.b16 %v1228, %v1221
        %v1320 = vpack.c.b16 %v1229, %v1222
        %v1321 = vpack.c.b16 %v1230, %v1223
        %v1322 = vpack.c.b16 %v1231, %v1224
        %v1323 = vpack.c.b16 %v1239, %v1232
        %v1324 = vpack.c.b16 %v1240, %v1233
        %v1325 = vpack.c.b16 %v1241, %v1234
        %v1326 = vpack.c.b16 %v1242, %v1235
        %v1327 = vpack.c.b16 %v1243, %v1236
        %v1328 = vpack.c.b16 %v1244, %v1237
        %v1329 = vpack.c.b16 %v1245, %v1238
        %v1330 = vpack.c.b16 %v1253, %v1246
        %v1331 = vpack.c.b16 %v1254, %v1247
        %v1332 = vpack.c.b16 %v1255, %v1248
        %v1333 = vpack.c.b16 %v1256, %v1249
        %v1334 = vpack.c.b16 %v1257, %v1250
        %v1335 = vpack.c.b16 %v1258, %v1251
        %v1336 = vpack.c.b16 %v1259, %v1252
        %v1337 = vpack.c.b16 %v1267, %v1260
        %v1338 = vpack.c.b16 %v1268, %v1261
        %v1339 = vpack.c.b16 %v1269, %v1262
        %v1340 = vpack.c.b16 %v1270, %v1263
        %v1341 = vpack.c.b16 %v1271, %v1264
        %v1342 = vpack.c.b16 %v1272, %v1265
        %v1343 = vpack.c.b16 %v1273, %v1266
        %v1344 = vpack.c.b16 %v1281, %v1274
        %v1345 = vpack.c.b16 %v1282, %v1275
        %v1346 = vpack.c.b16 %v1283, %v1276
        %v1347 = vpack.c.b16 %v1284, %v1277
        %v1348 = vpack.c.b16 %v1285, %v1278
        %v1349 = vpack.c.b16 %v1286, %v1279
        %v1350 = vpack.c.b16 %v1287, %v1280
        %v1351 = vpack.c.b16 %v1295, %v1288
        %v1352 = vpack.c.b16 %v1296, %v1289
        %v1353 = vpack.c.b16 %v1297, %v1290
        %v1354 = vpack.c.b16 %v1298, %v1291
        %v1355 = vpack.c.b16 %v1299, %v1292
        %v1356 = vpack.c.b16 %v1300, %v1293
        %v1357 = vpack.c.b16 %v1301, %v1294
        %1414 = vmatprep.subr.bf16.mxu0 %v1352
        %1415 = vmatpush1.bf16.msra.mxu0 %v1351
        %1416 = vmatprep.subr.bf16.mxu0 %v1345
        %1417 = vmatpush1.bf16.msra.mxu0 %v1344
        %1418 = vmatprep.subr.bf16.mxu0 %v1338
        %1419 = vmatpush1.bf16.msra.mxu0 %v1337
        %1420 = vmatprep.subr.bf16.mxu0 %v1331
        %1421 = vmatpush1.bf16.msra.mxu0 %v1330
        %1422 = vmatprep.subr.bf16.mxu0 %v1324
        %1423 = vmatpush1.bf16.msra.mxu0 %v1323
        %1424 = vmatprep.subr.bf16.mxu0 %v1317
        %1425 = vmatpush1.bf16.msra.mxu0 %v1316
        %1426 = vmatprep.subr.bf16.mxu0 %v1310
        %1427 = vmatpush1.bf16.msra.mxu0 %v1309
        %1428 = vmatprep.subr.bf16.mxu0 %v1303
        %1429 = vmatpush1.bf16.msra.mxu0 %v1302
        %1430 = vmatprep.subr.bf16.mxu0 0
        %1431 = vmatpush2.bf16.msra.mxu0 0
        %1432 = vmatprep.subr.bf16.mxu0 0
        %1433 = vmatpush2.bf16.msra.mxu0 0
        %1434 = vmatprep.subr.bf16.mxu0 0
        %1435 = vmatpush2.bf16.msra.mxu0 0
        %1436 = vmatprep.subr.bf16.mxu0 0
        %1437 = vmatpush2.bf16.msra.mxu0 0
        %1438 = vmatprep.subr.bf16.mxu0 0
        %1439 = vmatpush2.bf16.msra.mxu0 0
        %1440 = vmatprep.subr.bf16.mxu0 0
        %1441 = vmatpush2.bf16.msra.mxu0 0
        %1442 = vmatprep.subr.bf16.mxu0 0
        %1443 = vmatpush2.bf16.msra.mxu0 0
        %1444 = vmatprep.subr.bf16.mxu0 0
        %1445 = vmatpush2.bf16.msra.mxu0 0
        %1446 = vmatprep.mubr.bf16.mxu0 0
        %1447 = vmatmul.mubr.bf16.gmra.mxu0 %v1009
        %v1448 = vpop.f32.mrf.mxu0
        %v1449 = vadd.f32 %v1094, %v1448
        %v1450 = vpop.f32.mrf.mxu0
        %v1451 = vadd.f32 %v1098, %v1450
        %v1452 = vpop.f32.mrf.mxu0
        %v1453 = vadd.f32 %v1094, %v1452
        %v1454 = vpop.f32.mrf.mxu0
        %v1455 = vadd.f32 %v1098, %v1454
        %1456 = vmatprep.mubr.bf16.mxu0 0
        %1457 = vmatmul.mubr.bf16.gmra.mxu0 %v1010
        %v1458 = vpop.f32.mrf.mxu0
        %v1459 = vadd.f32 %v1094, %v1458
        %v1460 = vpop.f32.mrf.mxu0
        %v1461 = vadd.f32 %v1098, %v1460
        %v1462 = vpop.f32.mrf.mxu0
        %v1463 = vadd.f32 %v1094, %v1462
        %v1464 = vpop.f32.mrf.mxu0
        %v1465 = vadd.f32 %v1098, %v1464
        %1466 = vmatprep.mubr.bf16.mxu0 0
        %1467 = vmatmul.mubr.bf16.gmra.mxu0 %v1011
        %v1468 = vpop.f32.mrf.mxu0
        %v1469 = vadd.f32 %v1094, %v1468
        %v1470 = vpop.f32.mrf.mxu0
        %v1471 = vadd.f32 %v1098, %v1470
        %v1472 = vpop.f32.mrf.mxu0
        %v1473 = vadd.f32 %v1094, %v1472
        %v1474 = vpop.f32.mrf.mxu0
        %v1475 = vadd.f32 %v1098, %v1474
        %1476 = vmatprep.mubr.bf16.mxu0 0
        %1477 = vmatmul.mubr.bf16.gmra.mxu0 %v1012
        %v1478 = vpop.f32.mrf.mxu0
        %v1479 = vadd.f32 %v1094, %v1478
        %v1480 = vpop.f32.mrf.mxu0
        %v1481 = vadd.f32 %v1098, %v1480
        %v1482 = vpop.f32.mrf.mxu0
        %v1483 = vadd.f32 %v1094, %v1482
        %v1484 = vpop.f32.mrf.mxu0
        %v1485 = vadd.f32 %v1098, %v1484
        %1486 = vmatprep.mubr.bf16.mxu0 0
        %1487 = vmatmul.mubr.bf16.gmra.mxu0 %v1013
        %v1488 = vpop.f32.mrf.mxu0
        %v1489 = vadd.f32 %v1094, %v1488
        %v1490 = vpop.f32.mrf.mxu0
        %v1491 = vadd.f32 %v1098, %v1490
        %v1492 = vpop.f32.mrf.mxu0
        %v1493 = vadd.f32 %v1094, %v1492
        %v1494 = vpop.f32.mrf.mxu0
        %v1495 = vadd.f32 %v1098, %v1494
        %1496 = vmatprep.mubr.bf16.mxu0 0
        %1497 = vmatmul.mubr.bf16.gmra.mxu0 %v1014
        %v1498 = vpop.f32.mrf.mxu0
        %v1499 = vadd.f32 %v1094, %v1498
        %v1500 = vpop.f32.mrf.mxu0
        %v1501 = vadd.f32 %v1098, %v1500
        %v1502 = vpop.f32.mrf.mxu0
        %v1503 = vadd.f32 %v1094, %v1502
        %v1504 = vpop.f32.mrf.mxu0
        %v1505 = vadd.f32 %v1098, %v1504
        %1506 = vmatprep.mubr.bf16.mxu0 0
        %1507 = vmatmul.mubr.bf16.gmra.mxu0 %v1015
        %v1508 = vpop.f32.mrf.mxu0
        %v1509 = vadd.f32 %v1094, %v1508
        %v1510 = vpop.f32.mrf.mxu0
        %v1511 = vadd.f32 %v1098, %v1510
        %v1512 = vpop.f32.mrf.mxu0
        %v1513 = vadd.f32 %v1094, %v1512
        %v1514 = vpop.f32.mrf.mxu0
        %v1515 = vadd.f32 %v1098, %v1514
        %1516 = vmatprep.mubr.bf16.mxu0 0
        %1517 = vmatmul.mubr.bf16.gmra.mxu0 %v1016
        %v1518 = vpop.f32.mrf.mxu0
        %v1519 = vadd.f32 %v1094, %v1518
        %v1520 = vpop.f32.mrf.mxu0
        %v1521 = vadd.f32 %v1098, %v1520
        %v1522 = vpop.f32.mrf.mxu0
        %v1523 = vadd.f32 %v1094, %v1522
        %v1524 = vpop.f32.mrf.mxu0
        %v1525 = vadd.f32 %v1098, %v1524
        %1526 = vmatprep.mubr.bf16.mxu0 0
        %1527 = vmatmul.mubr.bf16.gmra.mxu0 %v1017
        %v1528 = vpop.f32.mrf.mxu0
        %v1529 = vadd.f32 %v1094, %v1528
        %v1530 = vpop.f32.mrf.mxu0
        %v1531 = vadd.f32 %v1098, %v1530
        %v1532 = vpop.f32.mrf.mxu0
        %v1533 = vadd.f32 %v1094, %v1532
        %v1534 = vpop.f32.mrf.mxu0
        %v1535 = vadd.f32 %v1098, %v1534
        %1536 = vmatprep.mubr.bf16.mxu0 0
        %1537 = vmatmul.mubr.bf16.gmra.mxu0 %v1018
        %v1538 = vpop.f32.mrf.mxu0
        %v1539 = vadd.f32 %v1094, %v1538
        %v1540 = vpop.f32.mrf.mxu0
        %v1541 = vadd.f32 %v1098, %v1540
        %v1542 = vpop.f32.mrf.mxu0
        %v1543 = vadd.f32 %v1094, %v1542
        %v1544 = vpop.f32.mrf.mxu0
        %v1545 = vadd.f32 %v1098, %v1544
        %1546 = vmatprep.mubr.bf16.mxu0 0
        %1547 = vmatmul.mubr.bf16.gmra.mxu0 %v1019
        %v1548 = vpop.f32.mrf.mxu0
        %v1549 = vadd.f32 %v1094, %v1548
        %v1550 = vpop.f32.mrf.mxu0
        %v1551 = vadd.f32 %v1098, %v1550
        %v1552 = vpop.f32.mrf.mxu0
        %v1553 = vadd.f32 %v1094, %v1552
        %v1554 = vpop.f32.mrf.mxu0
        %v1555 = vadd.f32 %v1098, %v1554
        %1556 = vmatprep.mubr.bf16.mxu0 0
        %1557 = vmatmul.mubr.bf16.gmra.mxu0 %v1020
        %v1558 = vpop.f32.mrf.mxu0
        %v1559 = vadd.f32 %v1094, %v1558
        %v1560 = vpop.f32.mrf.mxu0
        %v1561 = vadd.f32 %v1098, %v1560
        %v1562 = vpop.f32.mrf.mxu0
        %v1563 = vadd.f32 %v1094, %v1562
        %v1564 = vpop.f32.mrf.mxu0
        %v1565 = vadd.f32 %v1098, %v1564
        %1566 = vmatprep.mubr.bf16.mxu0 0
        %1567 = vmatmul.mubr.bf16.gmra.mxu0 %v1021
        %v1568 = vpop.f32.mrf.mxu0
        %v1569 = vadd.f32 %v1094, %v1568
        %v1570 = vpop.f32.mrf.mxu0
        %v1571 = vadd.f32 %v1098, %v1570
        %v1572 = vpop.f32.mrf.mxu0
        %v1573 = vadd.f32 %v1094, %v1572
        %v1574 = vpop.f32.mrf.mxu0
        %v1575 = vadd.f32 %v1098, %v1574
        %1576 = vmatprep.mubr.bf16.mxu0 0
        %1577 = vmatmul.mubr.bf16.gmra.mxu0 %v1022
        %v1578 = vpop.f32.mrf.mxu0
        %v1579 = vadd.f32 %v1094, %v1578
        %v1580 = vpop.f32.mrf.mxu0
        %v1581 = vadd.f32 %v1098, %v1580
        %v1582 = vpop.f32.mrf.mxu0
        %v1583 = vadd.f32 %v1094, %v1582
        %v1584 = vpop.f32.mrf.mxu0
        %v1585 = vadd.f32 %v1098, %v1584
        %1586 = vmatprep.mubr.bf16.mxu0 0
        %1587 = vmatmul.mubr.bf16.gmra.mxu0 %v1023
        %v1588 = vpop.f32.mrf.mxu0
        %v1589 = vadd.f32 %v1094, %v1588
        %v1590 = vpop.f32.mrf.mxu0
        %v1591 = vadd.f32 %v1098, %v1590
        %v1592 = vpop.f32.mrf.mxu0
        %v1593 = vadd.f32 %v1094, %v1592
        %v1594 = vpop.f32.mrf.mxu0
        %v1595 = vadd.f32 %v1098, %v1594
        %1596 = vmatprep.mubr.bf16.mxu0 0
        %1597 = vmatmul.mubr.bf16.gmra.mxu0 %v1024
        %v1598 = vpop.f32.mrf.mxu0
        %v1599 = vadd.f32 %v1094, %v1598
        %v1600 = vpop.f32.mrf.mxu0
        %v1601 = vadd.f32 %v1098, %v1600
        %v1602 = vpop.f32.mrf.mxu0
        %v1603 = vadd.f32 %v1094, %v1602
        %v1604 = vpop.f32.mrf.mxu0
        %v1605 = vadd.f32 %v1098, %v1604
        %1606 = vdwg.mxu0
        %1607 = vmatprep.subr.bf16.mxu0 %v1354
        %1608 = vmatpush1.bf16.msra.mxu0 %v1353
        %1609 = vmatprep.subr.bf16.mxu0 %v1347
        %1610 = vmatpush1.bf16.msra.mxu0 %v1346
        %1611 = vmatprep.subr.bf16.mxu0 %v1340
        %1612 = vmatpush1.bf16.msra.mxu0 %v1339
        %1613 = vmatprep.subr.bf16.mxu0 %v1333
        %1614 = vmatpush1.bf16.msra.mxu0 %v1332
        %1615 = vmatprep.subr.bf16.mxu0 %v1326
        %1616 = vmatpush1.bf16.msra.mxu0 %v1325
        %1617 = vmatprep.subr.bf16.mxu0 %v1319
        %1618 = vmatpush1.bf16.msra.mxu0 %v1318
        %1619 = vmatprep.subr.bf16.mxu0 %v1312
        %1620 = vmatpush1.bf16.msra.mxu0 %v1311
        %1621 = vmatprep.subr.bf16.mxu0 %v1305
        %1622 = vmatpush1.bf16.msra.mxu0 %v1304
        %1623 = vmatprep.subr.bf16.mxu0 0
        %1624 = vmatpush2.bf16.msra.mxu0 0
        %1625 = vmatprep.subr.bf16.mxu0 0
        %1626 = vmatpush2.bf16.msra.mxu0 0
        %1627 = vmatprep.subr.bf16.mxu0 0
        %1628 = vmatpush2.bf16.msra.mxu0 0
        %1629 = vmatprep.subr.bf16.mxu0 0
        %1630 = vmatpush2.bf16.msra.mxu0 0
        %1631 = vmatprep.subr.bf16.mxu0 0
        %1632 = vmatpush2.bf16.msra.mxu0 0
        %1633 = vmatprep.subr.bf16.mxu0 0
        %1634 = vmatpush2.bf16.msra.mxu0 0
        %1635 = vmatprep.subr.bf16.mxu0 0
        %1636 = vmatpush2.bf16.msra.mxu0 0
        %1637 = vmatprep.subr.bf16.mxu0 0
        %1638 = vmatpush2.bf16.msra.mxu0 0
        %1639 = vmatprep.mubr.bf16.mxu0 0
        %1640 = vmatmul.mubr.bf16.gmra.mxu0 %v1009
        %v1641 = vpop.f32.mrf.mxu0
        %v1642 = vadd.f32 %v1102, %v1641
        %v1643 = vpop.f32.mrf.mxu0
        %v1644 = vadd.f32 %v1106, %v1643
        %v1645 = vpop.f32.mrf.mxu0
        %v1646 = vadd.f32 %v1102, %v1645
        %v1647 = vpop.f32.mrf.mxu0
        %v1648 = vadd.f32 %v1106, %v1647
        %1649 = vmatprep.mubr.bf16.mxu0 0
        %1650 = vmatmul.mubr.bf16.gmra.mxu0 %v1010
        %v1651 = vpop.f32.mrf.mxu0
        %v1652 = vadd.f32 %v1102, %v1651
        %v1653 = vpop.f32.mrf.mxu0
        %v1654 = vadd.f32 %v1106, %v1653
        %v1655 = vpop.f32.mrf.mxu0
        %v1656 = vadd.f32 %v1102, %v1655
        %v1657 = vpop.f32.mrf.mxu0
        %v1658 = vadd.f32 %v1106, %v1657
        %1659 = vmatprep.mubr.bf16.mxu0 0
        %1660 = vmatmul.mubr.bf16.gmra.mxu0 %v1011
        %v1661 = vpop.f32.mrf.mxu0
        %v1662 = vadd.f32 %v1102, %v1661
        %v1663 = vpop.f32.mrf.mxu0
        %v1664 = vadd.f32 %v1106, %v1663
        %v1665 = vpop.f32.mrf.mxu0
        %v1666 = vadd.f32 %v1102, %v1665
        %v1667 = vpop.f32.mrf.mxu0
        %v1668 = vadd.f32 %v1106, %v1667
        %1669 = vmatprep.mubr.bf16.mxu0 0
        %1670 = vmatmul.mubr.bf16.gmra.mxu0 %v1012
        %v1671 = vpop.f32.mrf.mxu0
        %v1672 = vadd.f32 %v1102, %v1671
        %v1673 = vpop.f32.mrf.mxu0
        %v1674 = vadd.f32 %v1106, %v1673
        %v1675 = vpop.f32.mrf.mxu0
        %v1676 = vadd.f32 %v1102, %v1675
        %v1677 = vpop.f32.mrf.mxu0
        %v1678 = vadd.f32 %v1106, %v1677
        %1679 = vmatprep.mubr.bf16.mxu0 0
        %1680 = vmatmul.mubr.bf16.gmra.mxu0 %v1013
        %v1681 = vpop.f32.mrf.mxu0
        %v1682 = vadd.f32 %v1102, %v1681
        %v1683 = vpop.f32.mrf.mxu0
        %v1684 = vadd.f32 %v1106, %v1683
        %v1685 = vpop.f32.mrf.mxu0
        %v1686 = vadd.f32 %v1102, %v1685
        %v1687 = vpop.f32.mrf.mxu0
        %v1688 = vadd.f32 %v1106, %v1687
        %1689 = vmatprep.mubr.bf16.mxu0 0
        %1690 = vmatmul.mubr.bf16.gmra.mxu0 %v1014
        %v1691 = vpop.f32.mrf.mxu0
        %v1692 = vadd.f32 %v1102, %v1691
        %v1693 = vpop.f32.mrf.mxu0
        %v1694 = vadd.f32 %v1106, %v1693
        %v1695 = vpop.f32.mrf.mxu0
        %v1696 = vadd.f32 %v1102, %v1695
        %v1697 = vpop.f32.mrf.mxu0
        %v1698 = vadd.f32 %v1106, %v1697
        %1699 = vmatprep.mubr.bf16.mxu0 0
        %1700 = vmatmul.mubr.bf16.gmra.mxu0 %v1015
        %v1701 = vpop.f32.mrf.mxu0
        %v1702 = vadd.f32 %v1102, %v1701
        %v1703 = vpop.f32.mrf.mxu0
        %v1704 = vadd.f32 %v1106, %v1703
        %v1705 = vpop.f32.mrf.mxu0
        %v1706 = vadd.f32 %v1102, %v1705
        %v1707 = vpop.f32.mrf.mxu0
        %v1708 = vadd.f32 %v1106, %v1707
        %1709 = vmatprep.mubr.bf16.mxu0 0
        %1710 = vmatmul.mubr.bf16.gmra.mxu0 %v1016
        %v1711 = vpop.f32.mrf.mxu0
        %v1712 = vadd.f32 %v1102, %v1711
        %v1713 = vpop.f32.mrf.mxu0
        %v1714 = vadd.f32 %v1106, %v1713
        %v1715 = vpop.f32.mrf.mxu0
        %v1716 = vadd.f32 %v1102, %v1715
        %v1717 = vpop.f32.mrf.mxu0
        %v1718 = vadd.f32 %v1106, %v1717
        %1719 = vmatprep.mubr.bf16.mxu0 0
        %1720 = vmatmul.mubr.bf16.gmra.mxu0 %v1017
        %v1721 = vpop.f32.mrf.mxu0
        %v1722 = vadd.f32 %v1102, %v1721
        %v1723 = vpop.f32.mrf.mxu0
        %v1724 = vadd.f32 %v1106, %v1723
        %v1725 = vpop.f32.mrf.mxu0
        %v1726 = vadd.f32 %v1102, %v1725
        %v1727 = vpop.f32.mrf.mxu0
        %v1728 = vadd.f32 %v1106, %v1727
        %1729 = vmatprep.mubr.bf16.mxu0 0
        %1730 = vmatmul.mubr.bf16.gmra.mxu0 %v1018
        %v1731 = vpop.f32.mrf.mxu0
        %v1732 = vadd.f32 %v1102, %v1731
        %v1733 = vpop.f32.mrf.mxu0
        %v1734 = vadd.f32 %v1106, %v1733
        %v1735 = vpop.f32.mrf.mxu0
        %v1736 = vadd.f32 %v1102, %v1735
        %v1737 = vpop.f32.mrf.mxu0
        %v1738 = vadd.f32 %v1106, %v1737
        %1739 = vmatprep.mubr.bf16.mxu0 0
        %1740 = vmatmul.mubr.bf16.gmra.mxu0 %v1019
        %v1741 = vpop.f32.mrf.mxu0
        %v1742 = vadd.f32 %v1102, %v1741
        %v1743 = vpop.f32.mrf.mxu0
        %v1744 = vadd.f32 %v1106, %v1743
        %v1745 = vpop.f32.mrf.mxu0
        %v1746 = vadd.f32 %v1102, %v1745
        %v1747 = vpop.f32.mrf.mxu0
        %v1748 = vadd.f32 %v1106, %v1747
        %1749 = vmatprep.mubr.bf16.mxu0 0
        %1750 = vmatmul.mubr.bf16.gmra.mxu0 %v1020
        %v1751 = vpop.f32.mrf.mxu0
        %v1752 = vadd.f32 %v1102, %v1751
        %v1753 = vpop.f32.mrf.mxu0
        %v1754 = vadd.f32 %v1106, %v1753
        %v1755 = vpop.f32.mrf.mxu0
        %v1756 = vadd.f32 %v1102, %v1755
        %v1757 = vpop.f32.mrf.mxu0
        %v1758 = vadd.f32 %v1106, %v1757
        %1759 = vmatprep.mubr.bf16.mxu0 0
        %1760 = vmatmul.mubr.bf16.gmra.mxu0 %v1021
        %v1761 = vpop.f32.mrf.mxu0
        %v1762 = vadd.f32 %v1102, %v1761
        %v1763 = vpop.f32.mrf.mxu0
        %v1764 = vadd.f32 %v1106, %v1763
        %v1765 = vpop.f32.mrf.mxu0
        %v1766 = vadd.f32 %v1102, %v1765
        %v1767 = vpop.f32.mrf.mxu0
        %v1768 = vadd.f32 %v1106, %v1767
        %1769 = vmatprep.mubr.bf16.mxu0 0
        %1770 = vmatmul.mubr.bf16.gmra.mxu0 %v1022
        %v1771 = vpop.f32.mrf.mxu0
        %v1772 = vadd.f32 %v1102, %v1771
        %v1773 = vpop.f32.mrf.mxu0
        %v1774 = vadd.f32 %v1106, %v1773
        %v1775 = vpop.f32.mrf.mxu0
        %v1776 = vadd.f32 %v1102, %v1775
        %v1777 = vpop.f32.mrf.mxu0
        %v1778 = vadd.f32 %v1106, %v1777
        %1779 = vmatprep.mubr.bf16.mxu0 0
        %1780 = vmatmul.mubr.bf16.gmra.mxu0 %v1023
        %v1781 = vpop.f32.mrf.mxu0
        %v1782 = vadd.f32 %v1102, %v1781
        %v1783 = vpop.f32.mrf.mxu0
        %v1784 = vadd.f32 %v1106, %v1783
        %v1785 = vpop.f32.mrf.mxu0
        %v1786 = vadd.f32 %v1102, %v1785
        %v1787 = vpop.f32.mrf.mxu0
        %v1788 = vadd.f32 %v1106, %v1787
        %1789 = vmatprep.mubr.bf16.mxu0 0
        %1790 = vmatmul.mubr.bf16.gmra.mxu0 %v1024
        %v1791 = vpop.f32.mrf.mxu0
        %v1792 = vadd.f32 %v1102, %v1791
        %v1793 = vpop.f32.mrf.mxu0
        %v1794 = vadd.f32 %v1106, %v1793
        %v1795 = vpop.f32.mrf.mxu0
        %v1796 = vadd.f32 %v1102, %v1795
        %v1797 = vpop.f32.mrf.mxu0
        %v1798 = vadd.f32 %v1106, %v1797
        %1799 = vdwg.mxu0
        %1800 = vmatprep.subr.bf16.mxu0 %v1356
        %1801 = vmatpush1.bf16.msra.mxu0 %v1355
        %1802 = vmatprep.subr.bf16.mxu0 %v1349
        %1803 = vmatpush1.bf16.msra.mxu0 %v1348
        %1804 = vmatprep.subr.bf16.mxu0 %v1342
        %1805 = vmatpush1.bf16.msra.mxu0 %v1341
        %1806 = vmatprep.subr.bf16.mxu0 %v1335
        %1807 = vmatpush1.bf16.msra.mxu0 %v1334
        %1808 = vmatprep.subr.bf16.mxu0 %v1328
        %1809 = vmatpush1.bf16.msra.mxu0 %v1327
        %1810 = vmatprep.subr.bf16.mxu0 %v1321
        %1811 = vmatpush1.bf16.msra.mxu0 %v1320
        %1812 = vmatprep.subr.bf16.mxu0 %v1314
        %1813 = vmatpush1.bf16.msra.mxu0 %v1313
        %1814 = vmatprep.subr.bf16.mxu0 %v1307
        %1815 = vmatpush1.bf16.msra.mxu0 %v1306
        %1816 = vmatprep.subr.bf16.mxu0 0
        %1817 = vmatpush2.bf16.msra.mxu0 0
        %1818 = vmatprep.subr.bf16.mxu0 0
        %1819 = vmatpush2.bf16.msra.mxu0 0
        %1820 = vmatprep.subr.bf16.mxu0 0
        %1821 = vmatpush2.bf16.msra.mxu0 0
        %1822 = vmatprep.subr.bf16.mxu0 0
        %1823 = vmatpush2.bf16.msra.mxu0 0
        %1824 = vmatprep.subr.bf16.mxu0 0
        %1825 = vmatpush2.bf16.msra.mxu0 0
        %1826 = vmatprep.subr.bf16.mxu0 0
        %1827 = vmatpush2.bf16.msra.mxu0 0
        %1828 = vmatprep.subr.bf16.mxu0 0
        %1829 = vmatpush2.bf16.msra.mxu0 0
        %1830 = vmatprep.subr.bf16.mxu0 0
        %1831 = vmatpush2.bf16.msra.mxu0 0
        %1832 = vmatprep.mubr.bf16.mxu0 0
        %1833 = vmatmul.mubr.bf16.gmra.mxu0 %v1009
        %v1834 = vpop.f32.mrf.mxu0
        %v1835 = vadd.f32 %v1110, %v1834
        %v1836 = vpop.f32.mrf.mxu0
        %v1837 = vadd.f32 %v1114, %v1836
        %v1838 = vpop.f32.mrf.mxu0
        %v1839 = vadd.f32 %v1110, %v1838
        %v1840 = vpop.f32.mrf.mxu0
        %v1841 = vadd.f32 %v1114, %v1840
        %1842 = vmatprep.mubr.bf16.mxu0 0
        %1843 = vmatmul.mubr.bf16.gmra.mxu0 %v1010
        %v1844 = vpop.f32.mrf.mxu0
        %v1845 = vadd.f32 %v1110, %v1844
        %v1846 = vpop.f32.mrf.mxu0
        %v1847 = vadd.f32 %v1114, %v1846
        %v1848 = vpop.f32.mrf.mxu0
        %v1849 = vadd.f32 %v1110, %v1848
        %v1850 = vpop.f32.mrf.mxu0
        %v1851 = vadd.f32 %v1114, %v1850
        %1852 = vmatprep.mubr.bf16.mxu0 0
        %1853 = vmatmul.mubr.bf16.gmra.mxu0 %v1011
        %v1854 = vpop.f32.mrf.mxu0
        %v1855 = vadd.f32 %v1110, %v1854
        %v1856 = vpop.f32.mrf.mxu0
        %v1857 = vadd.f32 %v1114, %v1856
        %v1858 = vpop.f32.mrf.mxu0
        %v1859 = vadd.f32 %v1110, %v1858
        %v1860 = vpop.f32.mrf.mxu0
        %v1861 = vadd.f32 %v1114, %v1860
        %1862 = vmatprep.mubr.bf16.mxu0 0
        %1863 = vmatmul.mubr.bf16.gmra.mxu0 %v1012
        %v1864 = vpop.f32.mrf.mxu0
        %v1865 = vadd.f32 %v1110, %v1864
        %v1866 = vpop.f32.mrf.mxu0
        %v1867 = vadd.f32 %v1114, %v1866
        %v1868 = vpop.f32.mrf.mxu0
        %v1869 = vadd.f32 %v1110, %v1868
        %v1870 = vpop.f32.mrf.mxu0
        %v1871 = vadd.f32 %v1114, %v1870
        %1872 = vmatprep.mubr.bf16.mxu0 0
        %1873 = vmatmul.mubr.bf16.gmra.mxu0 %v1013
        %v1874 = vpop.f32.mrf.mxu0
        %v1875 = vadd.f32 %v1110, %v1874
        %v1876 = vpop.f32.mrf.mxu0
        %v1877 = vadd.f32 %v1114, %v1876
        %v1878 = vpop.f32.mrf.mxu0
        %v1879 = vadd.f32 %v1110, %v1878
        %v1880 = vpop.f32.mrf.mxu0
        %v1881 = vadd.f32 %v1114, %v1880
        %1882 = vmatprep.mubr.bf16.mxu0 0
        %1883 = vmatmul.mubr.bf16.gmra.mxu0 %v1014
        %v1884 = vpop.f32.mrf.mxu0
        %v1885 = vadd.f32 %v1110, %v1884
        %v1886 = vpop.f32.mrf.mxu0
        %v1887 = vadd.f32 %v1114, %v1886
        %v1888 = vpop.f32.mrf.mxu0
        %v1889 = vadd.f32 %v1110, %v1888
        %v1890 = vpop.f32.mrf.mxu0
        %v1891 = vadd.f32 %v1114, %v1890
        %1892 = vmatprep.mubr.bf16.mxu0 0
        %1893 = vmatmul.mubr.bf16.gmra.mxu0 %v1015
        %v1894 = vpop.f32.mrf.mxu0
        %v1895 = vadd.f32 %v1110, %v1894
        %v1896 = vpop.f32.mrf.mxu0
        %v1897 = vadd.f32 %v1114, %v1896
        %v1898 = vpop.f32.mrf.mxu0
        %v1899 = vadd.f32 %v1110, %v1898
        %v1900 = vpop.f32.mrf.mxu0
        %v1901 = vadd.f32 %v1114, %v1900
        %1902 = vmatprep.mubr.bf16.mxu0 0
        %1903 = vmatmul.mubr.bf16.gmra.mxu0 %v1016
        %v1904 = vpop.f32.mrf.mxu0
        %v1905 = vadd.f32 %v1110, %v1904
        %v1906 = vpop.f32.mrf.mxu0
        %v1907 = vadd.f32 %v1114, %v1906
        %v1908 = vpop.f32.mrf.mxu0
        %v1909 = vadd.f32 %v1110, %v1908
        %v1910 = vpop.f32.mrf.mxu0
        %v1911 = vadd.f32 %v1114, %v1910
        %1912 = vmatprep.mubr.bf16.mxu0 0
        %1913 = vmatmul.mubr.bf16.gmra.mxu0 %v1017
        %v1914 = vpop.f32.mrf.mxu0
        %v1915 = vadd.f32 %v1110, %v1914
        %v1916 = vpop.f32.mrf.mxu0
        %v1917 = vadd.f32 %v1114, %v1916
        %v1918 = vpop.f32.mrf.mxu0
        %v1919 = vadd.f32 %v1110, %v1918
        %v1920 = vpop.f32.mrf.mxu0
        %v1921 = vadd.f32 %v1114, %v1920
        %1922 = vmatprep.mubr.bf16.mxu0 0
        %1923 = vmatmul.mubr.bf16.gmra.mxu0 %v1018
        %v1924 = vpop.f32.mrf.mxu0
        %v1925 = vadd.f32 %v1110, %v1924
        %v1926 = vpop.f32.mrf.mxu0
        %v1927 = vadd.f32 %v1114, %v1926
        %v1928 = vpop.f32.mrf.mxu0
        %v1929 = vadd.f32 %v1110, %v1928
        %v1930 = vpop.f32.mrf.mxu0
        %v1931 = vadd.f32 %v1114, %v1930
        %1932 = vmatprep.mubr.bf16.mxu0 0
        %1933 = vmatmul.mubr.bf16.gmra.mxu0 %v1019
        %v1934 = vpop.f32.mrf.mxu0
        %v1935 = vadd.f32 %v1110, %v1934
        %v1936 = vpop.f32.mrf.mxu0
        %v1937 = vadd.f32 %v1114, %v1936
        %v1938 = vpop.f32.mrf.mxu0
        %v1939 = vadd.f32 %v1110, %v1938
        %v1940 = vpop.f32.mrf.mxu0
        %v1941 = vadd.f32 %v1114, %v1940
        %1942 = vmatprep.mubr.bf16.mxu0 0
        %1943 = vmatmul.mubr.bf16.gmra.mxu0 %v1020
        %v1944 = vpop.f32.mrf.mxu0
        %v1945 = vadd.f32 %v1110, %v1944
        %v1946 = vpop.f32.mrf.mxu0
        %v1947 = vadd.f32 %v1114, %v1946
        %v1948 = vpop.f32.mrf.mxu0
        %v1949 = vadd.f32 %v1110, %v1948
        %v1950 = vpop.f32.mrf.mxu0
        %v1951 = vadd.f32 %v1114, %v1950
        %1952 = vmatprep.mubr.bf16.mxu0 0
        %1953 = vmatmul.mubr.bf16.gmra.mxu0 %v1021
        %v1954 = vpop.f32.mrf.mxu0
        %v1955 = vadd.f32 %v1110, %v1954
        %v1956 = vpop.f32.mrf.mxu0
        %v1957 = vadd.f32 %v1114, %v1956
        %v1958 = vpop.f32.mrf.mxu0
        %v1959 = vadd.f32 %v1110, %v1958
        %v1960 = vpop.f32.mrf.mxu0
        %v1961 = vadd.f32 %v1114, %v1960
        %1962 = vmatprep.mubr.bf16.mxu0 0
        %1963 = vmatmul.mubr.bf16.gmra.mxu0 %v1022
        %v1964 = vpop.f32.mrf.mxu0
        %v1965 = vadd.f32 %v1110, %v1964
        %v1966 = vpop.f32.mrf.mxu0
        %v1967 = vadd.f32 %v1114, %v1966
        %v1968 = vpop.f32.mrf.mxu0
        %v1969 = vadd.f32 %v1110, %v1968
        %v1970 = vpop.f32.mrf.mxu0
        %v1971 = vadd.f32 %v1114, %v1970
        %1972 = vmatprep.mubr.bf16.mxu0 0
        %1973 = vmatmul.mubr.bf16.gmra.mxu0 %v1023
        %v1974 = vpop.f32.mrf.mxu0
        %v1975 = vadd.f32 %v1110, %v1974
        %v1976 = vpop.f32.mrf.mxu0
        %v1977 = vadd.f32 %v1114, %v1976
        %v1978 = vpop.f32.mrf.mxu0
        %v1979 = vadd.f32 %v1110, %v1978
        %v1980 = vpop.f32.mrf.mxu0
        %v1981 = vadd.f32 %v1114, %v1980
        %1982 = vmatprep.mubr.bf16.mxu0 0
        %1983 = vmatmul.mubr.bf16.gmra.mxu0 %v1024
        %v1984 = vpop.f32.mrf.mxu0
        %v1985 = vadd.f32 %v1110, %v1984
        %v1986 = vpop.f32.mrf.mxu0
        %v1987 = vadd.f32 %v1114, %v1986
        %v1988 = vpop.f32.mrf.mxu0
        %v1989 = vadd.f32 %v1110, %v1988
        %v1990 = vpop.f32.mrf.mxu0
        %v1991 = vadd.f32 %v1114, %v1990
        %1992 = vdwg.mxu0
        %1993 = vmatprep.subr.bf16.mxu0 0
        %1994 = vmatpush1.bf16.msra.mxu0 %v1357
        %1995 = vmatprep.subr.bf16.mxu0 0
        %1996 = vmatpush1.bf16.msra.mxu0 %v1350
        %1997 = vmatprep.subr.bf16.mxu0 0
        %1998 = vmatpush1.bf16.msra.mxu0 %v1343
        %1999 = vmatprep.subr.bf16.mxu0 0
        %2000 = vmatpush1.bf16.msra.mxu0 %v1336
        %2001 = vmatprep.subr.bf16.mxu0 0
        %2002 = vmatpush1.bf16.msra.mxu0 %v1329
        %2003 = vmatprep.subr.bf16.mxu0 0
        %2004 = vmatpush1.bf16.msra.mxu0 %v1322
        %2005 = vmatprep.subr.bf16.mxu0 0
        %2006 = vmatpush1.bf16.msra.mxu0 %v1315
        %2007 = vmatprep.subr.bf16.mxu0 0
        %2008 = vmatpush1.bf16.msra.mxu0 %v1308
        %2009 = vmatprep.subr.bf16.mxu0 0
        %2010 = vmatpush2.bf16.msra.mxu0 0
        %2011 = vmatprep.subr.bf16.mxu0 0
        %2012 = vmatpush2.bf16.msra.mxu0 0
        %2013 = vmatprep.subr.bf16.mxu0 0
        %2014 = vmatpush2.bf16.msra.mxu0 0
        %2015 = vmatprep.subr.bf16.mxu0 0
        %2016 = vmatpush2.bf16.msra.mxu0 0
        %2017 = vmatprep.subr.bf16.mxu0 0
        %2018 = vmatpush2.bf16.msra.mxu0 0
        %2019 = vmatprep.subr.bf16.mxu0 0
        %2020 = vmatpush2.bf16.msra.mxu0 0
        %2021 = vmatprep.subr.bf16.mxu0 0
        %2022 = vmatpush2.bf16.msra.mxu0 0
        %2023 = vmatprep.subr.bf16.mxu0 0
        %2024 = vmatpush2.bf16.msra.mxu0 0
        %2025 = vmatprep.mubr.bf16.mxu0 0
        %2026 = vmatmul.mubr.bf16.gmra.mxu0 %v1009
        %v2027 = vpop.f32.mrf.mxu0
        %v2028 = vadd.f32 %v1118, %v2027
        %v2029 = vpop.f32.mrf.mxu0
        %v2030 = vpop.f32.mrf.mxu0
        %v2031 = vadd.f32 %v1118, %v2030
        %v2032 = vpop.f32.mrf.mxu0
        %2033 = vmatprep.mubr.bf16.mxu0 0
        %2034 = vmatmul.mubr.bf16.gmra.mxu0 %v1010
        %v2035 = vpop.f32.mrf.mxu0
        %v2036 = vadd.f32 %v1118, %v2035
        %v2037 = vpop.f32.mrf.mxu0
        %v2038 = vpop.f32.mrf.mxu0
        %v2039 = vadd.f32 %v1118, %v2038
        %v2040 = vpop.f32.mrf.mxu0
        %2041 = vmatprep.mubr.bf16.mxu0 0
        %2042 = vmatmul.mubr.bf16.gmra.mxu0 %v1011
        %v2043 = vpop.f32.mrf.mxu0
        %v2044 = vadd.f32 %v1118, %v2043
        %v2045 = vpop.f32.mrf.mxu0
        %v2046 = vpop.f32.mrf.mxu0
        %v2047 = vadd.f32 %v1118, %v2046
        %v2048 = vpop.f32.mrf.mxu0
        %2049 = vmatprep.mubr.bf16.mxu0 0
        %2050 = vmatmul.mubr.bf16.gmra.mxu0 %v1012
        %v2051 = vpop.f32.mrf.mxu0
        %v2052 = vadd.f32 %v1118, %v2051
        %v2053 = vpop.f32.mrf.mxu0
        %v2054 = vpop.f32.mrf.mxu0
        %v2055 = vadd.f32 %v1118, %v2054
        %v2056 = vpop.f32.mrf.mxu0
        %2057 = vmatprep.mubr.bf16.mxu0 0
        %2058 = vmatmul.mubr.bf16.gmra.mxu0 %v1013
        %v2059 = vpop.f32.mrf.mxu0
        %v2060 = vadd.f32 %v1118, %v2059
        %v2061 = vpop.f32.mrf.mxu0
        %v2062 = vpop.f32.mrf.mxu0
        %v2063 = vadd.f32 %v1118, %v2062
        %v2064 = vpop.f32.mrf.mxu0
        %2065 = vmatprep.mubr.bf16.mxu0 0
        %2066 = vmatmul.mubr.bf16.gmra.mxu0 %v1014
        %v2067 = vpop.f32.mrf.mxu0
        %v2068 = vadd.f32 %v1118, %v2067
        %v2069 = vpop.f32.mrf.mxu0
        %v2070 = vpop.f32.mrf.mxu0
        %v2071 = vadd.f32 %v1118, %v2070
        %v2072 = vpop.f32.mrf.mxu0
        %2073 = vmatprep.mubr.bf16.mxu0 0
        %2074 = vmatmul.mubr.bf16.gmra.mxu0 %v1015
        %v2075 = vpop.f32.mrf.mxu0
        %v2076 = vadd.f32 %v1118, %v2075
        %v2077 = vpop.f32.mrf.mxu0
        %v2078 = vpop.f32.mrf.mxu0
        %v2079 = vadd.f32 %v1118, %v2078
        %v2080 = vpop.f32.mrf.mxu0
        %2081 = vmatprep.mubr.bf16.mxu0 0
        %2082 = vmatmul.mubr.bf16.gmra.mxu0 %v1016
        %v2083 = vpop.f32.mrf.mxu0
        %v2084 = vadd.f32 %v1118, %v2083
        %v2085 = vpop.f32.mrf.mxu0
        %v2086 = vpop.f32.mrf.mxu0
        %v2087 = vadd.f32 %v1118, %v2086
        %v2088 = vpop.f32.mrf.mxu0
        %2089 = vmatprep.mubr.bf16.mxu0 0
        %2090 = vmatmul.mubr.bf16.gmra.mxu0 %v1017
        %v2091 = vpop.f32.mrf.mxu0
        %v2092 = vadd.f32 %v1118, %v2091
        %v2093 = vpop.f32.mrf.mxu0
        %v2094 = vpop.f32.mrf.mxu0
        %v2095 = vadd.f32 %v1118, %v2094
        %v2096 = vpop.f32.mrf.mxu0
        %2097 = vmatprep.mubr.bf16.mxu0 0
        %2098 = vmatmul.mubr.bf16.gmra.mxu0 %v1018
        %v2099 = vpop.f32.mrf.mxu0
        %v2100 = vadd.f32 %v1118, %v2099
        %v2101 = vpop.f32.mrf.mxu0
        %v2102 = vpop.f32.mrf.mxu0
        %v2103 = vadd.f32 %v1118, %v2102
        %v2104 = vpop.f32.mrf.mxu0
        %2105 = vmatprep.mubr.bf16.mxu0 0
        %2106 = vmatmul.mubr.bf16.gmra.mxu0 %v1019
        %v2107 = vpop.f32.mrf.mxu0
        %v2108 = vadd.f32 %v1118, %v2107
        %v2109 = vpop.f32.mrf.mxu0
        %v2110 = vpop.f32.mrf.mxu0
        %v2111 = vadd.f32 %v1118, %v2110
        %v2112 = vpop.f32.mrf.mxu0
        %2113 = vmatprep.mubr.bf16.mxu0 0
        %2114 = vmatmul.mubr.bf16.gmra.mxu0 %v1020
        %v2115 = vpop.f32.mrf.mxu0
        %v2116 = vadd.f32 %v1118, %v2115
        %v2117 = vpop.f32.mrf.mxu0
        %v2118 = vpop.f32.mrf.mxu0
        %v2119 = vadd.f32 %v1118, %v2118
        %v2120 = vpop.f32.mrf.mxu0
        %2121 = vmatprep.mubr.bf16.mxu0 0
        %2122 = vmatmul.mubr.bf16.gmra.mxu0 %v1021
        %v2123 = vpop.f32.mrf.mxu0
        %v2124 = vadd.f32 %v1118, %v2123
        %v2125 = vpop.f32.mrf.mxu0
        %v2126 = vpop.f32.mrf.mxu0
        %v2127 = vadd.f32 %v1118, %v2126
        %v2128 = vpop.f32.mrf.mxu0
        %2129 = vmatprep.mubr.bf16.mxu0 0
        %2130 = vmatmul.mubr.bf16.gmra.mxu0 %v1022
        %v2131 = vpop.f32.mrf.mxu0
        %v2132 = vadd.f32 %v1118, %v2131
        %v2133 = vpop.f32.mrf.mxu0
        %v2134 = vpop.f32.mrf.mxu0
        %v2135 = vadd.f32 %v1118, %v2134
        %v2136 = vpop.f32.mrf.mxu0
        %2137 = vmatprep.mubr.bf16.mxu0 0
        %2138 = vmatmul.mubr.bf16.gmra.mxu0 %v1023
        %v2139 = vpop.f32.mrf.mxu0
        %v2140 = vadd.f32 %v1118, %v2139
        %v2141 = vpop.f32.mrf.mxu0
        %v2142 = vpop.f32.mrf.mxu0
        %v2143 = vadd.f32 %v1118, %v2142
        %v2144 = vpop.f32.mrf.mxu0
        %2145 = vmatprep.mubr.bf16.mxu0 0
        %2146 = vmatmul.mubr.bf16.gmra.mxu0 %v1024
        %v2147 = vpop.f32.mrf.mxu0
        %v2148 = vadd.f32 %v1118, %v2147
        %v2149 = vpop.f32.mrf.mxu0
        %v2150 = vpop.f32.mrf.mxu0
        %v2151 = vadd.f32 %v1118, %v2150
        %v2152 = vpop.f32.mrf.mxu0
        %2153 = vdwg.mxu0
        %v2154 = vsub.f32 0.0, %v1449
        %v2155 = vsub.f32 0.0, %v1451
        %v2156 = vsub.f32 0.0, %v1642
        %v2157 = vsub.f32 0.0, %v1644
        %v2158 = vsub.f32 0.0, %v1835
        %v2159 = vsub.f32 0.0, %v1837
        %v2160 = vsub.f32 0.0, %v2028
        %v2161 = vsub.f32 0.0, %v1453
        %v2162 = vsub.f32 0.0, %v1455
        %v2163 = vsub.f32 0.0, %v1646
        %v2164 = vsub.f32 0.0, %v1648
        %v2165 = vsub.f32 0.0, %v1839
        %v2166 = vsub.f32 0.0, %v1841
        %v2167 = vsub.f32 0.0, %v2031
        %v2168 = vsub.f32 0.0, %v1459
        %v2169 = vsub.f32 0.0, %v1461
        %v2170 = vsub.f32 0.0, %v1652
        %v2171 = vsub.f32 0.0, %v1654
        %v2172 = vsub.f32 0.0, %v1845
        %v2173 = vsub.f32 0.0, %v1847
        %v2174 = vsub.f32 0.0, %v2036
        %v2175 = vsub.f32 0.0, %v1463
        %v2176 = vsub.f32 0.0, %v1465
        %v2177 = vsub.f32 0.0, %v1656
        %v2178 = vsub.f32 0.0, %v1658
        %v2179 = vsub.f32 0.0, %v1849
        %v2180 = vsub.f32 0.0, %v1851
        %v2181 = vsub.f32 0.0, %v2039
        %v2182 = vsub.f32 0.0, %v1469
        %v2183 = vsub.f32 0.0, %v1471
        %v2184 = vsub.f32 0.0, %v1662
        %v2185 = vsub.f32 0.0, %v1664
        %v2186 = vsub.f32 0.0, %v1855
        %v2187 = vsub.f32 0.0, %v1857
        %v2188 = vsub.f32 0.0, %v2044
        %v2189 = vsub.f32 0.0, %v1473
        %v2190 = vsub.f32 0.0, %v1475
        %v2191 = vsub.f32 0.0, %v1666
        %v2192 = vsub.f32 0.0, %v1668
        %v2193 = vsub.f32 0.0, %v1859
        %v2194 = vsub.f32 0.0, %v1861
        %v2195 = vsub.f32 0.0, %v2047
        %v2196 = vsub.f32 0.0, %v1479
        %v2197 = vsub.f32 0.0, %v1481
        %v2198 = vsub.f32 0.0, %v1672
        %v2199 = vsub.f32 0.0, %v1674
        %v2200 = vsub.f32 0.0, %v1865
        %v2201 = vsub.f32 0.0, %v1867
        %v2202 = vsub.f32 0.0, %v2052
        %v2203 = vsub.f32 0.0, %v1483
        %v2204 = vsub.f32 0.0, %v1485
        %v2205 = vsub.f32 0.0, %v1676
        %v2206 = vsub.f32 0.0, %v1678
        %v2207 = vsub.f32 0.0, %v1869
        %v2208 = vsub.f32 0.0, %v1871
        %v2209 = vsub.f32 0.0, %v2055
        %v2210 = vsub.f32 0.0, %v1489
        %v2211 = vsub.f32 0.0, %v1491
        %v2212 = vsub.f32 0.0, %v1682
        %v2213 = vsub.f32 0.0, %v1684
        %v2214 = vsub.f32 0.0, %v1875
        %v2215 = vsub.f32 0.0, %v1877
        %v2216 = vsub.f32 0.0, %v2060
        %v2217 = vsub.f32 0.0, %v1493
        %v2218 = vsub.f32 0.0, %v1495
        %v2219 = vsub.f32 0.0, %v1686
        %v2220 = vsub.f32 0.0, %v1688
        %v2221 = vsub.f32 0.0, %v1879
        %v2222 = vsub.f32 0.0, %v1881
        %v2223 = vsub.f32 0.0, %v2063
        %v2224 = vsub.f32 0.0, %v1499
        %v2225 = vsub.f32 0.0, %v1501
        %v2226 = vsub.f32 0.0, %v1692
        %v2227 = vsub.f32 0.0, %v1694
        %v2228 = vsub.f32 0.0, %v1885
        %v2229 = vsub.f32 0.0, %v1887
        %v2230 = vsub.f32 0.0, %v2068
        %v2231 = vsub.f32 0.0, %v1503
        %v2232 = vsub.f32 0.0, %v1505
        %v2233 = vsub.f32 0.0, %v1696
        %v2234 = vsub.f32 0.0, %v1698
        %v2235 = vsub.f32 0.0, %v1889
        %v2236 = vsub.f32 0.0, %v1891
        %v2237 = vsub.f32 0.0, %v2071
        %v2238 = vsub.f32 0.0, %v1509
        %v2239 = vsub.f32 0.0, %v1511
        %v2240 = vsub.f32 0.0, %v1702
        %v2241 = vsub.f32 0.0, %v1704
        %v2242 = vsub.f32 0.0, %v1895
        %v2243 = vsub.f32 0.0, %v1897
        %v2244 = vsub.f32 0.0, %v2076
        %v2245 = vsub.f32 0.0, %v1513
        %v2246 = vsub.f32 0.0, %v1515
        %v2247 = vsub.f32 0.0, %v1706
        %v2248 = vsub.f32 0.0, %v1708
        %v2249 = vsub.f32 0.0, %v1899
        %v2250 = vsub.f32 0.0, %v1901
        %v2251 = vsub.f32 0.0, %v2079
        %v2252 = vsub.f32 0.0, %v1519
        %v2253 = vsub.f32 0.0, %v1521
        %v2254 = vsub.f32 0.0, %v1712
        %v2255 = vsub.f32 0.0, %v1714
        %v2256 = vsub.f32 0.0, %v1905
        %v2257 = vsub.f32 0.0, %v1907
        %v2258 = vsub.f32 0.0, %v2084
        %v2259 = vsub.f32 0.0, %v1523
        %v2260 = vsub.f32 0.0, %v1525
        %v2261 = vsub.f32 0.0, %v1716
        %v2262 = vsub.f32 0.0, %v1718
        %v2263 = vsub.f32 0.0, %v1909
        %v2264 = vsub.f32 0.0, %v1911
        %v2265 = vsub.f32 0.0, %v2087
        %v2266 = vsub.f32 0.0, %v1529
        %v2267 = vsub.f32 0.0, %v1531
        %v2268 = vsub.f32 0.0, %v1722
        %v2269 = vsub.f32 0.0, %v1724
        %v2270 = vsub.f32 0.0, %v1915
        %v2271 = vsub.f32 0.0, %v1917
        %v2272 = vsub.f32 0.0, %v2092
        %v2273 = vsub.f32 0.0, %v1533
        %v2274 = vsub.f32 0.0, %v1535
        %v2275 = vsub.f32 0.0, %v1726
        %v2276 = vsub.f32 0.0, %v1728
        %v2277 = vsub.f32 0.0, %v1919
        %v2278 = vsub.f32 0.0, %v1921
        %v2279 = vsub.f32 0.0, %v2095
        %v2280 = vsub.f32 0.0, %v1539
        %v2281 = vsub.f32 0.0, %v1541
        %v2282 = vsub.f32 0.0, %v1732
        %v2283 = vsub.f32 0.0, %v1734
        %v2284 = vsub.f32 0.0, %v1925
        %v2285 = vsub.f32 0.0, %v1927
        %v2286 = vsub.f32 0.0, %v2100
        %v2287 = vsub.f32 0.0, %v1543
        %v2288 = vsub.f32 0.0, %v1545
        %v2289 = vsub.f32 0.0, %v1736
        %v2290 = vsub.f32 0.0, %v1738
        %v2291 = vsub.f32 0.0, %v1929
        %v2292 = vsub.f32 0.0, %v1931
        %v2293 = vsub.f32 0.0, %v2103
        %v2294 = vsub.f32 0.0, %v1549
        %v2295 = vsub.f32 0.0, %v1551
        %v2296 = vsub.f32 0.0, %v1742
        %v2297 = vsub.f32 0.0, %v1744
        %v2298 = vsub.f32 0.0, %v1935
        %v2299 = vsub.f32 0.0, %v1937
        %v2300 = vsub.f32 0.0, %v2108
        %v2301 = vsub.f32 0.0, %v1553
        %v2302 = vsub.f32 0.0, %v1555
        %v2303 = vsub.f32 0.0, %v1746
        %v2304 = vsub.f32 0.0, %v1748
        %v2305 = vsub.f32 0.0, %v1939
        %v2306 = vsub.f32 0.0, %v1941
        %v2307 = vsub.f32 0.0, %v2111
        %v2308 = vsub.f32 0.0, %v1559
        %v2309 = vsub.f32 0.0, %v1561
        %v2310 = vsub.f32 0.0, %v1752
        %v2311 = vsub.f32 0.0, %v1754
        %v2312 = vsub.f32 0.0, %v1945
        %v2313 = vsub.f32 0.0, %v1947
        %v2314 = vsub.f32 0.0, %v2116
        %v2315 = vsub.f32 0.0, %v1563
        %v2316 = vsub.f32 0.0, %v1565
        %v2317 = vsub.f32 0.0, %v1756
        %v2318 = vsub.f32 0.0, %v1758
        %v2319 = vsub.f32 0.0, %v1949
        %v2320 = vsub.f32 0.0, %v1951
        %v2321 = vsub.f32 0.0, %v2119
        %v2322 = vsub.f32 0.0, %v1569
        %v2323 = vsub.f32 0.0, %v1571
        %v2324 = vsub.f32 0.0, %v1762
        %v2325 = vsub.f32 0.0, %v1764
        %v2326 = vsub.f32 0.0, %v1955
        %v2327 = vsub.f32 0.0, %v1957
        %v2328 = vsub.f32 0.0, %v2124
        %v2329 = vsub.f32 0.0, %v1573
        %v2330 = vsub.f32 0.0, %v1575
        %v2331 = vsub.f32 0.0, %v1766
        %v2332 = vsub.f32 0.0, %v1768
        %v2333 = vsub.f32 0.0, %v1959
        %v2334 = vsub.f32 0.0, %v1961
        %v2335 = vsub.f32 0.0, %v2127
        %v2336 = vsub.f32 0.0, %v1579
        %v2337 = vsub.f32 0.0, %v1581
        %v2338 = vsub.f32 0.0, %v1772
        %v2339 = vsub.f32 0.0, %v1774
        %v2340 = vsub.f32 0.0, %v1965
        %v2341 = vsub.f32 0.0, %v1967
        %v2342 = vsub.f32 0.0, %v2132
        %v2343 = vsub.f32 0.0, %v1583
        %v2344 = vsub.f32 0.0, %v1585
        %v2345 = vsub.f32 0.0, %v1776
        %v2346 = vsub.f32 0.0, %v1778
        %v2347 = vsub.f32 0.0, %v1969
        %v2348 = vsub.f32 0.0, %v1971
        %v2349 = vsub.f32 0.0, %v2135
        %v2350 = vsub.f32 0.0, %v1589
        %v2351 = vsub.f32 0.0, %v1591
        %v2352 = vsub.f32 0.0, %v1782
        %v2353 = vsub.f32 0.0, %v1784
        %v2354 = vsub.f32 0.0, %v1975
        %v2355 = vsub.f32 0.0, %v1977
        %v2356 = vsub.f32 0.0, %v2140
        %v2357 = vsub.f32 0.0, %v1593
        %v2358 = vsub.f32 0.0, %v1595
        %v2359 = vsub.f32 0.0, %v1786
        %v2360 = vsub.f32 0.0, %v1788
        %v2361 = vsub.f32 0.0, %v1979
        %v2362 = vsub.f32 0.0, %v1981
        %v2363 = vsub.f32 0.0, %v2143
        %v2364 = vsub.f32 0.0, %v1599
        %v2365 = vsub.f32 0.0, %v1601
        %v2366 = vsub.f32 0.0, %v1792
        %v2367 = vsub.f32 0.0, %v1794
        %v2368 = vsub.f32 0.0, %v1985
        %v2369 = vsub.f32 0.0, %v1987
        %v2370 = vsub.f32 0.0, %v2148
        %v2371 = vsub.f32 0.0, %v1603
        %v2372 = vsub.f32 0.0, %v1605
        %v2373 = vsub.f32 0.0, %v1796
        %v2374 = vsub.f32 0.0, %v1798
        %v2375 = vsub.f32 0.0, %v1989
        %v2376 = vsub.f32 0.0, %v1991
        %v2377 = vsub.f32 0.0, %v2151
        %v2378 = vmul.f32 %v2154, 1.442695
        %v2379 = vpow.pop %v2378
        %v2380 = vmul.f32 %v2155, 1.442695
        %v2381 = vpow.pop %v2380
        %v2382 = vmul.f32 %v2156, 1.442695
        %v2383 = vpow.pop %v2382
        %v2384 = vmul.f32 %v2157, 1.442695
        %v2385 = vpow.pop %v2384
        %v2386 = vmul.f32 %v2158, 1.442695
        %v2387 = vpow.pop %v2386
        %v2388 = vmul.f32 %v2159, 1.442695
        %v2389 = vpow.pop %v2388
        %v2390 = vmul.f32 %v2160, 1.442695
        %v2391 = vpow.pop %v2390
        %v2392 = vmul.f32 %v2161, 1.442695
        %v2393 = vpow.pop %v2392
        %v2394 = vmul.f32 %v2162, 1.442695
        %v2395 = vpow.pop %v2394
        %v2396 = vmul.f32 %v2163, 1.442695
        %v2397 = vpow.pop %v2396
        %v2398 = vmul.f32 %v2164, 1.442695
        %v2399 = vpow.pop %v2398
        %v2400 = vmul.f32 %v2165, 1.442695
        %v2401 = vpow.pop %v2400
        %v2402 = vmul.f32 %v2166, 1.442695
        %v2403 = vpow.pop %v2402
        %v2404 = vmul.f32 %v2167, 1.442695
        %v2405 = vpow.pop %v2404
        %v2406 = vmul.f32 %v2168, 1.442695
        %v2407 = vpow.pop %v2406
        %v2408 = vmul.f32 %v2169, 1.442695
        %v2409 = vpow.pop %v2408
        %v2410 = vmul.f32 %v2170, 1.442695
        %v2411 = vpow.pop %v2410
        %v2412 = vmul.f32 %v2171, 1.442695
        %v2413 = vpow.pop %v2412
        %v2414 = vmul.f32 %v2172, 1.442695
        %v2415 = vpow.pop %v2414
        %v2416 = vmul.f32 %v2173, 1.442695
        %v2417 = vpow.pop %v2416
        %v2418 = vmul.f32 %v2174, 1.442695
        %v2419 = vpow.pop %v2418
        %v2420 = vmul.f32 %v2175, 1.442695
        %v2421 = vpow.pop %v2420
        %v2422 = vmul.f32 %v2176, 1.442695
        %v2423 = vpow.pop %v2422
        %v2424 = vmul.f32 %v2177, 1.442695
        %v2425 = vpow.pop %v2424
        %v2426 = vmul.f32 %v2178, 1.442695
        %v2427 = vpow.pop %v2426
        %v2428 = vmul.f32 %v2179, 1.442695
        %v2429 = vpow.pop %v2428
        %v2430 = vmul.f32 %v2180, 1.442695
        %v2431 = vpow.pop %v2430
        %v2432 = vmul.f32 %v2181, 1.442695
        %v2433 = vpow.pop %v2432
        %v2434 = vmul.f32 %v2182, 1.442695
        %v2435 = vpow.pop %v2434
        %v2436 = vmul.f32 %v2183, 1.442695
        %v2437 = vpow.pop %v2436
        %v2438 = vmul.f32 %v2184, 1.442695
        %v2439 = vpow.pop %v2438
        %v2440 = vmul.f32 %v2185, 1.442695
        %v2441 = vpow.pop %v2440
        %v2442 = vmul.f32 %v2186, 1.442695
        %v2443 = vpow.pop %v2442
        %v2444 = vmul.f32 %v2187, 1.442695
        %v2445 = vpow.pop %v2444
        %v2446 = vmul.f32 %v2188, 1.442695
        %v2447 = vpow.pop %v2446
        %v2448 = vmul.f32 %v2189, 1.442695
        %v2449 = vpow.pop %v2448
        %v2450 = vmul.f32 %v2190, 1.442695
        %v2451 = vpow.pop %v2450
        %v2452 = vmul.f32 %v2191, 1.442695
        %v2453 = vpow.pop %v2452
        %v2454 = vmul.f32 %v2192, 1.442695
        %v2455 = vpow.pop %v2454
        %v2456 = vmul.f32 %v2193, 1.442695
        %v2457 = vpow.pop %v2456
        %v2458 = vmul.f32 %v2194, 1.442695
        %v2459 = vpow.pop %v2458
        %v2460 = vmul.f32 %v2195, 1.442695
        %v2461 = vpow.pop %v2460
        %v2462 = vmul.f32 %v2196, 1.442695
        %v2463 = vpow.pop %v2462
        %v2464 = vmul.f32 %v2197, 1.442695
        %v2465 = vpow.pop %v2464
        %v2466 = vmul.f32 %v2198, 1.442695
        %v2467 = vpow.pop %v2466
        %v2468 = vmul.f32 %v2199, 1.442695
        %v2469 = vpow.pop %v2468
        %v2470 = vmul.f32 %v2200, 1.442695
        %v2471 = vpow.pop %v2470
        %v2472 = vmul.f32 %v2201, 1.442695
        %v2473 = vpow.pop %v2472
        %v2474 = vmul.f32 %v2202, 1.442695
        %v2475 = vpow.pop %v2474
        %v2476 = vmul.f32 %v2203, 1.442695
        %v2477 = vpow.pop %v2476
        %v2478 = vmul.f32 %v2204, 1.442695
        %v2479 = vpow.pop %v2478
        %v2480 = vmul.f32 %v2205, 1.442695
        %v2481 = vpow.pop %v2480
        %v2482 = vmul.f32 %v2206, 1.442695
        %v2483 = vpow.pop %v2482
        %v2484 = vmul.f32 %v2207, 1.442695
        %v2485 = vpow.pop %v2484
        %v2486 = vmul.f32 %v2208, 1.442695
        %v2487 = vpow.pop %v2486
        %v2488 = vmul.f32 %v2209, 1.442695
        %v2489 = vpow.pop %v2488
        %v2490 = vmul.f32 %v2210, 1.442695
        %v2491 = vpow.pop %v2490
        %v2492 = vmul.f32 %v2211, 1.442695
        %v2493 = vpow.pop %v2492
        %v2494 = vmul.f32 %v2212, 1.442695
        %v2495 = vpow.pop %v2494
        %v2496 = vmul.f32 %v2213, 1.442695
        %v2497 = vpow.pop %v2496
        %v2498 = vmul.f32 %v2214, 1.442695
        %v2499 = vpow.pop %v2498
        %v2500 = vmul.f32 %v2215, 1.442695
        %v2501 = vpow.pop %v2500
        %v2502 = vmul.f32 %v2216, 1.442695
        %v2503 = vpow.pop %v2502
        %v2504 = vmul.f32 %v2217, 1.442695
        %v2505 = vpow.pop %v2504
        %v2506 = vmul.f32 %v2218, 1.442695
        %v2507 = vpow.pop %v2506
        %v2508 = vmul.f32 %v2219, 1.442695
        %v2509 = vpow.pop %v2508
        %v2510 = vmul.f32 %v2220, 1.442695
        %v2511 = vpow.pop %v2510
        %v2512 = vmul.f32 %v2221, 1.442695
        %v2513 = vpow.pop %v2512
        %v2514 = vmul.f32 %v2222, 1.442695
        %v2515 = vpow.pop %v2514
        %v2516 = vmul.f32 %v2223, 1.442695
        %v2517 = vpow.pop %v2516
        %v2518 = vmul.f32 %v2224, 1.442695
        %v2519 = vpow.pop %v2518
        %v2520 = vmul.f32 %v2225, 1.442695
        %v2521 = vpow.pop %v2520
        %v2522 = vmul.f32 %v2226, 1.442695
        %v2523 = vpow.pop %v2522
        %v2524 = vmul.f32 %v2227, 1.442695
        %v2525 = vpow.pop %v2524
        %v2526 = vmul.f32 %v2228, 1.442695
        %v2527 = vpow.pop %v2526
        %v2528 = vmul.f32 %v2229, 1.442695
        %v2529 = vpow.pop %v2528
        %v2530 = vmul.f32 %v2230, 1.442695
        %v2531 = vpow.pop %v2530
        %v2532 = vmul.f32 %v2231, 1.442695
        %v2533 = vpow.pop %v2532
        %v2534 = vmul.f32 %v2232, 1.442695
        %v2535 = vpow.pop %v2534
        %v2536 = vmul.f32 %v2233, 1.442695
        %v2537 = vpow.pop %v2536
        %v2538 = vmul.f32 %v2234, 1.442695
        %v2539 = vpow.pop %v2538
        %v2540 = vmul.f32 %v2235, 1.442695
        %v2541 = vpow.pop %v2540
        %v2542 = vmul.f32 %v2236, 1.442695
        %v2543 = vpow.pop %v2542
        %v2544 = vmul.f32 %v2237, 1.442695
        %v2545 = vpow.pop %v2544
        %v2546 = vmul.f32 %v2238, 1.442695
        %v2547 = vpow.pop %v2546
        %v2548 = vmul.f32 %v2239, 1.442695
        %v2549 = vpow.pop %v2548
        %v2550 = vmul.f32 %v2240, 1.442695
        %v2551 = vpow.pop %v2550
        %v2552 = vmul.f32 %v2241, 1.442695
        %v2553 = vpow.pop %v2552
        %v2554 = vmul.f32 %v2242, 1.442695
        %v2555 = vpow.pop %v2554
        %v2556 = vmul.f32 %v2243, 1.442695
        %v2557 = vpow.pop %v2556
        %v2558 = vmul.f32 %v2244, 1.442695
        %v2559 = vpow.pop %v2558
        %v2560 = vmul.f32 %v2245, 1.442695
        %v2561 = vpow.pop %v2560
        %v2562 = vmul.f32 %v2246, 1.442695
        %v2563 = vpow.pop %v2562
        %v2564 = vmul.f32 %v2247, 1.442695
        %v2565 = vpow.pop %v2564
        %v2566 = vmul.f32 %v2248, 1.442695
        %v2567 = vpow.pop %v2566
        %v2568 = vmul.f32 %v2249, 1.442695
        %v2569 = vpow.pop %v2568
        %v2570 = vmul.f32 %v2250, 1.442695
        %v2571 = vpow.pop %v2570
        %v2572 = vmul.f32 %v2251, 1.442695
        %v2573 = vpow.pop %v2572
        %v2574 = vmul.f32 %v2252, 1.442695
        %v2575 = vpow.pop %v2574
        %v2576 = vmul.f32 %v2253, 1.442695
        %v2577 = vpow.pop %v2576
        %v2578 = vmul.f32 %v2254, 1.442695
        %v2579 = vpow.pop %v2578
        %v2580 = vmul.f32 %v2255, 1.442695
        %v2581 = vpow.pop %v2580
        %v2582 = vmul.f32 %v2256, 1.442695
        %v2583 = vpow.pop %v2582
        %v2584 = vmul.f32 %v2257, 1.442695
        %v2585 = vpow.pop %v2584
        %v2586 = vmul.f32 %v2258, 1.442695
        %v2587 = vpow.pop %v2586
        %v2588 = vmul.f32 %v2259, 1.442695
        %v2589 = vpow.pop %v2588
        %v2590 = vmul.f32 %v2260, 1.442695
        %v2591 = vpow.pop %v2590
        %v2592 = vmul.f32 %v2261, 1.442695
        %v2593 = vpow.pop %v2592
        %v2594 = vmul.f32 %v2262, 1.442695
        %v2595 = vpow.pop %v2594
        %v2596 = vmul.f32 %v2263, 1.442695
        %v2597 = vpow.pop %v2596
        %v2598 = vmul.f32 %v2264, 1.442695
        %v2599 = vpow.pop %v2598
        %v2600 = vmul.f32 %v2265, 1.442695
        %v2601 = vpow.pop %v2600
        %v2602 = vmul.f32 %v2266, 1.442695
        %v2603 = vpow.pop %v2602
        %v2604 = vmul.f32 %v2267, 1.442695
        %v2605 = vpow.pop %v2604
        %v2606 = vmul.f32 %v2268, 1.442695
        %v2607 = vpow.pop %v2606
        %v2608 = vmul.f32 %v2269, 1.442695
        %v2609 = vpow.pop %v2608
        %v2610 = vmul.f32 %v2270, 1.442695
        %v2611 = vpow.pop %v2610
        %v2612 = vmul.f32 %v2271, 1.442695
        %v2613 = vpow.pop %v2612
        %v2614 = vmul.f32 %v2272, 1.442695
        %v2615 = vpow.pop %v2614
        %v2616 = vmul.f32 %v2273, 1.442695
        %v2617 = vpow.pop %v2616
        %v2618 = vmul.f32 %v2274, 1.442695
        %v2619 = vpow.pop %v2618
        %v2620 = vmul.f32 %v2275, 1.442695
        %v2621 = vpow.pop %v2620
        %v2622 = vmul.f32 %v2276, 1.442695
        %v2623 = vpow.pop %v2622
        %v2624 = vmul.f32 %v2277, 1.442695
        %v2625 = vpow.pop %v2624
        %v2626 = vmul.f32 %v2278, 1.442695
        %v2627 = vpow.pop %v2626
        %v2628 = vmul.f32 %v2279, 1.442695
        %v2629 = vpow.pop %v2628
        %v2630 = vmul.f32 %v2280, 1.442695
        %v2631 = vpow.pop %v2630
        %v2632 = vmul.f32 %v2281, 1.442695
        %v2633 = vpow.pop %v2632
        %v2634 = vmul.f32 %v2282, 1.442695
        %v2635 = vpow.pop %v2634
        %v2636 = vmul.f32 %v2283, 1.442695
        %v2637 = vpow.pop %v2636
        %v2638 = vmul.f32 %v2284, 1.442695
        %v2639 = vpow.pop %v2638
        %v2640 = vmul.f32 %v2285, 1.442695
        %v2641 = vpow.pop %v2640
        %v2642 = vmul.f32 %v2286, 1.442695
        %v2643 = vpow.pop %v2642
        %v2644 = vmul.f32 %v2287, 1.442695
        %v2645 = vpow.pop %v2644
        %v2646 = vmul.f32 %v2288, 1.442695
        %v2647 = vpow.pop %v2646
        %v2648 = vmul.f32 %v2289, 1.442695
        %v2649 = vpow.pop %v2648
        %v2650 = vmul.f32 %v2290, 1.442695
        %v2651 = vpow.pop %v2650
        %v2652 = vmul.f32 %v2291, 1.442695
        %v2653 = vpow.pop %v2652
        %v2654 = vmul.f32 %v2292, 1.442695
        %v2655 = vpow.pop %v2654
        %v2656 = vmul.f32 %v2293, 1.442695
        %v2657 = vpow.pop %v2656
        %v2658 = vmul.f32 %v2294, 1.442695
        %v2659 = vpow.pop %v2658
        %v2660 = vmul.f32 %v2295, 1.442695
        %v2661 = vpow.pop %v2660
        %v2662 = vmul.f32 %v2296, 1.442695
        %v2663 = vpow.pop %v2662
        %v2664 = vmul.f32 %v2297, 1.442695
        %v2665 = vpow.pop %v2664
        %v2666 = vmul.f32 %v2298, 1.442695
        %v2667 = vpow.pop %v2666
        %v2668 = vmul.f32 %v2299, 1.442695
        %v2669 = vpow.pop %v2668
        %v2670 = vmul.f32 %v2300, 1.442695
        %v2671 = vpow.pop %v2670
        %v2672 = vmul.f32 %v2301, 1.442695
        %v2673 = vpow.pop %v2672
        %v2674 = vmul.f32 %v2302, 1.442695
        %v2675 = vpow.pop %v2674
        %v2676 = vmul.f32 %v2303, 1.442695
        %v2677 = vpow.pop %v2676
        %v2678 = vmul.f32 %v2304, 1.442695
        %v2679 = vpow.pop %v2678
        %v2680 = vmul.f32 %v2305, 1.442695
        %v2681 = vpow.pop %v2680
        %v2682 = vmul.f32 %v2306, 1.442695
        %v2683 = vpow.pop %v2682
        %v2684 = vmul.f32 %v2307, 1.442695
        %v2685 = vpow.pop %v2684
        %v2686 = vmul.f32 %v2308, 1.442695
        %v2687 = vpow.pop %v2686
        %v2688 = vmul.f32 %v2309, 1.442695
        %v2689 = vpow.pop %v2688
        %v2690 = vmul.f32 %v2310, 1.442695
        %v2691 = vpow.pop %v2690
        %v2692 = vmul.f32 %v2311, 1.442695
        %v2693 = vpow.pop %v2692
        %v2694 = vmul.f32 %v2312, 1.442695
        %v2695 = vpow.pop %v2694
        %v2696 = vmul.f32 %v2313, 1.442695
        %v2697 = vpow.pop %v2696
        %v2698 = vmul.f32 %v2314, 1.442695
        %v2699 = vpow.pop %v2698
        %v2700 = vmul.f32 %v2315, 1.442695
        %v2701 = vpow.pop %v2700
        %v2702 = vmul.f32 %v2316, 1.442695
        %v2703 = vpow.pop %v2702
        %v2704 = vmul.f32 %v2317, 1.442695
        %v2705 = vpow.pop %v2704
        %v2706 = vmul.f32 %v2318, 1.442695
        %v2707 = vpow.pop %v2706
        %v2708 = vmul.f32 %v2319, 1.442695
        %v2709 = vpow.pop %v2708
        %v2710 = vmul.f32 %v2320, 1.442695
        %v2711 = vpow.pop %v2710
        %v2712 = vmul.f32 %v2321, 1.442695
        %v2713 = vpow.pop %v2712
        %v2714 = vmul.f32 %v2322, 1.442695
        %v2715 = vpow.pop %v2714
        %v2716 = vmul.f32 %v2323, 1.442695
        %v2717 = vpow.pop %v2716
        %v2718 = vmul.f32 %v2324, 1.442695
        %v2719 = vpow.pop %v2718
        %v2720 = vmul.f32 %v2325, 1.442695
        %v2721 = vpow.pop %v2720
        %v2722 = vmul.f32 %v2326, 1.442695
        %v2723 = vpow.pop %v2722
        %v2724 = vmul.f32 %v2327, 1.442695
        %v2725 = vpow.pop %v2724
        %v2726 = vmul.f32 %v2328, 1.442695
        %v2727 = vpow.pop %v2726
        %v2728 = vmul.f32 %v2329, 1.442695
        %v2729 = vpow.pop %v2728
        %v2730 = vmul.f32 %v2330, 1.442695
        %v2731 = vpow.pop %v2730
        %v2732 = vmul.f32 %v2331, 1.442695
        %v2733 = vpow.pop %v2732
        %v2734 = vmul.f32 %v2332, 1.442695
        %v2735 = vpow.pop %v2734
        %v2736 = vmul.f32 %v2333, 1.442695
        %v2737 = vpow.pop %v2736
        %v2738 = vmul.f32 %v2334, 1.442695
        %v2739 = vpow.pop %v2738
        %v2740 = vmul.f32 %v2335, 1.442695
        %v2741 = vpow.pop %v2740
        %v2742 = vmul.f32 %v2336, 1.442695
        %v2743 = vpow.pop %v2742
        %v2744 = vmul.f32 %v2337, 1.442695
        %v2745 = vpow.pop %v2744
        %v2746 = vmul.f32 %v2338, 1.442695
        %v2747 = vpow.pop %v2746
        %v2748 = vmul.f32 %v2339, 1.442695
        %v2749 = vpow.pop %v2748
        %v2750 = vmul.f32 %v2340, 1.442695
        %v2751 = vpow.pop %v2750
        %v2752 = vmul.f32 %v2341, 1.442695
        %v2753 = vpow.pop %v2752
        %v2754 = vmul.f32 %v2342, 1.442695
        %v2755 = vpow.pop %v2754
        %v2756 = vmul.f32 %v2343, 1.442695
        %v2757 = vpow.pop %v2756
        %v2758 = vmul.f32 %v2344, 1.442695
        %v2759 = vpow.pop %v2758
        %v2760 = vmul.f32 %v2345, 1.442695
        %v2761 = vpow.pop %v2760
        %v2762 = vmul.f32 %v2346, 1.442695
        %v2763 = vpow.pop %v2762
        %v2764 = vmul.f32 %v2347, 1.442695
        %v2765 = vpow.pop %v2764
        %v2766 = vmul.f32 %v2348, 1.442695
        %v2767 = vpow.pop %v2766
        %v2768 = vmul.f32 %v2349, 1.442695
        %v2769 = vpow.pop %v2768
        %v2770 = vmul.f32 %v2350, 1.442695
        %v2771 = vpow.pop %v2770
        %v2772 = vmul.f32 %v2351, 1.442695
        %v2773 = vpow.pop %v2772
        %v2774 = vmul.f32 %v2352, 1.442695
        %v2775 = vpow.pop %v2774
        %v2776 = vmul.f32 %v2353, 1.442695
        %v2777 = vpow.pop %v2776
        %v2778 = vmul.f32 %v2354, 1.442695
        %v2779 = vpow.pop %v2778
        %v2780 = vmul.f32 %v2355, 1.442695
        %v2781 = vpow.pop %v2780
        %v2782 = vmul.f32 %v2356, 1.442695
        %v2783 = vpow.pop %v2782
        %v2784 = vmul.f32 %v2357, 1.442695
        %v2785 = vpow.pop %v2784
        %v2786 = vmul.f32 %v2358, 1.442695
        %v2787 = vpow.pop %v2786
        %v2788 = vmul.f32 %v2359, 1.442695
        %v2789 = vpow.pop %v2788
        %v2790 = vmul.f32 %v2360, 1.442695
        %v2791 = vpow.pop %v2790
        %v2792 = vmul.f32 %v2361, 1.442695
        %v2793 = vpow.pop %v2792
        %v2794 = vmul.f32 %v2362, 1.442695
        %v2795 = vpow.pop %v2794
        %v2796 = vmul.f32 %v2363, 1.442695
        %v2797 = vpow.pop %v2796
        %v2798 = vmul.f32 %v2364, 1.442695
        %v2799 = vpow.pop %v2798
        %v2800 = vmul.f32 %v2365, 1.442695
        %v2801 = vpow.pop %v2800
        %v2802 = vmul.f32 %v2366, 1.442695
        %v2803 = vpow.pop %v2802
        %v2804 = vmul.f32 %v2367, 1.442695
        %v2805 = vpow.pop %v2804
        %v2806 = vmul.f32 %v2368, 1.442695
        %v2807 = vpow.pop %v2806
        %v2808 = vmul.f32 %v2369, 1.442695
        %v2809 = vpow.pop %v2808
        %v2810 = vmul.f32 %v2370, 1.442695
        %v2811 = vpow.pop %v2810
        %v2812 = vmul.f32 %v2371, 1.442695
        %v2813 = vpow.pop %v2812
        %v2814 = vmul.f32 %v2372, 1.442695
        %v2815 = vpow.pop %v2814
        %v2816 = vmul.f32 %v2373, 1.442695
        %v2817 = vpow.pop %v2816
        %v2818 = vmul.f32 %v2374, 1.442695
        %v2819 = vpow.pop %v2818
        %v2820 = vmul.f32 %v2375, 1.442695
        %v2821 = vpow.pop %v2820
        %v2822 = vmul.f32 %v2376, 1.442695
        %v2823 = vpow.pop %v2822
        %v2824 = vmul.f32 %v2377, 1.442695
        %v2825 = vpow.pop %v2824
        %v2826 = vadd.f32 %v2379, 1.0
        %v2827 = vadd.f32 %v2381, 1.0
        %v2828 = vadd.f32 %v2383, 1.0
        %v2829 = vadd.f32 %v2385, 1.0
        %v2830 = vadd.f32 %v2387, 1.0
        %v2831 = vadd.f32 %v2389, 1.0
        %v2832 = vadd.f32 %v2391, 1.0
        %v2833 = vadd.f32 %v2393, 1.0
        %v2834 = vadd.f32 %v2395, 1.0
        %v2835 = vadd.f32 %v2397, 1.0
        %v2836 = vadd.f32 %v2399, 1.0
        %v2837 = vadd.f32 %v2401, 1.0
        %v2838 = vadd.f32 %v2403, 1.0
        %v2839 = vadd.f32 %v2405, 1.0
        %v2840 = vadd.f32 %v2407, 1.0
        %v2841 = vadd.f32 %v2409, 1.0
        %v2842 = vadd.f32 %v2411, 1.0
        %v2843 = vadd.f32 %v2413, 1.0
        %v2844 = vadd.f32 %v2415, 1.0
        %v2845 = vadd.f32 %v2417, 1.0
        %v2846 = vadd.f32 %v2419, 1.0
        %v2847 = vadd.f32 %v2421, 1.0
        %v2848 = vadd.f32 %v2423, 1.0
        %v2849 = vadd.f32 %v2425, 1.0
        %v2850 = vadd.f32 %v2427, 1.0
        %v2851 = vadd.f32 %v2429, 1.0
        %v2852 = vadd.f32 %v2431, 1.0
        %v2853 = vadd.f32 %v2433, 1.0
        %v2854 = vadd.f32 %v2435, 1.0
        %v2855 = vadd.f32 %v2437, 1.0
        %v2856 = vadd.f32 %v2439, 1.0
        %v2857 = vadd.f32 %v2441, 1.0
        %v2858 = vadd.f32 %v2443, 1.0
        %v2859 = vadd.f32 %v2445, 1.0
        %v2860 = vadd.f32 %v2447, 1.0
        %v2861 = vadd.f32 %v2449, 1.0
        %v2862 = vadd.f32 %v2451, 1.0
        %v2863 = vadd.f32 %v2453, 1.0
        %v2864 = vadd.f32 %v2455, 1.0
        %v2865 = vadd.f32 %v2457, 1.0
        %v2866 = vadd.f32 %v2459, 1.0
        %v2867 = vadd.f32 %v2461, 1.0
        %v2868 = vadd.f32 %v2463, 1.0
        %v2869 = vadd.f32 %v2465, 1.0
        %v2870 = vadd.f32 %v2467, 1.0
        %v2871 = vadd.f32 %v2469, 1.0
        %v2872 = vadd.f32 %v2471, 1.0
        %v2873 = vadd.f32 %v2473, 1.0
        %v2874 = vadd.f32 %v2475, 1.0
        %v2875 = vadd.f32 %v2477, 1.0
        %v2876 = vadd.f32 %v2479, 1.0
        %v2877 = vadd.f32 %v2481, 1.0
        %v2878 = vadd.f32 %v2483, 1.0
        %v2879 = vadd.f32 %v2485, 1.0
        %v2880 = vadd.f32 %v2487, 1.0
        %v2881 = vadd.f32 %v2489, 1.0
        %v2882 = vadd.f32 %v2491, 1.0
        %v2883 = vadd.f32 %v2493, 1.0
        %v2884 = vadd.f32 %v2495, 1.0
        %v2885 = vadd.f32 %v2497, 1.0
        %v2886 = vadd.f32 %v2499, 1.0
        %v2887 = vadd.f32 %v2501, 1.0
        %v2888 = vadd.f32 %v2503, 1.0
        %v2889 = vadd.f32 %v2505, 1.0
        %v2890 = vadd.f32 %v2507, 1.0
        %v2891 = vadd.f32 %v2509, 1.0
        %v2892 = vadd.f32 %v2511, 1.0
        %v2893 = vadd.f32 %v2513, 1.0
        %v2894 = vadd.f32 %v2515, 1.0
        %v2895 = vadd.f32 %v2517, 1.0
        %v2896 = vadd.f32 %v2519, 1.0
        %v2897 = vadd.f32 %v2521, 1.0
        %v2898 = vadd.f32 %v2523, 1.0
        %v2899 = vadd.f32 %v2525, 1.0
        %v2900 = vadd.f32 %v2527, 1.0
        %v2901 = vadd.f32 %v2529, 1.0
        %v2902 = vadd.f32 %v2531, 1.0
        %v2903 = vadd.f32 %v2533, 1.0
        %v2904 = vadd.f32 %v2535, 1.0
        %v2905 = vadd.f32 %v2537, 1.0
        %v2906 = vadd.f32 %v2539, 1.0
        %v2907 = vadd.f32 %v2541, 1.0
        %v2908 = vadd.f32 %v2543, 1.0
        %v2909 = vadd.f32 %v2545, 1.0
        %v2910 = vadd.f32 %v2547, 1.0
        %v2911 = vadd.f32 %v2549, 1.0
        %v2912 = vadd.f32 %v2551, 1.0
        %v2913 = vadd.f32 %v2553, 1.0
        %v2914 = vadd.f32 %v2555, 1.0
        %v2915 = vadd.f32 %v2557, 1.0
        %v2916 = vadd.f32 %v2559, 1.0
        %v2917 = vadd.f32 %v2561, 1.0
        %v2918 = vadd.f32 %v2563, 1.0
        %v2919 = vadd.f32 %v2565, 1.0
        %v2920 = vadd.f32 %v2567, 1.0
        %v2921 = vadd.f32 %v2569, 1.0
        %v2922 = vadd.f32 %v2571, 1.0
        %v2923 = vadd.f32 %v2573, 1.0
        %v2924 = vadd.f32 %v2575, 1.0
        %v2925 = vadd.f32 %v2577, 1.0
        %v2926 = vadd.f32 %v2579, 1.0
        %v2927 = vadd.f32 %v2581, 1.0
        %v2928 = vadd.f32 %v2583, 1.0
        %v2929 = vadd.f32 %v2585, 1.0
        %v2930 = vadd.f32 %v2587, 1.0
        %v2931 = vadd.f32 %v2589, 1.0
        %v2932 = vadd.f32 %v2591, 1.0
        %v2933 = vadd.f32 %v2593, 1.0
        %v2934 = vadd.f32 %v2595, 1.0
        %v2935 = vadd.f32 %v2597, 1.0
        %v2936 = vadd.f32 %v2599, 1.0
        %v2937 = vadd.f32 %v2601, 1.0
        %v2938 = vadd.f32 %v2603, 1.0
        %v2939 = vadd.f32 %v2605, 1.0
        %v2940 = vadd.f32 %v2607, 1.0
        %v2941 = vadd.f32 %v2609, 1.0
        %v2942 = vadd.f32 %v2611, 1.0
        %v2943 = vadd.f32 %v2613, 1.0
        %v2944 = vadd.f32 %v2615, 1.0
        %v2945 = vadd.f32 %v2617, 1.0
        %v2946 = vadd.f32 %v2619, 1.0
        %v2947 = vadd.f32 %v2621, 1.0
        %v2948 = vadd.f32 %v2623, 1.0
        %v2949 = vadd.f32 %v2625, 1.0
        %v2950 = vadd.f32 %v2627, 1.0
        %v2951 = vadd.f32 %v2629, 1.0
        %v2952 = vadd.f32 %v2631, 1.0
        %v2953 = vadd.f32 %v2633, 1.0
        %v2954 = vadd.f32 %v2635, 1.0
        %v2955 = vadd.f32 %v2637, 1.0
        %v2956 = vadd.f32 %v2639, 1.0
        %v2957 = vadd.f32 %v2641, 1.0
        %v2958 = vadd.f32 %v2643, 1.0
        %v2959 = vadd.f32 %v2645, 1.0
        %v2960 = vadd.f32 %v2647, 1.0
        %v2961 = vadd.f32 %v2649, 1.0
        %v2962 = vadd.f32 %v2651, 1.0
        %v2963 = vadd.f32 %v2653, 1.0
        %v2964 = vadd.f32 %v2655, 1.0
        %v2965 = vadd.f32 %v2657, 1.0
        %v2966 = vadd.f32 %v2659, 1.0
        %v2967 = vadd.f32 %v2661, 1.0
        %v2968 = vadd.f32 %v2663, 1.0
        %v2969 = vadd.f32 %v2665, 1.0
        %v2970 = vadd.f32 %v2667, 1.0
        %v2971 = vadd.f32 %v2669, 1.0
        %v2972 = vadd.f32 %v2671, 1.0
        %v2973 = vadd.f32 %v2673, 1.0
        %v2974 = vadd.f32 %v2675, 1.0
        %v2975 = vadd.f32 %v2677, 1.0
        %v2976 = vadd.f32 %v2679, 1.0
        %v2977 = vadd.f32 %v2681, 1.0
        %v2978 = vadd.f32 %v2683, 1.0
        %v2979 = vadd.f32 %v2685, 1.0
        %v2980 = vadd.f32 %v2687, 1.0
        %v2981 = vadd.f32 %v2689, 1.0
        %v2982 = vadd.f32 %v2691, 1.0
        %v2983 = vadd.f32 %v2693, 1.0
        %v2984 = vadd.f32 %v2695, 1.0
        %v2985 = vadd.f32 %v2697, 1.0
        %v2986 = vadd.f32 %v2699, 1.0
        %v2987 = vadd.f32 %v2701, 1.0
        %v2988 = vadd.f32 %v2703, 1.0
        %v2989 = vadd.f32 %v2705, 1.0
        %v2990 = vadd.f32 %v2707, 1.0
        %v2991 = vadd.f32 %v2709, 1.0
        %v2992 = vadd.f32 %v2711, 1.0
        %v2993 = vadd.f32 %v2713, 1.0
        %v2994 = vadd.f32 %v2715, 1.0
        %v2995 = vadd.f32 %v2717, 1.0
        %v2996 = vadd.f32 %v2719, 1.0
        %v2997 = vadd.f32 %v2721, 1.0
        %v2998 = vadd.f32 %v2723, 1.0
        %v2999 = vadd.f32 %v2725, 1.0
        %v3000 = vadd.f32 %v2727, 1.0
        %v3001 = vadd.f32 %v2729, 1.0
        %v3002 = vadd.f32 %v2731, 1.0
        %v3003 = vadd.f32 %v2733, 1.0
        %v3004 = vadd.f32 %v2735, 1.0
        %v3005 = vadd.f32 %v2737, 1.0
        %v3006 = vadd.f32 %v2739, 1.0
        %v3007 = vadd.f32 %v2741, 1.0
        %v3008 = vadd.f32 %v2743, 1.0
        %v3009 = vadd.f32 %v2745, 1.0
        %v3010 = vadd.f32 %v2747, 1.0
        %v3011 = vadd.f32 %v2749, 1.0
        %v3012 = vadd.f32 %v2751, 1.0
        %v3013 = vadd.f32 %v2753, 1.0
        %v3014 = vadd.f32 %v2755, 1.0
        %v3015 = vadd.f32 %v2757, 1.0
        %v3016 = vadd.f32 %v2759, 1.0
        %v3017 = vadd.f32 %v2761, 1.0
        %v3018 = vadd.f32 %v2763, 1.0
        %v3019 = vadd.f32 %v2765, 1.0
        %v3020 = vadd.f32 %v2767, 1.0
        %v3021 = vadd.f32 %v2769, 1.0
        %v3022 = vadd.f32 %v2771, 1.0
        %v3023 = vadd.f32 %v2773, 1.0
        %v3024 = vadd.f32 %v2775, 1.0
        %v3025 = vadd.f32 %v2777, 1.0
        %v3026 = vadd.f32 %v2779, 1.0
        %v3027 = vadd.f32 %v2781, 1.0
        %v3028 = vadd.f32 %v2783, 1.0
        %v3029 = vadd.f32 %v2785, 1.0
        %v3030 = vadd.f32 %v2787, 1.0
        %v3031 = vadd.f32 %v2789, 1.0
        %v3032 = vadd.f32 %v2791, 1.0
        %v3033 = vadd.f32 %v2793, 1.0
        %v3034 = vadd.f32 %v2795, 1.0
        %v3035 = vadd.f32 %v2797, 1.0
        %v3036 = vadd.f32 %v2799, 1.0
        %v3037 = vadd.f32 %v2801, 1.0
        %v3038 = vadd.f32 %v2803, 1.0
        %v3039 = vadd.f32 %v2805, 1.0
        %v3040 = vadd.f32 %v2807, 1.0
        %v3041 = vadd.f32 %v2809, 1.0
        %v3042 = vadd.f32 %v2811, 1.0
        %v3043 = vadd.f32 %v2813, 1.0
        %v3044 = vadd.f32 %v2815, 1.0
        %v3045 = vadd.f32 %v2817, 1.0
        %v3046 = vadd.f32 %v2819, 1.0
        %v3047 = vadd.f32 %v2821, 1.0
        %v3048 = vadd.f32 %v2823, 1.0
        %v3049 = vadd.f32 %v2825, 1.0
        %v3050 = vrcp.pop %v2826
        %v3051 = vrcp.pop %v2827
        %v3052 = vrcp.pop %v2828
        %v3053 = vrcp.pop %v2829
        %v3054 = vrcp.pop %v2830
        %v3055 = vrcp.pop %v2831
        %v3056 = vrcp.pop %v2832
        %v3057 = vrcp.pop %v2833
        %v3058 = vrcp.pop %v2834
        %v3059 = vrcp.pop %v2835
        %v3060 = vrcp.pop %v2836
        %v3061 = vrcp.pop %v2837
        %v3062 = vrcp.pop %v2838
        %v3063 = vrcp.pop %v2839
        %v3064 = vrcp.pop %v2840
        %v3065 = vrcp.pop %v2841
        %v3066 = vrcp.pop %v2842
        %v3067 = vrcp.pop %v2843
        %v3068 = vrcp.pop %v2844
        %v3069 = vrcp.pop %v2845
        %v3070 = vrcp.pop %v2846
        %v3071 = vrcp.pop %v2847
        %v3072 = vrcp.pop %v2848
        %v3073 = vrcp.pop %v2849
        %v3074 = vrcp.pop %v2850
        %v3075 = vrcp.pop %v2851
        %v3076 = vrcp.pop %v2852
        %v3077 = vrcp.pop %v2853
        %v3078 = vrcp.pop %v2854
        %v3079 = vrcp.pop %v2855
        %v3080 = vrcp.pop %v2856
        %v3081 = vrcp.pop %v2857
        %v3082 = vrcp.pop %v2858
        %v3083 = vrcp.pop %v2859
        %v3084 = vrcp.pop %v2860
        %v3085 = vrcp.pop %v2861
        %v3086 = vrcp.pop %v2862
        %v3087 = vrcp.pop %v2863
        %v3088 = vrcp.pop %v2864
        %v3089 = vrcp.pop %v2865
        %v3090 = vrcp.pop %v2866
        %v3091 = vrcp.pop %v2867
        %v3092 = vrcp.pop %v2868
        %v3093 = vrcp.pop %v2869
        %v3094 = vrcp.pop %v2870
        %v3095 = vrcp.pop %v2871
        %v3096 = vrcp.pop %v2872
        %v3097 = vrcp.pop %v2873
        %v3098 = vrcp.pop %v2874
        %v3099 = vrcp.pop %v2875
        %v3100 = vrcp.pop %v2876
        %v3101 = vrcp.pop %v2877
        %v3102 = vrcp.pop %v2878
        %v3103 = vrcp.pop %v2879
        %v3104 = vrcp.pop %v2880
        %v3105 = vrcp.pop %v2881
        %v3106 = vrcp.pop %v2882
        %v3107 = vrcp.pop %v2883
        %v3108 = vrcp.pop %v2884
        %v3109 = vrcp.pop %v2885
        %v3110 = vrcp.pop %v2886
        %v3111 = vrcp.pop %v2887
        %v3112 = vrcp.pop %v2888
        %v3113 = vrcp.pop %v2889
        %v3114 = vrcp.pop %v2890
        %v3115 = vrcp.pop %v2891
        %v3116 = vrcp.pop %v2892
        %v3117 = vrcp.pop %v2893
        %v3118 = vrcp.pop %v2894
        %v3119 = vrcp.pop %v2895
        %v3120 = vrcp.pop %v2896
        %v3121 = vrcp.pop %v2897
        %v3122 = vrcp.pop %v2898
        %v3123 = vrcp.pop %v2899
        %v3124 = vrcp.pop %v2900
        %v3125 = vrcp.pop %v2901
        %v3126 = vrcp.pop %v2902
        %v3127 = vrcp.pop %v2903
        %v3128 = vrcp.pop %v2904
        %v3129 = vrcp.pop %v2905
        %v3130 = vrcp.pop %v2906
        %v3131 = vrcp.pop %v2907
        %v3132 = vrcp.pop %v2908
        %v3133 = vrcp.pop %v2909
        %v3134 = vrcp.pop %v2910
        %v3135 = vrcp.pop %v2911
        %v3136 = vrcp.pop %v2912
        %v3137 = vrcp.pop %v2913
        %v3138 = vrcp.pop %v2914
        %v3139 = vrcp.pop %v2915
        %v3140 = vrcp.pop %v2916
        %v3141 = vrcp.pop %v2917
        %v3142 = vrcp.pop %v2918
        %v3143 = vrcp.pop %v2919
        %v3144 = vrcp.pop %v2920
        %v3145 = vrcp.pop %v2921
        %v3146 = vrcp.pop %v2922
        %v3147 = vrcp.pop %v2923
        %v3148 = vrcp.pop %v2924
        %v3149 = vrcp.pop %v2925
        %v3150 = vrcp.pop %v2926
        %v3151 = vrcp.pop %v2927
        %v3152 = vrcp.pop %v2928
        %v3153 = vrcp.pop %v2929
        %v3154 = vrcp.pop %v2930
        %v3155 = vrcp.pop %v2931
        %v3156 = vrcp.pop %v2932
        %v3157 = vrcp.pop %v2933
        %v3158 = vrcp.pop %v2934
        %v3159 = vrcp.pop %v2935
        %v3160 = vrcp.pop %v2936
        %v3161 = vrcp.pop %v2937
        %v3162 = vrcp.pop %v2938
        %v3163 = vrcp.pop %v2939
        %v3164 = vrcp.pop %v2940
        %v3165 = vrcp.pop %v2941
        %v3166 = vrcp.pop %v2942
        %v3167 = vrcp.pop %v2943
        %v3168 = vrcp.pop %v2944
        %v3169 = vrcp.pop %v2945
        %v3170 = vrcp.pop %v2946
        %v3171 = vrcp.pop %v2947
        %v3172 = vrcp.pop %v2948
        %v3173 = vrcp.pop %v2949
        %v3174 = vrcp.pop %v2950
        %v3175 = vrcp.pop %v2951
        %v3176 = vrcp.pop %v2952
        %v3177 = vrcp.pop %v2953
        %v3178 = vrcp.pop %v2954
        %v3179 = vrcp.pop %v2955
        %v3180 = vrcp.pop %v2956
        %v3181 = vrcp.pop %v2957
        %v3182 = vrcp.pop %v2958
        %v3183 = vrcp.pop %v2959
        %v3184 = vrcp.pop %v2960
        %v3185 = vrcp.pop %v2961
        %v3186 = vrcp.pop %v2962
        %v3187 = vrcp.pop %v2963
        %v3188 = vrcp.pop %v2964
        %v3189 = vrcp.pop %v2965
        %v3190 = vrcp.pop %v2966
        %v3191 = vrcp.pop %v2967
        %v3192 = vrcp.pop %v2968
        %v3193 = vrcp.pop %v2969
        %v3194 = vrcp.pop %v2970
        %v3195 = vrcp.pop %v2971
        %v3196 = vrcp.pop %v2972
        %v3197 = vrcp.pop %v2973
        %v3198 = vrcp.pop %v2974
        %v3199 = vrcp.pop %v2975
        %v3200 = vrcp.pop %v2976
        %v3201 = vrcp.pop %v2977
        %v3202 = vrcp.pop %v2978
        %v3203 = vrcp.pop %v2979
        %v3204 = vrcp.pop %v2980
        %v3205 = vrcp.pop %v2981
        %v3206 = vrcp.pop %v2982
        %v3207 = vrcp.pop %v2983
        %v3208 = vrcp.pop %v2984
        %v3209 = vrcp.pop %v2985
        %v3210 = vrcp.pop %v2986
        %v3211 = vrcp.pop %v2987
        %v3212 = vrcp.pop %v2988
        %v3213 = vrcp.pop %v2989
        %v3214 = vrcp.pop %v2990
        %v3215 = vrcp.pop %v2991
        %v3216 = vrcp.pop %v2992
        %v3217 = vrcp.pop %v2993
        %v3218 = vrcp.pop %v2994
        %v3219 = vrcp.pop %v2995
        %v3220 = vrcp.pop %v2996
        %v3221 = vrcp.pop %v2997
        %v3222 = vrcp.pop %v2998
        %v3223 = vrcp.pop %v2999
        %v3224 = vrcp.pop %v3000
        %v3225 = vrcp.pop %v3001
        %v3226 = vrcp.pop %v3002
        %v3227 = vrcp.pop %v3003
        %v3228 = vrcp.pop %v3004
        %v3229 = vrcp.pop %v3005
        %v3230 = vrcp.pop %v3006
        %v3231 = vrcp.pop %v3007
        %v3232 = vrcp.pop %v3008
        %v3233 = vrcp.pop %v3009
        %v3234 = vrcp.pop %v3010
        %v3235 = vrcp.pop %v3011
        %v3236 = vrcp.pop %v3012
        %v3237 = vrcp.pop %v3013
        %v3238 = vrcp.pop %v3014
        %v3239 = vrcp.pop %v3015
        %v3240 = vrcp.pop %v3016
        %v3241 = vrcp.pop %v3017
        %v3242 = vrcp.pop %v3018
        %v3243 = vrcp.pop %v3019
        %v3244 = vrcp.pop %v3020
        %v3245 = vrcp.pop %v3021
        %v3246 = vrcp.pop %v3022
        %v3247 = vrcp.pop %v3023
        %v3248 = vrcp.pop %v3024
        %v3249 = vrcp.pop %v3025
        %v3250 = vrcp.pop %v3026
        %v3251 = vrcp.pop %v3027
        %v3252 = vrcp.pop %v3028
        %v3253 = vrcp.pop %v3029
        %v3254 = vrcp.pop %v3030
        %v3255 = vrcp.pop %v3031
        %v3256 = vrcp.pop %v3032
        %v3257 = vrcp.pop %v3033
        %v3258 = vrcp.pop %v3034
        %v3259 = vrcp.pop %v3035
        %v3260 = vrcp.pop %v3036
        %v3261 = vrcp.pop %v3037
        %v3262 = vrcp.pop %v3038
        %v3263 = vrcp.pop %v3039
        %v3264 = vrcp.pop %v3040
        %v3265 = vrcp.pop %v3041
        %v3266 = vrcp.pop %v3042
        %v3267 = vrcp.pop %v3043
        %v3268 = vrcp.pop %v3044
        %v3269 = vrcp.pop %v3045
        %v3270 = vrcp.pop %v3046
        %v3271 = vrcp.pop %v3047
        %v3272 = vrcp.pop %v3048
        %v3273 = vrcp.pop %v3049
        %3274 = vst [vmem:[%s349] sm:$0xff] %v3050
        %3275 = vst [vmem:[%s349 + $0x8] sm:$0xff] %v3051
        %3276 = vst [vmem:[%s349 + $0x10] sm:$0xff] %v3052
        %3277 = vst [vmem:[%s349 + $0x18] sm:$0xff] %v3053
        %3278 = vst [vmem:[%s349 + $0x20] sm:$0xff] %v3054
        %3279 = vst [vmem:[%s349 + $0x28] sm:$0xff] %v3055
        %vm3280 = vcmask 130048
        %3281 = vst.msk [vmem:[%s349 + $0x30] sm:$0xff] %vm3280, %v3056
        %3282 = vst [vmem:[%s349 + $0x38] sm:$0xff] %v3057
        %3283 = vst [vmem:[%s349 + $0x40] sm:$0xff] %v3058
        %3284 = vst [vmem:[%s349 + $0x48] sm:$0xff] %v3059
        %3285 = vst [vmem:[%s349 + $0x50] sm:$0xff] %v3060
        %3286 = vst [vmem:[%s349 + $0x58] sm:$0xff] %v3061
        %3287 = vst [vmem:[%s349 + $0x60] sm:$0xff] %v3062
        %3288 = vst.msk [vmem:[%s349 + $0x68] sm:$0xff] %vm3280, %v3063
        %3289 = vst [vmem:[%s349 + $0x70] sm:$0xff] %v3064
        %3290 = vst [vmem:[%s349 + $0x78] sm:$0xff] %v3065
        %3291 = vst [vmem:[%s349 + $0x80] sm:$0xff] %v3066
        %3292 = vst [vmem:[%s349 + $0x88] sm:$0xff] %v3067
        %3293 = vst [vmem:[%s349 + $0x90] sm:$0xff] %v3068
        %3294 = vst [vmem:[%s349 + $0x98] sm:$0xff] %v3069
        %3295 = vst.msk [vmem:[%s349 + $0xa0] sm:$0xff] %vm3280, %v3070
        %3296 = vst [vmem:[%s349 + $0xa8] sm:$0xff] %v3071
        %3297 = vst [vmem:[%s349 + $0xb0] sm:$0xff] %v3072
        %3298 = vst [vmem:[%s349 + $0xb8] sm:$0xff] %v3073
        %3299 = vst [vmem:[%s349 + $0xc0] sm:$0xff] %v3074
        %3300 = vst [vmem:[%s349 + $0xc8] sm:$0xff] %v3075
        %3301 = vst [vmem:[%s349 + $0xd0] sm:$0xff] %v3076
        %3302 = vst.msk [vmem:[%s349 + $0xd8] sm:$0xff] %vm3280, %v3077
        %3303 = vst [vmem:[%s349 + $0xe0] sm:$0xff] %v3078
        %3304 = vst [vmem:[%s349 + $0xe8] sm:$0xff] %v3079
        %3305 = vst [vmem:[%s349 + $0xf0] sm:$0xff] %v3080
        %3306 = vst [vmem:[%s349 + $0xf8] sm:$0xff] %v3081
        %3307 = vst [vmem:[%s349 + $0x100] sm:$0xff] %v3082
        %3308 = vst [vmem:[%s349 + $0x108] sm:$0xff] %v3083
        %3309 = vst.msk [vmem:[%s349 + $0x110] sm:$0xff] %vm3280, %v3084
        %3310 = vst [vmem:[%s349 + $0x118] sm:$0xff] %v3085
        %3311 = vst [vmem:[%s349 + $0x120] sm:$0xff] %v3086
        %3312 = vst [vmem:[%s349 + $0x128] sm:$0xff] %v3087
        %3313 = vst [vmem:[%s349 + $0x130] sm:$0xff] %v3088
        %3314 = vst [vmem:[%s349 + $0x138] sm:$0xff] %v3089
        %3315 = vst [vmem:[%s349 + $0x140] sm:$0xff] %v3090
        %3316 = vst.msk [vmem:[%s349 + $0x148] sm:$0xff] %vm3280, %v3091
        %3317 = vst [vmem:[%s349 + $0x150] sm:$0xff] %v3092
        %3318 = vst [vmem:[%s349 + $0x158] sm:$0xff] %v3093
        %3319 = vst [vmem:[%s349 + $0x160] sm:$0xff] %v3094
        %3320 = vst [vmem:[%s349 + $0x168] sm:$0xff] %v3095
        %3321 = vst [vmem:[%s349 + $0x170] sm:$0xff] %v3096
        %3322 = vst [vmem:[%s349 + $0x178] sm:$0xff] %v3097
        %3323 = vst.msk [vmem:[%s349 + $0x180] sm:$0xff] %vm3280, %v3098
        %3324 = vst [vmem:[%s349 + $0x188] sm:$0xff] %v3099
        %3325 = vst [vmem:[%s349 + $0x190] sm:$0xff] %v3100
        %3326 = vst [vmem:[%s349 + $0x198] sm:$0xff] %v3101
        %3327 = vst [vmem:[%s349 + $0x1a0] sm:$0xff] %v3102
        %3328 = vst [vmem:[%s349 + $0x1a8] sm:$0xff] %v3103
        %3329 = vst [vmem:[%s349 + $0x1b0] sm:$0xff] %v3104
        %3330 = vst.msk [vmem:[%s349 + $0x1b8] sm:$0xff] %vm3280, %v3105
        %3331 = vst [vmem:[%s349 + $0x1c0] sm:$0xff] %v3106
        %3332 = vst [vmem:[%s349 + $0x1c8] sm:$0xff] %v3107
        %3333 = vst [vmem:[%s349 + $0x1d0] sm:$0xff] %v3108
        %3334 = vst [vmem:[%s349 + $0x1d8] sm:$0xff] %v3109
        %3335 = vst [vmem:[%s349 + $0x1e0] sm:$0xff] %v3110
        %3336 = vst [vmem:[%s349 + $0x1e8] sm:$0xff] %v3111
        %3337 = vst.msk [vmem:[%s349 + $0x1f0] sm:$0xff] %vm3280, %v3112
        %3338 = vst [vmem:[%s349 + $0x1f8] sm:$0xff] %v3113
        %3339 = vst [vmem:[%s349 + $0x200] sm:$0xff] %v3114
        %3340 = vst [vmem:[%s349 + $0x208] sm:$0xff] %v3115
        %3341 = vst [vmem:[%s349 + $0x210] sm:$0xff] %v3116
        %3342 = vst [vmem:[%s349 + $0x218] sm:$0xff] %v3117
        %3343 = vst [vmem:[%s349 + $0x220] sm:$0xff] %v3118
        %3344 = vst.msk [vmem:[%s349 + $0x228] sm:$0xff] %vm3280, %v3119
        %3345 = vst [vmem:[%s349 + $0x230] sm:$0xff] %v3120
        %3346 = vst [vmem:[%s349 + $0x238] sm:$0xff] %v3121
        %3347 = vst [vmem:[%s349 + $0x240] sm:$0xff] %v3122
        %3348 = vst [vmem:[%s349 + $0x248] sm:$0xff] %v3123
        %3349 = vst [vmem:[%s349 + $0x250] sm:$0xff] %v3124
        %3350 = vst [vmem:[%s349 + $0x258] sm:$0xff] %v3125
        %3351 = vst.msk [vmem:[%s349 + $0x260] sm:$0xff] %vm3280, %v3126
        %3352 = vst [vmem:[%s349 + $0x268] sm:$0xff] %v3127
        %3353 = vst [vmem:[%s349 + $0x270] sm:$0xff] %v3128
        %3354 = vst [vmem:[%s349 + $0x278] sm:$0xff] %v3129
        %3355 = vst [vmem:[%s349 + $0x280] sm:$0xff] %v3130
        %3356 = vst [vmem:[%s349 + $0x288] sm:$0xff] %v3131
        %3357 = vst [vmem:[%s349 + $0x290] sm:$0xff] %v3132
        %3358 = vst.msk [vmem:[%s349 + $0x298] sm:$0xff] %vm3280, %v3133
        %3359 = vst [vmem:[%s349 + $0x2a0] sm:$0xff] %v3134
        %3360 = vst [vmem:[%s349 + $0x2a8] sm:$0xff] %v3135
        %3361 = vst [vmem:[%s349 + $0x2b0] sm:$0xff] %v3136
        %3362 = vst [vmem:[%s349 + $0x2b8] sm:$0xff] %v3137
        %3363 = vst [vmem:[%s349 + $0x2c0] sm:$0xff] %v3138
        %3364 = vst [vmem:[%s349 + $0x2c8] sm:$0xff] %v3139
        %3365 = vst.msk [vmem:[%s349 + $0x2d0] sm:$0xff] %vm3280, %v3140
        %3366 = vst [vmem:[%s349 + $0x2d8] sm:$0xff] %v3141
        %3367 = vst [vmem:[%s349 + $0x2e0] sm:$0xff] %v3142
        %3368 = vst [vmem:[%s349 + $0x2e8] sm:$0xff] %v3143
        %3369 = vst [vmem:[%s349 + $0x2f0] sm:$0xff] %v3144
        %3370 = vst [vmem:[%s349 + $0x2f8] sm:$0xff] %v3145
        %3371 = vst [vmem:[%s349 + $0x300] sm:$0xff] %v3146
        %3372 = vst.msk [vmem:[%s349 + $0x308] sm:$0xff] %vm3280, %v3147
        %3373 = vst [vmem:[%s349 + $0x310] sm:$0xff] %v3148
        %3374 = vst [vmem:[%s349 + $0x318] sm:$0xff] %v3149
        %3375 = vst [vmem:[%s349 + $0x320] sm:$0xff] %v3150
        %3376 = vst [vmem:[%s349 + $0x328] sm:$0xff] %v3151
        %3377 = vst [vmem:[%s349 + $0x330] sm:$0xff] %v3152
        %3378 = vst [vmem:[%s349 + $0x338] sm:$0xff] %v3153
        %3379 = vst.msk [vmem:[%s349 + $0x340] sm:$0xff] %vm3280, %v3154
        %3380 = vst [vmem:[%s349 + $0x348] sm:$0xff] %v3155
        %3381 = vst [vmem:[%s349 + $0x350] sm:$0xff] %v3156
        %3382 = vst [vmem:[%s349 + $0x358] sm:$0xff] %v3157
        %3383 = vst [vmem:[%s349 + $0x360] sm:$0xff] %v3158
        %3384 = vst [vmem:[%s349 + $0x368] sm:$0xff] %v3159
        %3385 = vst [vmem:[%s349 + $0x370] sm:$0xff] %v3160
        %3386 = vst.msk [vmem:[%s349 + $0x378] sm:$0xff] %vm3280, %v3161
        %3387 = vst [vmem:[%s349 + $0x380] sm:$0xff] %v3162
        %3388 = vst [vmem:[%s349 + $0x388] sm:$0xff] %v3163
        %3389 = vst [vmem:[%s349 + $0x390] sm:$0xff] %v3164
        %3390 = vst [vmem:[%s349 + $0x398] sm:$0xff] %v3165
        %3391 = vst [vmem:[%s349 + $0x3a0] sm:$0xff] %v3166
        %3392 = vst [vmem:[%s349 + $0x3a8] sm:$0xff] %v3167
        %3393 = vst.msk [vmem:[%s349 + $0x3b0] sm:$0xff] %vm3280, %v3168
        %3394 = vst [vmem:[%s349 + $0x3b8] sm:$0xff] %v3169
        %3395 = vst [vmem:[%s349 + $0x3c0] sm:$0xff] %v3170
        %3396 = vst [vmem:[%s349 + $0x3c8] sm:$0xff] %v3171
        %3397 = vst [vmem:[%s349 + $0x3d0] sm:$0xff] %v3172
        %3398 = vst [vmem:[%s349 + $0x3d8] sm:$0xff] %v3173
        %3399 = vst [vmem:[%s349 + $0x3e0] sm:$0xff] %v3174
        %3400 = vst.msk [vmem:[%s349 + $0x3e8] sm:$0xff] %vm3280, %v3175
        %3401 = vst [vmem:[%s349 + $0x3f0] sm:$0xff] %v3176
        %3402 = vst [vmem:[%s349 + $0x3f8] sm:$0xff] %v3177
        %3403 = vst [vmem:[%s349 + $0x400] sm:$0xff] %v3178
        %3404 = vst [vmem:[%s349 + $0x408] sm:$0xff] %v3179
        %3405 = vst [vmem:[%s349 + $0x410] sm:$0xff] %v3180
        %3406 = vst [vmem:[%s349 + $0x418] sm:$0xff] %v3181
        %3407 = vst.msk [vmem:[%s349 + $0x420] sm:$0xff] %vm3280, %v3182
        %3408 = vst [vmem:[%s349 + $0x428] sm:$0xff] %v3183
        %3409 = vst [vmem:[%s349 + $0x430] sm:$0xff] %v3184
        %3410 = vst [vmem:[%s349 + $0x438] sm:$0xff] %v3185
        %3411 = vst [vmem:[%s349 + $0x440] sm:$0xff] %v3186
        %3412 = vst [vmem:[%s349 + $0x448] sm:$0xff] %v3187
        %3413 = vst [vmem:[%s349 + $0x450] sm:$0xff] %v3188
        %3414 = vst.msk [vmem:[%s349 + $0x458] sm:$0xff] %vm3280, %v3189
        %3415 = vst [vmem:[%s349 + $0x460] sm:$0xff] %v3190
        %3416 = vst [vmem:[%s349 + $0x468] sm:$0xff] %v3191
        %3417 = vst [vmem:[%s349 + $0x470] sm:$0xff] %v3192
        %3418 = vst [vmem:[%s349 + $0x478] sm:$0xff] %v3193
        %3419 = vst [vmem:[%s349 + $0x480] sm:$0xff] %v3194
        %3420 = vst [vmem:[%s349 + $0x488] sm:$0xff] %v3195
        %3421 = vst.msk [vmem:[%s349 + $0x490] sm:$0xff] %vm3280, %v3196
        %3422 = vst [vmem:[%s349 + $0x498] sm:$0xff] %v3197
        %3423 = vst [vmem:[%s349 + $0x4a0] sm:$0xff] %v3198
        %3424 = vst [vmem:[%s349 + $0x4a8] sm:$0xff] %v3199
        %3425 = vst [vmem:[%s349 + $0x4b0] sm:$0xff] %v3200
        %3426 = vst [vmem:[%s349 + $0x4b8] sm:$0xff] %v3201
        %3427 = vst [vmem:[%s349 + $0x4c0] sm:$0xff] %v3202
        %3428 = vst.msk [vmem:[%s349 + $0x4c8] sm:$0xff] %vm3280, %v3203
        %3429 = vst [vmem:[%s349 + $0x4d0] sm:$0xff] %v3204
        %3430 = vst [vmem:[%s349 + $0x4d8] sm:$0xff] %v3205
        %3431 = vst [vmem:[%s349 + $0x4e0] sm:$0xff] %v3206
        %3432 = vst [vmem:[%s349 + $0x4e8] sm:$0xff] %v3207
        %3433 = vst [vmem:[%s349 + $0x4f0] sm:$0xff] %v3208
        %3434 = vst [vmem:[%s349 + $0x4f8] sm:$0xff] %v3209
        %3435 = vst.msk [vmem:[%s349 + $0x500] sm:$0xff] %vm3280, %v3210
        %3436 = vst [vmem:[%s349 + $0x508] sm:$0xff] %v3211
        %3437 = vst [vmem:[%s349 + $0x510] sm:$0xff] %v3212
        %3438 = vst [vmem:[%s349 + $0x518] sm:$0xff] %v3213
        %3439 = vst [vmem:[%s349 + $0x520] sm:$0xff] %v3214
        %3440 = vst [vmem:[%s349 + $0x528] sm:$0xff] %v3215
        %3441 = vst [vmem:[%s349 + $0x530] sm:$0xff] %v3216
        %3442 = vst.msk [vmem:[%s349 + $0x538] sm:$0xff] %vm3280, %v3217
        %3443 = vst [vmem:[%s349 + $0x540] sm:$0xff] %v3218
        %3444 = vst [vmem:[%s349 + $0x548] sm:$0xff] %v3219
        %3445 = vst [vmem:[%s349 + $0x550] sm:$0xff] %v3220
        %3446 = vst [vmem:[%s349 + $0x558] sm:$0xff] %v3221
        %3447 = vst [vmem:[%s349 + $0x560] sm:$0xff] %v3222
        %3448 = vst [vmem:[%s349 + $0x568] sm:$0xff] %v3223
        %3449 = vst.msk [vmem:[%s349 + $0x570] sm:$0xff] %vm3280, %v3224
        %3450 = vst [vmem:[%s349 + $0x578] sm:$0xff] %v3225
        %3451 = vst [vmem:[%s349 + $0x580] sm:$0xff] %v3226
        %3452 = vst [vmem:[%s349 + $0x588] sm:$0xff] %v3227
        %3453 = vst [vmem:[%s349 + $0x590] sm:$0xff] %v3228
        %3454 = vst [vmem:[%s349 + $0x598] sm:$0xff] %v3229
        %3455 = vst [vmem:[%s349 + $0x5a0] sm:$0xff] %v3230
        %3456 = vst.msk [vmem:[%s349 + $0x5a8] sm:$0xff] %vm3280, %v3231
        %3457 = vst [vmem:[%s349 + $0x5b0] sm:$0xff] %v3232
        %3458 = vst [vmem:[%s349 + $0x5b8] sm:$0xff] %v3233
        %3459 = vst [vmem:[%s349 + $0x5c0] sm:$0xff] %v3234
        %3460 = vst [vmem:[%s349 + $0x5c8] sm:$0xff] %v3235
        %3461 = vst [vmem:[%s349 + $0x5d0] sm:$0xff] %v3236
        %3462 = vst [vmem:[%s349 + $0x5d8] sm:$0xff] %v3237
        %3463 = vst.msk [vmem:[%s349 + $0x5e0] sm:$0xff] %vm3280, %v3238
        %3464 = vst [vmem:[%s349 + $0x5e8] sm:$0xff] %v3239
        %3465 = vst [vmem:[%s349 + $0x5f0] sm:$0xff] %v3240
        %3466 = vst [vmem:[%s349 + $0x5f8] sm:$0xff] %v3241
        %3467 = vst [vmem:[%s349 + $0x600] sm:$0xff] %v3242
        %3468 = vst [vmem:[%s349 + $0x608] sm:$0xff] %v3243
        %3469 = vst [vmem:[%s349 + $0x610] sm:$0xff] %v3244
        %3470 = vst.msk [vmem:[%s349 + $0x618] sm:$0xff] %vm3280, %v3245
        %3471 = vst [vmem:[%s349 + $0x620] sm:$0xff] %v3246
        %3472 = vst [vmem:[%s349 + $0x628] sm:$0xff] %v3247
        %3473 = vst [vmem:[%s349 + $0x630] sm:$0xff] %v3248
        %3474 = vst [vmem:[%s349 + $0x638] sm:$0xff] %v3249
        %3475 = vst [vmem:[%s349 + $0x640] sm:$0xff] %v3250
        %3476 = vst [vmem:[%s349 + $0x648] sm:$0xff] %v3251
        %3477 = vst.msk [vmem:[%s349 + $0x650] sm:$0xff] %vm3280, %v3252
        %3478 = vst [vmem:[%s349 + $0x658] sm:$0xff] %v3253
        %3479 = vst [vmem:[%s349 + $0x660] sm:$0xff] %v3254
        %3480 = vst [vmem:[%s349 + $0x668] sm:$0xff] %v3255
        %3481 = vst [vmem:[%s349 + $0x670] sm:$0xff] %v3256
        %3482 = vst [vmem:[%s349 + $0x678] sm:$0xff] %v3257
        %3483 = vst [vmem:[%s349 + $0x680] sm:$0xff] %v3258
        %3484 = vst.msk [vmem:[%s349 + $0x688] sm:$0xff] %vm3280, %v3259
        %3485 = vst [vmem:[%s349 + $0x690] sm:$0xff] %v3260
        %3486 = vst [vmem:[%s349 + $0x698] sm:$0xff] %v3261
        %3487 = vst [vmem:[%s349 + $0x6a0] sm:$0xff] %v3262
        %3488 = vst [vmem:[%s349 + $0x6a8] sm:$0xff] %v3263
        %3489 = vst [vmem:[%s349 + $0x6b0] sm:$0xff] %v3264
        %3490 = vst [vmem:[%s349 + $0x6b8] sm:$0xff] %v3265
        %3491 = vst.msk [vmem:[%s349 + $0x6c0] sm:$0xff] %vm3280, %v3266
        %3492 = vst [vmem:[%s349 + $0x6c8] sm:$0xff] %v3267
        %3493 = vst [vmem:[%s349 + $0x6d0] sm:$0xff] %v3268
        %3494 = vst [vmem:[%s349 + $0x6d8] sm:$0xff] %v3269
        %3495 = vst [vmem:[%s349 + $0x6e0] sm:$0xff] %v3270
        %3496 = vst [vmem:[%s349 + $0x6e8] sm:$0xff] %v3271
        %3497 = vst [vmem:[%s349 + $0x6f0] sm:$0xff] %v3272
        %3498 = vst.msk [vmem:[%s349 + $0x6f8] sm:$0xff] %vm3280, %v3273
        %s3499 = smul.u32 32, %s21
        %p3500 = scmp.lt.s32.totalorder %s3499, 63
        %s3501 = scalar_select %p3500, %s3499, 63
        %s3502 = smul.addr %s3501, 7
        %s3503 = smul.addr %s3502, 8
        %s3504 = scalar_lea.vmem %s7, %s3503
        // Predicated region
        $region69: #{tpu_custom_call.1} parent=47 // pred_check
          %p3505 = pneg %p191
        $region70: #{tpu_custom_call.1} parent=47 // pred_check_branch
          %3507 = sbr.rel (%p3505) target = $region72
        $region71: #{tpu_custom_call.1} parent=47 // pred_region
          %s3508 = smul.u32 32, %s21
        $region72: #{tpu_custom_call.1} parent=47 // pred_fallthru
          _
      $region48: #{tpu_custom_call.1} parent=5 // pred_fallthru
        _
      %p3509 = scmp.le.s32.totalorder 2, %s16
      // Predicated region
      $region73: #{tpu_custom_call.1} parent=5 // pred_check
        %p3510 = pneg %p3509
      $region74: #{tpu_custom_call.1} parent=5 // pred_check_branch
        %3512 = sbr.rel (%p3510) target = $region76
      $region75: #{tpu_custom_call.1} parent=5 // pred_region
        %s3513 = ssub.s32 %s16, 2
        // Predicated region
        $region77: #{tpu_custom_call.1} parent=75 // pred_check
          %p3514 = pneg %p197
        $region78: #{tpu_custom_call.1} parent=75 // pred_check_branch
          %3516 = sbr.rel (%p3514) target = $region80
        $region79: #{tpu_custom_call.1} parent=75 // pred_region
          %s3517 = smul.u32 32, %s22
          %p3518 = scmp.lt.s32.totalorder %s3517, 63
          %s3519 = scalar_select %p3518, %s3517, 63
          %s3520 = smul.addr %s3519, 7
          %s3521 = smul.addr %s3520, 8
          %s3522 = scalar_lea.vmem %s7, %s3521
        $region80: #{tpu_custom_call.1} parent=75 // pred_fallthru
          _
      $region76: #{tpu_custom_call.1} parent=5 // pred_fallthru
        _
    $region6: #{tpu_custom_call.1} parent=1 // loop_footer
      %s20 = sadd.s32 1, %s16
    $region7: #{tpu_custom_call.1} parent=1 // loop_footer_branch
      %15 = sbr.rel target = $region3
    $region8: #{tpu_custom_call.1} parent=1 // loop_exit
      _
    %3523 = vsyncpa [#allocation3], 1
    %s3524 = scalar_lea.sflag [#allocation3], 1
    %3525 = vsyncpa %s3524, 1
    %3526 = vsyncpa [#allocation5], 1
    %3527 = vsyncpa [#allocation8], 1

</llo_original>
